<compile_context>
chip_gen: v6e
topology: v6e:2x2x1
jax: 0.10.0
libtpu: 0.0.40
codegen_flags: <defaults>
</compile_context>

<pallas_src>
import functools
import numpy as np
import jax
import jax.numpy as jnp
from jax.experimental import pallas as pl
from jax.experimental.pallas import tpu as pltpu


# Live taps of the 7x7 mask-'A' kernel (rows above center + left of center on
# the center row); the other 25 taps are identically zero.
_LIVE_TAPS_A7 = tuple((kh, kw) for kh in range(7) for kw in range(7)
                      if kh < 3 or (kh == 3 and kw < 3))      # 24 taps


def _round_up(n, m):
    return ((n + m - 1) // m) * m


def _pad_lanes(x, nwp):
    pad = nwp - x.shape[-1]
    if pad == 0:
        return x
    cfg = [(0, 0)] * (x.ndim - 1) + [(0, pad)]
    return jnp.pad(x, cfg)


def _make_lane_mask(nbatch, width, nwp):
    """(2, nwp) lane masks: row 0 keeps the (w-1) tap, row 1 keeps (w+1)."""
    lane = jnp.arange(nwp, dtype=jnp.int32)
    valid = lane < nbatch * width
    w = lane % width
    keep_m1 = (valid & (w != 0)).astype(jnp.float32)
    keep_p1 = (valid & (w != width - 1)).astype(jnp.float32)
    return jnp.stack([keep_m1, keep_p1], axis=0)


# ----------------------------------------------------------------------------
# Pallas kernels
# ----------------------------------------------------------------------------

def _conv1_kernel(p_ref, w_ref, b_ref, o_ref, *, nrows, nwp):
    # One lane-dense (hid, 24) @ (24, H*NWp) MXU dot for ALL image rows, then
    # static tile-aligned per-row stores into the (H, hid, NWp) layout the
    # RowLSTM layers consume (lane offsets are multiples of 128).
    res = (jnp.dot(w_ref[...], p_ref[...],
                   preferred_element_type=jnp.float32) + b_ref[...])
    for r in range(nrows):
        o_ref[r] = res[:, r * nwp:(r + 1) * nwp]


def _rowlstm_layer_kernel(x_ref, w_ref, b_ref, m_ref, o_ref, xh_ref, c_ref,
                          *, hdim, nrows):
    # Whole RowLSTM layer in ONE kernel invocation.  Per row, the masked
    # input-to-state conv and the state-to-state conv are a single fused
    # (4h, 5h) @ (5h, NWp) MXU dot against a persistent (5h, NWp) tap matrix
    # in VMEM scratch: [x_{w-1}, x_w, h_{w-1}, h_w, h_{w+1}].  c/h state stays
    # in VMEM; no intermediate hits HBM; no per-row grid overhead.
    w = w_ref[...]                          # (4h, 5h) fused [Wis(2) | Wss(3)]
    b = b_ref[...]                          # (4h, 1)  fused bias b_is + b_ss
    m = m_ref[...]                          # (2, NWp) lane masks
    m1 = m[0:1, :]                          # keep (w-1) tap (0 at w==0 / pad)
    p1 = m[1:2, :]                          # keep (w+1) tap (0 at w==W-1 / pad)

    c_ref[...] = jnp.zeros_like(c_ref)
    xh_ref[...] = jnp.zeros_like(xh_ref)    # rows [2h:5h) = h taps, h0 = 0

    nwp = c_ref.shape[1]
    for r in range(nrows):                  # serial row recurrence, unrolled
        x_r = x_ref[r]                                            # (h, NWp)
        xh_ref[0 * hdim:1 * hdim, :] = pltpu.roll(x_r, 1, axis=1) * m1
        xh_ref[1 * hdim:2 * hdim, :] = x_r
        pre = jnp.dot(w, xh_ref[...],
                      preferred_element_type=jnp.float32) + b     # (4h, NWp)
        # NOTE: matches the torch source -- ALL four gates (incl. the
        # candidate g) go through sigmoid; there is no tanh on g.  Don't "fix".
        gates = jax.nn.sigmoid(pre)
        i_g = gates[0 * hdim:1 * hdim]
        g_g = gates[1 * hdim:2 * hdim]
        f_g = gates[2 * hdim:3 * hdim]
        o_g = gates[3 * hdim:4 * hdim]
        c_new = f_g * c_ref[...] + i_g * g_g
        h_new = o_g * jnp.tanh(c_new)
        c_ref[...] = c_new
        o_ref[r] = h_new
        # state-to-state taps for the next row (persistent scratch, no concat)
        xh_ref[2 * hdim:3 * hdim, :] = pltpu.roll(h_new, 1, axis=1) * m1
        xh_ref[3 * hdim:4 * hdim, :] = h_new
        xh_ref[4 * hdim:5 * hdim, :] = pltpu.roll(h_new, nwp - 1, axis=1) * p1


def _head_kernel(a_ref, w_ref, b_ref, o_ref):
    o_ref[...] = jax.nn.sigmoid(
        jnp.dot(w_ref[...], a_ref[...],
                preferred_element_type=jnp.float32) + b_ref[...])


# ----------------------------------------------------------------------------
# Layer wrappers (glue: im2col / layout plumbing / pallas_call setup)
# ----------------------------------------------------------------------------

def conv1_apply(x, w1, b1, nwp):
    """Masked 7x7 conv (mask 'A'), in_ch=1, pad=3.  Output (H, hid, NWp)."""
    N, _, H, W = x.shape
    hid = w1.shape[0]
    nk = len(_LIVE_TAPS_A7)
    # 24-tap im2col of the tiny single-channel input stays in XLA; the matmul
    # itself is a single lane-dense kernel over all H rows at once.
    xp = jnp.pad(x[:, 0].astype(jnp.float32), ((0, 0), (3, 3), (3, 3)))
    taps = jnp.stack([xp[:, kh:kh + H, kw:kw + W] for kh, kw in _LIVE_TAPS_A7],
                     axis=0)                                      # (24, N, H, W)
    p = taps.transpose(0, 2, 1, 3).reshape(nk, H, N * W)          # (24, H, N*W)
    p = _pad_lanes(p, nwp).reshape(nk, H * nwp)                   # (24, H*NWp)
    wk = jnp.stack([w1[:, 0, kh, kw] for kh, kw in _LIVE_TAPS_A7],
                   axis=1).astype(jnp.float32)                    # (hid, 24)
    b2 = b1.reshape(hid, 1).astype(jnp.float32)
    return pl.pallas_call(
        functools.partial(_conv1_kernel, nrows=H, nwp=nwp),
        out_shape=jax.ShapeDtypeStruct((H, hid, nwp), jnp.float32),
        grid=(1,),
        in_specs=[pl.BlockSpec((nk, H * nwp), lambda i: (0, 0)),
                  pl.BlockSpec((hid, nk), lambda i: (0, 0)),
                  pl.BlockSpec((hid, 1), lambda i: (0, 0))],
        out_specs=pl.BlockSpec((H, hid, nwp), lambda i: (0, 0, 0)),
        compiler_params=pltpu.CompilerParams(
            dimension_semantics=("arbitrary",)),
    )(p, wk, b2)


def rowlstm_layer(x_seq, w_is, b_is, w_ss, b_ss, lane_mask):
    """One RowLSTM layer on a (H, hdim, NWp) sequence.  Returns per-row h."""
    H, hdim, nwp = x_seq.shape
    # mask 'B' zeroes tap 2 of the input-to-state conv: keep taps 0 (w-1) and
    # 1 (w).  Fuse [Wis | Wss] so the recurrence does ONE dot per row.
    w_fused = jnp.concatenate(
        [w_is[:, :, 0], w_is[:, :, 1],
         w_ss[:, :, 0], w_ss[:, :, 1], w_ss[:, :, 2]],
        axis=1).astype(jnp.float32)                               # (4h, 5h)
    b_fused = (b_is + b_ss).reshape(4 * hdim, 1).astype(jnp.float32)
    return pl.pallas_call(
        functools.partial(_rowlstm_layer_kernel, hdim=hdim, nrows=H),
        out_shape=jax.ShapeDtypeStruct((H, hdim, nwp), jnp.float32),
        grid=(1,),
        in_specs=[pl.BlockSpec((H, hdim, nwp), lambda i: (0, 0, 0)),
                  pl.BlockSpec((4 * hdim, 5 * hdim), lambda i: (0, 0)),
                  pl.BlockSpec((4 * hdim, 1), lambda i: (0, 0)),
                  pl.BlockSpec((2, nwp), lambda i: (0, 0))],
        out_specs=pl.BlockSpec((H, hdim, nwp), lambda i: (0, 0, 0)),
        scratch_shapes=[pltpu.VMEM((5 * hdim, nwp), jnp.float32),   # tap matrix
                        pltpu.VMEM((hdim, nwp), jnp.float32)],      # cell state
        compiler_params=pltpu.CompilerParams(
            dimension_semantics=("arbitrary",)),
    )(x_seq, w_fused, b_fused, lane_mask)


def _reinterpret_steps(steps, nbatch, width, nwp):
    """torch: cat(rows).view(-1, H, W, hidden).permute(0,3,1,2) -- a flat
    reinterpretation (NOT a transpose) of the (hidden, W) block as (W, hidden),
    expressed directly on the kernel's (H, C, N*W) sequence layout."""
    H, hdim, _ = steps.shape
    s = steps[:, :, :nbatch * width].reshape(H, hdim, nbatch, width)
    s = s.transpose(0, 2, 1, 3).reshape(H, nbatch, width, hdim)    # flat reinterp
    s = s.transpose(0, 3, 1, 2).reshape(H, hdim, nbatch * width)
    return _pad_lanes(s, nwp)


def head_apply(y_seq, wl, bl, nbatch, width):
    """Per-position Linear(hidden -> 10) + sigmoid on a (H, C, NWp) sequence."""
    H, hdim, _ = y_seq.shape
    hd = wl.shape[0]
    a = (y_seq[:, :, :nbatch * width].reshape(H, hdim, nbatch, width)
         .transpose(1, 2, 0, 3).reshape(hdim, nbatch * H * width))
    L = a.shape[1]
    TL = min(_round_up(L, 128), 2048)     # one wide block for the test shapes
    Lp = _round_up(L, TL)
    a = _pad_lanes(a, Lp)
    out = pl.pallas_call(
        _head_kernel,
        out_shape=jax.ShapeDtypeStruct((hd, Lp), jnp.float32),
        grid=(Lp // TL,),
        in_specs=[pl.BlockSpec((hdim, TL), lambda j: (0, j)),
                  pl.BlockSpec((hd, hdim), lambda j: (0, 0)),
                  pl.BlockSpec((hd, 1), lambda j: (0, 0))],
        out_specs=pl.BlockSpec((hd, TL), lambda j: (0, j)),
        compiler_params=pltpu.CompilerParams(
            dimension_semantics=("parallel",)),
    )(a, wl.astype(jnp.float32), bl.reshape(hd, 1).astype(jnp.float32))
    return out[:, :L].reshape(hd, nbatch, H, width).transpose(1, 0, 2, 3)


def pixelrnn_forward(x, params):
    N, _, H, W = x.shape
    w1, b1 = params['conv1']
    nwp = _round_up(N * W, 128)        # lane-dense fused batch*width axis
    lane_mask = _make_lane_mask(N, W, nwp)
    y = conv1_apply(x, w1, b1, nwp)                                # (H, h, NWp)
    for (wis, bis, wss, bss) in params['lstm']:
        steps = rowlstm_layer(y, wis, bis, wss, bss, lane_mask)
        y = _reinterpret_steps(steps, N, W, nwp)
    wl, bl = params['linear']
    return head_apply(y, wl, bl, N, W)


# ----------------------------------------------------------------------------
# Deterministic parameter init (masks folded into weights, like torch's
# `weight.data *= mask` inside forward)
# ----------------------------------------------------------------------------

def init_params(key, num_layers, hidden, input_size):
    del input_size
    ks = jax.random.split(key, num_layers + 4)
    scale = 0.1

    w1 = scale * jax.random.normal(ks[0], (hidden, 1, 7, 7), jnp.float32)
    mask_a = jnp.ones((1, 1, 7, 7), jnp.float32)
    mask_a = mask_a.at[:, :, 3, 3:].set(0.0)   # mask 'A': center col onwards
    mask_a = mask_a.at[:, :, 4:, :].set(0.0)   # rows below center
    w1 = w1 * mask_a
    b1 = scale * jax.random.normal(ks[1], (hidden,), jnp.float32)

    mask_b = jnp.ones((1, 1, 3), jnp.float32).at[:, :, 2:].set(0.0)  # 1d mask 'B'
    lstm = []
    for l in range(num_layers):
        k0, k1, k2, k3 = jax.random.split(ks[2 + l], 4)
        wis = scale * jax.random.normal(k0, (4 * hidden, hidden, 3), jnp.float32)
        wis = wis * mask_b
        bis = scale * jax.random.normal(k1, (4 * hidden,), jnp.float32)
        wss = scale * jax.random.normal(k2, (4 * hidden, hidden, 3), jnp.float32)
        bss = scale * jax.random.normal(k3, (4 * hidden,), jnp.float32)
        lstm.append((wis, bis, wss, bss))

    wl = scale * jax.random.normal(ks[num_layers + 2], (10, hidden), jnp.float32)
    bl = scale * jax.random.normal(ks[num_layers + 3], (10,), jnp.float32)
    return dict(conv1=(w1, b1), lstm=lstm, linear=(wl, bl))


# ----------------------------------------------------------------------------
# Pure-JAX reference (mirrors the PyTorch forward) for a correctness check
# ----------------------------------------------------------------------------

def _ref_rowlstm(x, wis, bis, wss, bss):
    N, hdim, H, W = x.shape
    c = jnp.zeros((N, hdim, W), jnp.float32)
    h = jnp.zeros((N, hdim, W), jnp.float32)

    def conv1d(v, w, b):
        y = jax.lax.conv_general_dilated(
            v[:, :, None, :], w[:, :, None, :], (1, 1), [(0, 0), (1, 1)],
            dimension_numbers=('NCHW', 'OIHW', 'NCHW'),
            precision=jax.lax.Precision.HIGHEST)
        return y[:, :, 0, :] + b[None, :, None]

    outs = []
    for s in range(H):
        i_s = conv1d(x[:, :, s, :], wis, bis)
        s_s = conv1d(h, wss, bss)
        gates = jax.nn.sigmoid(i_s + s_s)
        i_, g_, f_, o_ = jnp.split(gates, 4, axis=1)
        c = f_ * c + i_ * g_
        h = o_ * jnp.tanh(c)
        outs.append(h)
    steps = jnp.stack(outs, axis=1)                      # (N, H, hdim, W)
    return steps.reshape(N, H, W, hdim).transpose(0, 3, 1, 2)


def reference_forward(x, params):
    w1, b1 = params['conv1']
    y = jax.lax.conv_general_dilated(
        x, w1, (1, 1), [(3, 3), (3, 3)],
        dimension_numbers=('NCHW', 'OIHW', 'NCHW'),
        precision=jax.lax.Precision.HIGHEST) + b1[None, :, None, None]
    for (wis, bis, wss, bss) in params['lstm']:
        y = _ref_rowlstm(y, wis, bis, wss, bss)
    wl, bl = params['linear']
    z = jnp.einsum('nchw,oc->nohw', y, wl,
                   precision=jax.lax.Precision.HIGHEST) + bl[None, :, None, None]
    return jax.nn.sigmoid(z)


# ----------------------------------------------------------------------------

if __name__ == "__main__":
    num_layers, hidden_dims, input_size, batch = 2, 8, 16, 2

    key = jax.random.PRNGKey(0)
    kp, kx = jax.random.split(key)
    params = init_params(kp, num_layers, hidden_dims, input_size)
    x = jax.random.normal(kx, (batch, 1, input_size, input_size), jnp.float32)

    fwd = jax.jit(pixelrnn_forward)
    out = jax.block_until_ready(fwd(x, params))
    assert out.shape == (batch, 10, input_size, input_size), out.shape

    ref = jax.block_until_ready(jax.jit(reference_forward)(x, params))
    np.testing.assert_allclose(np.asarray(out), np.asarray(ref),
                               atol=1e-3, rtol=1e-3)
    print("KERNEL_OK")
</pallas_src>

<mosaic_0001>
module attributes {stable_mosaic.version = 11 : i64} {
  func.func @_conv1_kernel(%arg0: i32, %arg1: memref<24x2048xf32, #tpu.memory_space<vmem>>, %arg2: memref<8x24xf32, #tpu.memory_space<vmem>>, %arg3: memref<8x1xf32, #tpu.memory_space<vmem>>, %arg4: memref<16x8x128xf32, #tpu.memory_space<vmem>>) attributes {dimension_semantics = [#tpu.dimension_semantics<arbitrary>], iteration_bounds = array<i64: 1>, scalar_prefetch = 0 : i64, scratch_operands = 0 : i64, tpu.core_type = #tpu.core_type<tc>, window_params = [{pipeline_mode = #tpu.pipeline_mode<synchronous>, transform_indices = @transform_0, window_bounds = array<i64: 24, 2048>}, {pipeline_mode = #tpu.pipeline_mode<synchronous>, transform_indices = @transform_1, window_bounds = array<i64: 8, 24>}, {pipeline_mode = #tpu.pipeline_mode<synchronous>, transform_indices = @transform_2, window_bounds = array<i64: 8, 1>}, {pipeline_mode = #tpu.pipeline_mode<synchronous>, transform_indices = @transform_3, window_bounds = array<i64: 16, 8, 128>}]} {
    %c0 = arith.constant 0 : index
    %c0_0 = arith.constant 0 : index
    %0 = vector.load %arg2[%c0, %c0_0] : memref<8x24xf32, #tpu.memory_space<vmem>>, vector<8x24xf32>
    %c0_1 = arith.constant 0 : index
    %c0_2 = arith.constant 0 : index
    %1 = vector.load %arg1[%c0_1, %c0_2] : memref<24x2048xf32, #tpu.memory_space<vmem>>, vector<24x2048xf32>
    %cst = arith.constant dense<0.000000e+00> : vector<8x2048xf32>
    %2 = tpu.matmul %0, %1, %cst {dimension_numbers = #tpu.dot_dimension_numbers<[1], [0], [0], [1], [0, 0, 1, 1], [], []>} : vector<8x24xf32>, vector<24x2048xf32>, vector<8x2048xf32> -> vector<8x2048xf32>
    %c0_3 = arith.constant 0 : index
    %c0_4 = arith.constant 0 : index
    %3 = vector.load %arg3[%c0_3, %c0_4] : memref<8x1xf32, #tpu.memory_space<vmem>>, vector<8x1xf32>
    %4 = vector.broadcast %3 : vector<8x1xf32> to vector<8x2048xf32>
    %5 = arith.addf %2, %4 : vector<8x2048xf32>
    %6 = vector.extract_strided_slice %5 {offsets = [0, 0], sizes = [8, 128], strides = [1, 1]} : vector<8x2048xf32> to vector<8x128xf32>
    %c0_5 = arith.constant 0 : index
    %c0_6 = arith.constant 0 : index
    %c0_7 = arith.constant 0 : index
    %7 = vector.load %arg4[%c0_5, %c0_6, %c0_7] : memref<16x8x128xf32, #tpu.memory_space<vmem>>, vector<1x8x128xf32>
    %8 = vector.shape_cast %7 : vector<1x8x128xf32> to vector<8x128xf32>
    %9 = vector.shape_cast %6 : vector<8x128xf32> to vector<1x8x128xf32>
    tpu.vector_store %arg4[%c0_5, %c0_6, %c0_7], %9 {strides = array<i32>} : memref<16x8x128xf32, #tpu.memory_space<vmem>>, vector<1x8x128xf32>,
    %10 = vector.extract_strided_slice %5 {offsets = [0, 128], sizes = [8, 128], strides = [1, 1]} : vector<8x2048xf32> to vector<8x128xf32>
    %c1 = arith.constant 1 : index
    %c0_8 = arith.constant 0 : index
    %c0_9 = arith.constant 0 : index
    %11 = vector.load %arg4[%c1, %c0_8, %c0_9] : memref<16x8x128xf32, #tpu.memory_space<vmem>>, vector<1x8x128xf32>
    %12 = vector.shape_cast %11 : vector<1x8x128xf32> to vector<8x128xf32>
    %13 = vector.shape_cast %10 : vector<8x128xf32> to vector<1x8x128xf32>
    tpu.vector_store %arg4[%c1, %c0_8, %c0_9], %13 {strides = array<i32>} : memref<16x8x128xf32, #tpu.memory_space<vmem>>, vector<1x8x128xf32>,
    %14 = vector.extract_strided_slice %5 {offsets = [0, 256], sizes = [8, 128], strides = [1, 1]} : vector<8x2048xf32> to vector<8x128xf32>
    %c2 = arith.constant 2 : index
    %c0_10 = arith.constant 0 : index
    %c0_11 = arith.constant 0 : index
    %15 = vector.load %arg4[%c2, %c0_10, %c0_11] : memref<16x8x128xf32, #tpu.memory_space<vmem>>, vector<1x8x128xf32>
    %16 = vector.shape_cast %15 : vector<1x8x128xf32> to vector<8x128xf32>
    %17 = vector.shape_cast %14 : vector<8x128xf32> to vector<1x8x128xf32>
    tpu.vector_store %arg4[%c2, %c0_10, %c0_11], %17 {strides = array<i32>} : memref<16x8x128xf32, #tpu.memory_space<vmem>>, vector<1x8x128xf32>,
    %18 = vector.extract_strided_slice %5 {offsets = [0, 384], sizes = [8, 128], strides = [1, 1]} : vector<8x2048xf32> to vector<8x128xf32>
    %c3 = arith.constant 3 : index
    %c0_12 = arith.constant 0 : index
    %c0_13 = arith.constant 0 : index
    %19 = vector.load %arg4[%c3, %c0_12, %c0_13] : memref<16x8x128xf32, #tpu.memory_space<vmem>>, vector<1x8x128xf32>
    %20 = vector.shape_cast %19 : vector<1x8x128xf32> to vector<8x128xf32>
    %21 = vector.shape_cast %18 : vector<8x128xf32> to vector<1x8x128xf32>
    tpu.vector_store %arg4[%c3, %c0_12, %c0_13], %21 {strides = array<i32>} : memref<16x8x128xf32, #tpu.memory_space<vmem>>, vector<1x8x128xf32>,
    %22 = vector.extract_strided_slice %5 {offsets = [0, 512], sizes = [8, 128], strides = [1, 1]} : vector<8x2048xf32> to vector<8x128xf32>
    %c4 = arith.constant 4 : index
    %c0_14 = arith.constant 0 : index
    %c0_15 = arith.constant 0 : index
    %23 = vector.load %arg4[%c4, %c0_14, %c0_15] : memref<16x8x128xf32, #tpu.memory_space<vmem>>, vector<1x8x128xf32>
    %24 = vector.shape_cast %23 : vector<1x8x128xf32> to vector<8x128xf32>
    %25 = vector.shape_cast %22 : vector<8x128xf32> to vector<1x8x128xf32>
    tpu.vector_store %arg4[%c4, %c0_14, %c0_15], %25 {strides = array<i32>} : memref<16x8x128xf32, #tpu.memory_space<vmem>>, vector<1x8x128xf32>,
    %26 = vector.extract_strided_slice %5 {offsets = [0, 640], sizes = [8, 128], strides = [1, 1]} : vector<8x2048xf32> to vector<8x128xf32>
    %c5 = arith.constant 5 : index
    %c0_16 = arith.constant 0 : index
    %c0_17 = arith.constant 0 : index
    %27 = vector.load %arg4[%c5, %c0_16, %c0_17] : memref<16x8x128xf32, #tpu.memory_space<vmem>>, vector<1x8x128xf32>
    %28 = vector.shape_cast %27 : vector<1x8x128xf32> to vector<8x128xf32>
    %29 = vector.shape_cast %26 : vector<8x128xf32> to vector<1x8x128xf32>
    tpu.vector_store %arg4[%c5, %c0_16, %c0_17], %29 {strides = array<i32>} : memref<16x8x128xf32, #tpu.memory_space<vmem>>, vector<1x8x128xf32>,
    %30 = vector.extract_strided_slice %5 {offsets = [0, 768], sizes = [8, 128], strides = [1, 1]} : vector<8x2048xf32> to vector<8x128xf32>
    %c6 = arith.constant 6 : index
    %c0_18 = arith.constant 0 : index
    %c0_19 = arith.constant 0 : index
    %31 = vector.load %arg4[%c6, %c0_18, %c0_19] : memref<16x8x128xf32, #tpu.memory_space<vmem>>, vector<1x8x128xf32>
    %32 = vector.shape_cast %31 : vector<1x8x128xf32> to vector<8x128xf32>
    %33 = vector.shape_cast %30 : vector<8x128xf32> to vector<1x8x128xf32>
    tpu.vector_store %arg4[%c6, %c0_18, %c0_19], %33 {strides = array<i32>} : memref<16x8x128xf32, #tpu.memory_space<vmem>>, vector<1x8x128xf32>,
    %34 = vector.extract_strided_slice %5 {offsets = [0, 896], sizes = [8, 128], strides = [1, 1]} : vector<8x2048xf32> to vector<8x128xf32>
    %c7 = arith.constant 7 : index
    %c0_20 = arith.constant 0 : index
    %c0_21 = arith.constant 0 : index
    %35 = vector.load %arg4[%c7, %c0_20, %c0_21] : memref<16x8x128xf32, #tpu.memory_space<vmem>>, vector<1x8x128xf32>
    %36 = vector.shape_cast %35 : vector<1x8x128xf32> to vector<8x128xf32>
    %37 = vector.shape_cast %34 : vector<8x128xf32> to vector<1x8x128xf32>
    tpu.vector_store %arg4[%c7, %c0_20, %c0_21], %37 {strides = array<i32>} : memref<16x8x128xf32, #tpu.memory_space<vmem>>, vector<1x8x128xf32>,
    %38 = vector.extract_strided_slice %5 {offsets = [0, 1024], sizes = [8, 128], strides = [1, 1]} : vector<8x2048xf32> to vector<8x128xf32>
    %c8 = arith.constant 8 : index
    %c0_22 = arith.constant 0 : index
    %c0_23 = arith.constant 0 : index
    %39 = vector.load %arg4[%c8, %c0_22, %c0_23] : memref<16x8x128xf32, #tpu.memory_space<vmem>>, vector<1x8x128xf32>
    %40 = vector.shape_cast %39 : vector<1x8x128xf32> to vector<8x128xf32>
    %41 = vector.shape_cast %38 : vector<8x128xf32> to vector<1x8x128xf32>
    tpu.vector_store %arg4[%c8, %c0_22, %c0_23], %41 {strides = array<i32>} : memref<16x8x128xf32, #tpu.memory_space<vmem>>, vector<1x8x128xf32>,
    %42 = vector.extract_strided_slice %5 {offsets = [0, 1152], sizes = [8, 128], strides = [1, 1]} : vector<8x2048xf32> to vector<8x128xf32>
    %c9 = arith.constant 9 : index
    %c0_24 = arith.constant 0 : index
    %c0_25 = arith.constant 0 : index
    %43 = vector.load %arg4[%c9, %c0_24, %c0_25] : memref<16x8x128xf32, #tpu.memory_space<vmem>>, vector<1x8x128xf32>
    %44 = vector.shape_cast %43 : vector<1x8x128xf32> to vector<8x128xf32>
    %45 = vector.shape_cast %42 : vector<8x128xf32> to vector<1x8x128xf32>
    tpu.vector_store %arg4[%c9, %c0_24, %c0_25], %45 {strides = array<i32>} : memref<16x8x128xf32, #tpu.memory_space<vmem>>, vector<1x8x128xf32>,
    %46 = vector.extract_strided_slice %5 {offsets = [0, 1280], sizes = [8, 128], strides = [1, 1]} : vector<8x2048xf32> to vector<8x128xf32>
    %c10 = arith.constant 10 : index
    %c0_26 = arith.constant 0 : index
    %c0_27 = arith.constant 0 : index
    %47 = vector.load %arg4[%c10, %c0_26, %c0_27] : memref<16x8x128xf32, #tpu.memory_space<vmem>>, vector<1x8x128xf32>
    %48 = vector.shape_cast %47 : vector<1x8x128xf32> to vector<8x128xf32>
    %49 = vector.shape_cast %46 : vector<8x128xf32> to vector<1x8x128xf32>
    tpu.vector_store %arg4[%c10, %c0_26, %c0_27], %49 {strides = array<i32>} : memref<16x8x128xf32, #tpu.memory_space<vmem>>, vector<1x8x128xf32>,
    %50 = vector.extract_strided_slice %5 {offsets = [0, 1408], sizes = [8, 128], strides = [1, 1]} : vector<8x2048xf32> to vector<8x128xf32>
    %c11 = arith.constant 11 : index
    %c0_28 = arith.constant 0 : index
    %c0_29 = arith.constant 0 : index
    %51 = vector.load %arg4[%c11, %c0_28, %c0_29] : memref<16x8x128xf32, #tpu.memory_space<vmem>>, vector<1x8x128xf32>
    %52 = vector.shape_cast %51 : vector<1x8x128xf32> to vector<8x128xf32>
    %53 = vector.shape_cast %50 : vector<8x128xf32> to vector<1x8x128xf32>
    tpu.vector_store %arg4[%c11, %c0_28, %c0_29], %53 {strides = array<i32>} : memref<16x8x128xf32, #tpu.memory_space<vmem>>, vector<1x8x128xf32>,
    %54 = vector.extract_strided_slice %5 {offsets = [0, 1536], sizes = [8, 128], strides = [1, 1]} : vector<8x2048xf32> to vector<8x128xf32>
    %c12 = arith.constant 12 : index
    %c0_30 = arith.constant 0 : index
    %c0_31 = arith.constant 0 : index
    %55 = vector.load %arg4[%c12, %c0_30, %c0_31] : memref<16x8x128xf32, #tpu.memory_space<vmem>>, vector<1x8x128xf32>
    %56 = vector.shape_cast %55 : vector<1x8x128xf32> to vector<8x128xf32>
    %57 = vector.shape_cast %54 : vector<8x128xf32> to vector<1x8x128xf32>
    tpu.vector_store %arg4[%c12, %c0_30, %c0_31], %57 {strides = array<i32>} : memref<16x8x128xf32, #tpu.memory_space<vmem>>, vector<1x8x128xf32>,
    %58 = vector.extract_strided_slice %5 {offsets = [0, 1664], sizes = [8, 128], strides = [1, 1]} : vector<8x2048xf32> to vector<8x128xf32>
    %c13 = arith.constant 13 : index
    %c0_32 = arith.constant 0 : index
    %c0_33 = arith.constant 0 : index
    %59 = vector.load %arg4[%c13, %c0_32, %c0_33] : memref<16x8x128xf32, #tpu.memory_space<vmem>>, vector<1x8x128xf32>
    %60 = vector.shape_cast %59 : vector<1x8x128xf32> to vector<8x128xf32>
    %61 = vector.shape_cast %58 : vector<8x128xf32> to vector<1x8x128xf32>
    tpu.vector_store %arg4[%c13, %c0_32, %c0_33], %61 {strides = array<i32>} : memref<16x8x128xf32, #tpu.memory_space<vmem>>, vector<1x8x128xf32>,
    %62 = vector.extract_strided_slice %5 {offsets = [0, 1792], sizes = [8, 128], strides = [1, 1]} : vector<8x2048xf32> to vector<8x128xf32>
    %c14 = arith.constant 14 : index
    %c0_34 = arith.constant 0 : index
    %c0_35 = arith.constant 0 : index
    %63 = vector.load %arg4[%c14, %c0_34, %c0_35] : memref<16x8x128xf32, #tpu.memory_space<vmem>>, vector<1x8x128xf32>
    %64 = vector.shape_cast %63 : vector<1x8x128xf32> to vector<8x128xf32>
    %65 = vector.shape_cast %62 : vector<8x128xf32> to vector<1x8x128xf32>
    tpu.vector_store %arg4[%c14, %c0_34, %c0_35], %65 {strides = array<i32>} : memref<16x8x128xf32, #tpu.memory_space<vmem>>, vector<1x8x128xf32>,
    %66 = vector.extract_strided_slice %5 {offsets = [0, 1920], sizes = [8, 128], strides = [1, 1]} : vector<8x2048xf32> to vector<8x128xf32>
    %c15 = arith.constant 15 : index
    %c0_36 = arith.constant 0 : index
    %c0_37 = arith.constant 0 : index
    %67 = vector.load %arg4[%c15, %c0_36, %c0_37] : memref<16x8x128xf32, #tpu.memory_space<vmem>>, vector<1x8x128xf32>
    %68 = vector.shape_cast %67 : vector<1x8x128xf32> to vector<8x128xf32>
    %69 = vector.shape_cast %66 : vector<8x128xf32> to vector<1x8x128xf32>
    tpu.vector_store %arg4[%c15, %c0_36, %c0_37], %69 {strides = array<i32>} : memref<16x8x128xf32, #tpu.memory_space<vmem>>, vector<1x8x128xf32>,
    return
  }
  func.func @transform_0(%arg0: i32) -> (i32, i32) {
    %c0_i32 = arith.constant 0 : i32
    %c0_i32_0 = arith.constant 0 : i32
    %c0_i32_1 = arith.constant 0 : i32
    return %c0_i32, %c0_i32_0 : i32, i32
  }
  func.func @transform_1(%arg0: i32) -> (i32, i32) {
    %c0_i32 = arith.constant 0 : i32
    %c0_i32_0 = arith.constant 0 : i32
    %c0_i32_1 = arith.constant 0 : i32
    return %c0_i32, %c0_i32_0 : i32, i32
  }
  func.func @transform_2(%arg0: i32) -> (i32, i32) {
    %c0_i32 = arith.constant 0 : i32
    %c0_i32_0 = arith.constant 0 : i32
    %c0_i32_1 = arith.constant 0 : i32
    return %c0_i32, %c0_i32_0 : i32, i32
  }
  func.func @transform_3(%arg0: i32) -> (i32, i32, i32) {
    %c0_i32 = arith.constant 0 : i32
    %c0_i32_0 = arith.constant 0 : i32
    %c0_i32_1 = arith.constant 0 : i32
    %c0_i32_2 = arith.constant 0 : i32
    return %c0_i32, %c0_i32_0, %c0_i32_1 : i32, i32, i32
  }
}

module attributes {stable_mosaic.version = 11 : i64} {
  func.func @_rowlstm_layer_kernel(%arg0: i32, %arg1: memref<16x8x128xf32, #tpu.memory_space<vmem>>, %arg2: memref<32x40xf32, #tpu.memory_space<vmem>>, %arg3: memref<32x1xf32, #tpu.memory_space<vmem>>, %arg4: memref<2x128xf32, #tpu.memory_space<vmem>>, %arg5: memref<16x8x128xf32, #tpu.memory_space<vmem>>, %arg6: memref<40x128xf32, #tpu.memory_space<vmem>>, %arg7: memref<8x128xf32, #tpu.memory_space<vmem>>) attributes {dimension_semantics = [#tpu.dimension_semantics<arbitrary>], iteration_bounds = array<i64: 1>, scalar_prefetch = 0 : i64, scratch_operands = 2 : i64, tpu.core_type = #tpu.core_type<tc>, window_params = [{pipeline_mode = #tpu.pipeline_mode<synchronous>, transform_indices = @transform_0, window_bounds = array<i64: 16, 8, 128>}, {pipeline_mode = #tpu.pipeline_mode<synchronous>, transform_indices = @transform_1, window_bounds = array<i64: 32, 40>}, {pipeline_mode = #tpu.pipeline_mode<synchronous>, transform_indices = @transform_2, window_bounds = array<i64: 32, 1>}, {pipeline_mode = #tpu.pipeline_mode<synchronous>, transform_indices = @transform_3, window_bounds = array<i64: 2, 128>}, {pipeline_mode = #tpu.pipeline_mode<synchronous>, transform_indices = @transform_4, window_bounds = array<i64: 16, 8, 128>}]} {
    %c0 = arith.constant 0 : index
    %c0_0 = arith.constant 0 : index
    %0 = vector.load %arg2[%c0, %c0_0] : memref<32x40xf32, #tpu.memory_space<vmem>>, vector<32x40xf32>
    %c0_1 = arith.constant 0 : index
    %c0_2 = arith.constant 0 : index
    %1 = vector.load %arg3[%c0_1, %c0_2] : memref<32x1xf32, #tpu.memory_space<vmem>>, vector<32x1xf32>
    %c0_3 = arith.constant 0 : index
    %c0_4 = arith.constant 0 : index
    %2 = vector.load %arg4[%c0_3, %c0_4] : memref<2x128xf32, #tpu.memory_space<vmem>>, vector<2x128xf32>
    %3 = vector.extract_strided_slice %2 {offsets = [0, 0], sizes = [1, 128], strides = [1, 1]} : vector<2x128xf32> to vector<1x128xf32>
    %4 = vector.extract_strided_slice %2 {offsets = [1, 0], sizes = [1, 128], strides = [1, 1]} : vector<2x128xf32> to vector<1x128xf32>
    %cst = arith.constant 0.000000e+00 : f32
    %5 = vector.broadcast %cst : f32 to vector<8x128xf32>
    %c0_5 = arith.constant 0 : index
    %c0_6 = arith.constant 0 : index
    %6 = vector.load %arg7[%c0_5, %c0_6] : memref<8x128xf32, #tpu.memory_space<vmem>>, vector<8x128xf32>
    tpu.vector_store %arg7[%c0_5, %c0_6], %5 {strides = array<i32>} : memref<8x128xf32, #tpu.memory_space<vmem>>, vector<8x128xf32>,
    %cst_7 = arith.constant 0.000000e+00 : f32
    %7 = vector.broadcast %cst_7 : f32 to vector<40x128xf32>
    %c0_8 = arith.constant 0 : index
    %c0_9 = arith.constant 0 : index
    %8 = vector.load %arg6[%c0_8, %c0_9] : memref<40x128xf32, #tpu.memory_space<vmem>>, vector<40x128xf32>
    tpu.vector_store %arg6[%c0_8, %c0_9], %7 {strides = array<i32>} : memref<40x128xf32, #tpu.memory_space<vmem>>, vector<40x128xf32>,
    %c0_10 = arith.constant 0 : index
    %c0_11 = arith.constant 0 : index
    %c0_12 = arith.constant 0 : index
    %9 = vector.load %arg1[%c0_10, %c0_11, %c0_12] : memref<16x8x128xf32, #tpu.memory_space<vmem>>, vector<1x8x128xf32>
    %10 = vector.shape_cast %9 : vector<1x8x128xf32> to vector<8x128xf32>
    %c1_i32 = arith.constant 1 : i32
    %11 = tpu.dynamic_rotate %10 by %c1_i32 dim 1 : vector<8x128xf32>, i32 -> vector<8x128xf32>
    %12 = vector.broadcast %3 : vector<1x128xf32> to vector<8x128xf32>
    %13 = arith.mulf %11, %12 : vector<8x128xf32>
    %c0_13 = arith.constant 0 : index
    %c0_14 = arith.constant 0 : index
    %14 = vector.load %arg6[%c0_13, %c0_14] : memref<40x128xf32, #tpu.memory_space<vmem>>, vector<8x128xf32>
    tpu.vector_store %arg6[%c0_13, %c0_14], %13 {strides = array<i32>} : memref<40x128xf32, #tpu.memory_space<vmem>>, vector<8x128xf32>,
    %c8 = arith.constant 8 : index
    %c0_15 = arith.constant 0 : index
    %15 = vector.load %arg6[%c8, %c0_15] : memref<40x128xf32, #tpu.memory_space<vmem>>, vector<8x128xf32>
    tpu.vector_store %arg6[%c8, %c0_15], %10 {strides = array<i32>} : memref<40x128xf32, #tpu.memory_space<vmem>>, vector<8x128xf32>,
    %c0_16 = arith.constant 0 : index
    %c0_17 = arith.constant 0 : index
    %16 = vector.load %arg6[%c0_16, %c0_17] : memref<40x128xf32, #tpu.memory_space<vmem>>, vector<40x128xf32>
    %cst_18 = arith.constant dense<0.000000e+00> : vector<32x128xf32>
    %17 = tpu.matmul %0, %16, %cst_18 {dimension_numbers = #tpu.dot_dimension_numbers<[1], [0], [0], [1], [0, 0, 1, 1], [], []>} : vector<32x40xf32>, vector<40x128xf32>, vector<32x128xf32> -> vector<32x128xf32>
    %18 = vector.broadcast %1 : vector<32x1xf32> to vector<32x128xf32>
    %19 = arith.addf %17, %18 : vector<32x128xf32>
    %20 = arith.negf %19 : vector<32x128xf32>
    %21 = math.exp %20 : vector<32x128xf32>
    %cst_19 = arith.constant 1.000000e+00 : f32
    %22 = vector.broadcast %cst_19 : f32 to vector<32x128xf32>
    %23 = arith.addf %22, %21 : vector<32x128xf32>
    %24 = arith.divf %22, %23 : vector<32x128xf32>
    %25 = vector.extract_strided_slice %24 {offsets = [0, 0], sizes = [8, 128], strides = [1, 1]} : vector<32x128xf32> to vector<8x128xf32>
    %26 = vector.extract_strided_slice %24 {offsets = [8, 0], sizes = [8, 128], strides = [1, 1]} : vector<32x128xf32> to vector<8x128xf32>
    %27 = vector.extract_strided_slice %24 {offsets = [16, 0], sizes = [8, 128], strides = [1, 1]} : vector<32x128xf32> to vector<8x128xf32>
    %28 = vector.extract_strided_slice %24 {offsets = [24, 0], sizes = [8, 128], strides = [1, 1]} : vector<32x128xf32> to vector<8x128xf32>
    %c0_20 = arith.constant 0 : index
    %c0_21 = arith.constant 0 : index
    %29 = vector.load %arg7[%c0_20, %c0_21] : memref<8x128xf32, #tpu.memory_space<vmem>>, vector<8x128xf32>
    %30 = arith.mulf %27, %29 : vector<8x128xf32>
    %31 = arith.mulf %25, %26 : vector<8x128xf32>
    %32 = arith.addf %30, %31 : vector<8x128xf32>
    %33 = math.tanh %32 : vector<8x128xf32>
    %34 = arith.mulf %28, %33 : vector<8x128xf32>
    %c0_22 = arith.constant 0 : index
    %c0_23 = arith.constant 0 : index
    %35 = vector.load %arg7[%c0_22, %c0_23] : memref<8x128xf32, #tpu.memory_space<vmem>>, vector<8x128xf32>
    tpu.vector_store %arg7[%c0_22, %c0_23], %32 {strides = array<i32>} : memref<8x128xf32, #tpu.memory_space<vmem>>, vector<8x128xf32>,
    %c0_24 = arith.constant 0 : index
    %c0_25 = arith.constant 0 : index
    %c0_26 = arith.constant 0 : index
    %36 = vector.load %arg5[%c0_24, %c0_25, %c0_26] : memref<16x8x128xf32, #tpu.memory_space<vmem>>, vector<1x8x128xf32>
    %37 = vector.shape_cast %36 : vector<1x8x128xf32> to vector<8x128xf32>
    %38 = vector.shape_cast %34 : vector<8x128xf32> to vector<1x8x128xf32>
    tpu.vector_store %arg5[%c0_24, %c0_25, %c0_26], %38 {strides = array<i32>} : memref<16x8x128xf32, #tpu.memory_space<vmem>>, vector<1x8x128xf32>,
    %c1_i32_27 = arith.constant 1 : i32
    %39 = tpu.dynamic_rotate %34 by %c1_i32_27 dim 1 : vector<8x128xf32>, i32 -> vector<8x128xf32>
    %40 = vector.broadcast %3 : vector<1x128xf32> to vector<8x128xf32>
    %41 = arith.mulf %39, %40 : vector<8x128xf32>
    %c16 = arith.constant 16 : index
    %c0_28 = arith.constant 0 : index
    %42 = vector.load %arg6[%c16, %c0_28] : memref<40x128xf32, #tpu.memory_space<vmem>>, vector<8x128xf32>
    tpu.vector_store %arg6[%c16, %c0_28], %41 {strides = array<i32>} : memref<40x128xf32, #tpu.memory_space<vmem>>, vector<8x128xf32>,
    %c24 = arith.constant 24 : index
    %c0_29 = arith.constant 0 : index
    %43 = vector.load %arg6[%c24, %c0_29] : memref<40x128xf32, #tpu.memory_space<vmem>>, vector<8x128xf32>
    tpu.vector_store %arg6[%c24, %c0_29], %34 {strides = array<i32>} : memref<40x128xf32, #tpu.memory_space<vmem>>, vector<8x128xf32>,
    %c127_i32 = arith.constant 127 : i32
    %44 = tpu.dynamic_rotate %34 by %c127_i32 dim 1 : vector<8x128xf32>, i32 -> vector<8x128xf32>
    %45 = vector.broadcast %4 : vector<1x128xf32> to vector<8x128xf32>
    %46 = arith.mulf %44, %45 : vector<8x128xf32>
    %c32 = arith.constant 32 : index
    %c0_30 = arith.constant 0 : index
    %47 = vector.load %arg6[%c32, %c0_30] : memref<40x128xf32, #tpu.memory_space<vmem>>, vector<8x128xf32>
    tpu.vector_store %arg6[%c32, %c0_30], %46 {strides = array<i32>} : memref<40x128xf32, #tpu.memory_space<vmem>>, vector<8x128xf32>,
    %c1 = arith.constant 1 : index
    %c0_31 = arith.constant 0 : index
    %c0_32 = arith.constant 0 : index
    %48 = vector.load %arg1[%c1, %c0_31, %c0_32] : memref<16x8x128xf32, #tpu.memory_space<vmem>>, vector<1x8x128xf32>
    %49 = vector.shape_cast %48 : vector<1x8x128xf32> to vector<8x128xf32>
    %c1_i32_33 = arith.constant 1 : i32
    %50 = tpu.dynamic_rotate %49 by %c1_i32_33 dim 1 : vector<8x128xf32>, i32 -> vector<8x128xf32>
    %51 = vector.broadcast %3 : vector<1x128xf32> to vector<8x128xf32>
    %52 = arith.mulf %50, %51 : vector<8x128xf32>
    %c0_34 = arith.constant 0 : index
    %c0_35 = arith.constant 0 : index
    %53 = vector.load %arg6[%c0_34, %c0_35] : memref<40x128xf32, #tpu.memory_space<vmem>>, vector<8x128xf32>
    tpu.vector_store %arg6[%c0_34, %c0_35], %52 {strides = array<i32>} : memref<40x128xf32, #tpu.memory_space<vmem>>, vector<8x128xf32>,
    %c8_36 = arith.constant 8 : index
    %c0_37 = arith.constant 0 : index
    %54 = vector.load %arg6[%c8_36, %c0_37] : memref<40x128xf32, #tpu.memory_space<vmem>>, vector<8x128xf32>
    tpu.vector_store %arg6[%c8_36, %c0_37], %49 {strides = array<i32>} : memref<40x128xf32, #tpu.memory_space<vmem>>, vector<8x128xf32>,
    %c0_38 = arith.constant 0 : index
    %c0_39 = arith.constant 0 : index
    %55 = vector.load %arg6[%c0_38, %c0_39] : memref<40x128xf32, #tpu.memory_space<vmem>>, vector<40x128xf32>
    %cst_40 = arith.constant dense<0.000000e+00> : vector<32x128xf32>
    %56 = tpu.matmul %0, %55, %cst_40 {dimension_numbers = #tpu.dot_dimension_numbers<[1], [0], [0], [1], [0, 0, 1, 1], [], []>} : vector<32x40xf32>, vector<40x128xf32>, vector<32x128xf32> -> vector<32x128xf32>
    %57 = vector.broadcast %1 : vector<32x1xf32> to vector<32x128xf32>
    %58 = arith.addf %56, %57 : vector<32x128xf32>
    %59 = arith.negf %58 : vector<32x128xf32>
    %60 = math.exp %59 : vector<32x128xf32>
    %cst_41 = arith.constant 1.000000e+00 : f32
    %61 = vector.broadcast %cst_41 : f32 to vector<32x128xf32>
    %62 = arith.addf %61, %60 : vector<32x128xf32>
    %63 = arith.divf %61, %62 : vector<32x128xf32>
    %64 = vector.extract_strided_slice %63 {offsets = [0, 0], sizes = [8, 128], strides = [1, 1]} : vector<32x128xf32> to vector<8x128xf32>
    %65 = vector.extract_strided_slice %63 {offsets = [8, 0], sizes = [8, 128], strides = [1, 1]} : vector<32x128xf32> to vector<8x128xf32>
    %66 = vector.extract_strided_slice %63 {offsets = [16, 0], sizes = [8, 128], strides = [1, 1]} : vector<32x128xf32> to vector<8x128xf32>
    %67 = vector.extract_strided_slice %63 {offsets = [24, 0], sizes = [8, 128], strides = [1, 1]} : vector<32x128xf32> to vector<8x128xf32>
    %c0_42 = arith.constant 0 : index
    %c0_43 = arith.constant 0 : index
    %68 = vector.load %arg7[%c0_42, %c0_43] : memref<8x128xf32, #tpu.memory_space<vmem>>, vector<8x128xf32>
    %69 = arith.mulf %66, %68 : vector<8x128xf32>
    %70 = arith.mulf %64, %65 : vector<8x128xf32>
    %71 = arith.addf %69, %70 : vector<8x128xf32>
    %72 = math.tanh %71 : vector<8x128xf32>
    %73 = arith.mulf %67, %72 : vector<8x128xf32>
    %c0_44 = arith.constant 0 : index
    %c0_45 = arith.constant 0 : index
    %74 = vector.load %arg7[%c0_44, %c0_45] : memref<8x128xf32, #tpu.memory_space<vmem>>, vector<8x128xf32>
    tpu.vector_store %arg7[%c0_44, %c0_45], %71 {strides = array<i32>} : memref<8x128xf32, #tpu.memory_space<vmem>>, vector<8x128xf32>,
    %c1_46 = arith.constant 1 : index
    %c0_47 = arith.constant 0 : index
    %c0_48 = arith.constant 0 : index
    %75 = vector.load %arg5[%c1_46, %c0_47, %c0_48] : memref<16x8x128xf32, #tpu.memory_space<vmem>>, vector<1x8x128xf32>
    %76 = vector.shape_cast %75 : vector<1x8x128xf32> to vector<8x128xf32>
    %77 = vector.shape_cast %73 : vector<8x128xf32> to vector<1x8x128xf32>
    tpu.vector_store %arg5[%c1_46, %c0_47, %c0_48], %77 {strides = array<i32>} : memref<16x8x128xf32, #tpu.memory_space<vmem>>, vector<1x8x128xf32>,
    %c1_i32_49 = arith.constant 1 : i32
    %78 = tpu.dynamic_rotate %73 by %c1_i32_49 dim 1 : vector<8x128xf32>, i32 -> vector<8x128xf32>
    %79 = vector.broadcast %3 : vector<1x128xf32> to vector<8x128xf32>
    %80 = arith.mulf %78, %79 : vector<8x128xf32>
    %c16_50 = arith.constant 16 : index
    %c0_51 = arith.constant 0 : index
    %81 = vector.load %arg6[%c16_50, %c0_51] : memref<40x128xf32, #tpu.memory_space<vmem>>, vector<8x128xf32>
    tpu.vector_store %arg6[%c16_50, %c0_51], %80 {strides = array<i32>} : memref<40x128xf32, #tpu.memory_space<vmem>>, vector<8x128xf32>,
    %c24_52 = arith.constant 24 : index
    %c0_53 = arith.constant 0 : index
    %82 = vector.load %arg6[%c24_52, %c0_53] : memref<40x128xf32, #tpu.memory_space<vmem>>, vector<8x128xf32>
    tpu.vector_store %arg6[%c24_52, %c0_53], %73 {strides = array<i32>} : memref<40x128xf32, #tpu.memory_space<vmem>>, vector<8x128xf32>,
    %c127_i32_54 = arith.constant 127 : i32
    %83 = tpu.dynamic_rotate %73 by %c127_i32_54 dim 1 : vector<8x128xf32>, i32 -> vector<8x128xf32>
    %84 = vector.broadcast %4 : vector<1x128xf32> to vector<8x128xf32>
    %85 = arith.mulf %83, %84 : vector<8x128xf32>
    %c32_55 = arith.constant 32 : index
    %c0_56 = arith.constant 0 : index
    %86 = vector.load %arg6[%c32_55, %c0_56] : memref<40x128xf32, #tpu.memory_space<vmem>>, vector<8x128xf32>
    tpu.vector_store %arg6[%c32_55, %c0_56], %85 {strides = array<i32>} : memref<40x128xf32, #tpu.memory_space<vmem>>, vector<8x128xf32>,
    %c2 = arith.constant 2 : index
    %c0_57 = arith.constant 0 : index
    %c0_58 = arith.constant 0 : index
    %87 = vector.load %arg1[%c2, %c0_57, %c0_58] : memref<16x8x128xf32, #tpu.memory_space<vmem>>, vector<1x8x128xf32>
    %88 = vector.shape_cast %87 : vector<1x8x128xf32> to vector<8x128xf32>
    %c1_i32_59 = arith.constant 1 : i32
    %89 = tpu.dynamic_rotate %88 by %c1_i32_59 dim 1 : vector<8x128xf32>, i32 -> vector<8x128xf32>
    %90 = vector.broadcast %3 : vector<1x128xf32> to vector<8x128xf32>
    %91 = arith.mulf %89, %90 : vector<8x128xf32>
    %c0_60 = arith.constant 0 : index
    %c0_61 = arith.constant 0 : index
    %92 = vector.load %arg6[%c0_60, %c0_61] : memref<40x128xf32, #tpu.memory_space<vmem>>, vector<8x128xf32>
    tpu.vector_store %arg6[%c0_60, %c0_61], %91 {strides = array<i32>} : memref<40x128xf32, #tpu.memory_space<vmem>>, vector<8x128xf32>,
    %c8_62 = arith.constant 8 : index
    %c0_63 = arith.constant 0 : index
    %93 = vector.load %arg6[%c8_62, %c0_63] : memref<40x128xf32, #tpu.memory_space<vmem>>, vector<8x128xf32>
    tpu.vector_store %arg6[%c8_62, %c0_63], %88 {strides = array<i32>} : memref<40x128xf32, #tpu.memory_space<vmem>>, vector<8x128xf32>,
    %c0_64 = arith.constant 0 : index
    %c0_65 = arith.constant 0 : index
    %94 = vector.load %arg6[%c0_64, %c0_65] : memref<40x128xf32, #tpu.memory_space<vmem>>, vector<40x128xf32>
    %cst_66 = arith.constant dense<0.000000e+00> : vector<32x128xf32>
    %95 = tpu.matmul %0, %94, %cst_66 {dimension_numbers = #tpu.dot_dimension_numbers<[1], [0], [0], [1], [0, 0, 1, 1], [], []>} : vector<32x40xf32>, vector<40x128xf32>, vector<32x128xf32> -> vector<32x128xf32>
    %96 = vector.broadcast %1 : vector<32x1xf32> to vector<32x128xf32>
    %97 = arith.addf %95, %96 : vector<32x128xf32>
    %98 = arith.negf %97 : vector<32x128xf32>
    %99 = math.exp %98 : vector<32x128xf32>
    %cst_67 = arith.constant 1.000000e+00 : f32
    %100 = vector.broadcast %cst_67 : f32 to vector<32x128xf32>
    %101 = arith.addf %100, %99 : vector<32x128xf32>
    %102 = arith.divf %100, %101 : vector<32x128xf32>
    %103 = vector.extract_strided_slice %102 {offsets = [0, 0], sizes = [8, 128], strides = [1, 1]} : vector<32x128xf32> to vector<8x128xf32>
    %104 = vector.extract_strided_slice %102 {offsets = [8, 0], sizes = [8, 128], strides = [1, 1]} : vector<32x128xf32> to vector<8x128xf32>
    %105 = vector.extract_strided_slice %102 {offsets = [16, 0], sizes = [8, 128], strides = [1, 1]} : vector<32x128xf32> to vector<8x128xf32>
    %106 = vector.extract_strided_slice %102 {offsets = [24, 0], sizes = [8, 128], strides = [1, 1]} : vector<32x128xf32> to vector<8x128xf32>
    %c0_68 = arith.constant 0 : index
    %c0_69 = arith.constant 0 : index
    %107 = vector.load %arg7[%c0_68, %c0_69] : memref<8x128xf32, #tpu.memory_space<vmem>>, vector<8x128xf32>
    %108 = arith.mulf %105, %107 : vector<8x128xf32>
    %109 = arith.mulf %103, %104 : vector<8x128xf32>
    %110 = arith.addf %108, %109 : vector<8x128xf32>
    %111 = math.tanh %110 : vector<8x128xf32>
    %112 = arith.mulf %106, %111 : vector<8x128xf32>
    %c0_70 = arith.constant 0 : index
    %c0_71 = arith.constant 0 : index
    %113 = vector.load %arg7[%c0_70, %c0_71] : memref<8x128xf32, #tpu.memory_space<vmem>>, vector<8x128xf32>
    tpu.vector_store %arg7[%c0_70, %c0_71], %110 {strides = array<i32>} : memref<8x128xf32, #tpu.memory_space<vmem>>, vector<8x128xf32>,
    %c2_72 = arith.constant 2 : index
    %c0_73 = arith.constant 0 : index
    %c0_74 = arith.constant 0 : index
    %114 = vector.load %arg5[%c2_72, %c0_73, %c0_74] : memref<16x8x128xf32, #tpu.memory_space<vmem>>, vector<1x8x128xf32>
    %115 = vector.shape_cast %114 : vector<1x8x128xf32> to vector<8x128xf32>
    %116 = vector.shape_cast %112 : vector<8x128xf32> to vector<1x8x128xf32>
    tpu.vector_store %arg5[%c2_72, %c0_73, %c0_74], %116 {strides = array<i32>} : memref<16x8x128xf32, #tpu.memory_space<vmem>>, vector<1x8x128xf32>,
    %c1_i32_75 = arith.constant 1 : i32
    %117 = tpu.dynamic_rotate %112 by %c1_i32_75 dim 1 : vector<8x128xf32>, i32 -> vector<8x128xf32>
    %118 = vector.broadcast %3 : vector<1x128xf32> to vector<8x128xf32>
    %119 = arith.mulf %117, %118 : vector<8x128xf32>
    %c16_76 = arith.constant 16 : index
    %c0_77 = arith.constant 0 : index
    %120 = vector.load %arg6[%c16_76, %c0_77] : memref<40x128xf32, #tpu.memory_space<vmem>>, vector<8x128xf32>
    tpu.vector_store %arg6[%c16_76, %c0_77], %119 {strides = array<i32>} : memref<40x128xf32, #tpu.memory_space<vmem>>, vector<8x128xf32>,
    %c24_78 = arith.constant 24 : index
    %c0_79 = arith.constant 0 : index
    %121 = vector.load %arg6[%c24_78, %c0_79] : memref<40x128xf32, #tpu.memory_space<vmem>>, vector<8x128xf32>
    tpu.vector_store %arg6[%c24_78, %c0_79], %112 {strides = array<i32>} : memref<40x128xf32, #tpu.memory_space<vmem>>, vector<8x128xf32>,
    %c127_i32_80 = arith.constant 127 : i32
    %122 = tpu.dynamic_rotate %112 by %c127_i32_80 dim 1 : vector<8x128xf32>, i32 -> vector<8x128xf32>
    %123 = vector.broadcast %4 : vector<1x128xf32> to vector<8x128xf32>
    %124 = arith.mulf %122, %123 : vector<8x128xf32>
    %c32_81 = arith.constant 32 : index
    %c0_82 = arith.constant 0 : index
    %125 = vector.load %arg6[%c32_81, %c0_82] : memref<40x128xf32, #tpu.memory_space<vmem>>, vector<8x128xf32>
    tpu.vector_store %arg6[%c32_81, %c0_82], %124 {strides = array<i32>} : memref<40x128xf32, #tpu.memory_space<vmem>>, vector<8x128xf32>,
    %c3 = arith.constant 3 : index
    %c0_83 = arith.constant 0 : index
    %c0_84 = arith.constant 0 : index
    %126 = vector.load %arg1[%c3, %c0_83, %c0_84] : memref<16x8x128xf32, #tpu.memory_space<vmem>>, vector<1x8x128xf32>
    %127 = vector.shape_cast %126 : vector<1x8x128xf32> to vector<8x128xf32>
    %c1_i32_85 = arith.constant 1 : i32
    %128 = tpu.dynamic_rotate %127 by %c1_i32_85 dim 1 : vector<8x128xf32>, i32 -> vector<8x128xf32>
    %129 = vector.broadcast %3 : vector<1x128xf32> to vector<8x128xf32>
    %130 = arith.mulf %128, %129 : vector<8x128xf32>
    %c0_86 = arith.constant 0 : index
    %c0_87 = arith.constant 0 : index
    %131 = vector.load %arg6[%c0_86, %c0_87] : memref<40x128xf32, #tpu.memory_space<vmem>>, vector<8x128xf32>
    tpu.vector_store %arg6[%c0_86, %c0_87], %130 {strides = array<i32>} : memref<40x128xf32, #tpu.memory_space<vmem>>, vector<8x128xf32>,
    %c8_88 = arith.constant 8 : index
    %c0_89 = arith.constant 0 : index
    %132 = vector.load %arg6[%c8_88, %c0_89] : memref<40x128xf32, #tpu.memory_space<vmem>>, vector<8x128xf32>
    tpu.vector_store %arg6[%c8_88, %c0_89], %127 {strides = array<i32>} : memref<40x128xf32, #tpu.memory_space<vmem>>, vector<8x128xf32>,
    %c0_90 = arith.constant 0 : index
    %c0_91 = arith.constant 0 : index
    %133 = vector.load %arg6[%c0_90, %c0_91] : memref<40x128xf32, #tpu.memory_space<vmem>>, vector<40x128xf32>
    %cst_92 = arith.constant dense<0.000000e+00> : vector<32x128xf32>
    %134 = tpu.matmul %0, %133, %cst_92 {dimension_numbers = #tpu.dot_dimension_numbers<[1], [0], [0], [1], [0, 0, 1, 1], [], []>} : vector<32x40xf32>, vector<40x128xf32>, vector<32x128xf32> -> vector<32x128xf32>
    %135 = vector.broadcast %1 : vector<32x1xf32> to vector<32x128xf32>
    %136 = arith.addf %134, %135 : vector<32x128xf32>
    %137 = arith.negf %136 : vector<32x128xf32>
    %138 = math.exp %137 : vector<32x128xf32>
    %cst_93 = arith.constant 1.000000e+00 : f32
    %139 = vector.broadcast %cst_93 : f32 to vector<32x128xf32>
    %140 = arith.addf %139, %138 : vector<32x128xf32>
    %141 = arith.divf %139, %140 : vector<32x128xf32>
    %142 = vector.extract_strided_slice %141 {offsets = [0, 0], sizes = [8, 128], strides = [1, 1]} : vector<32x128xf32> to vector<8x128xf32>
    %143 = vector.extract_strided_slice %141 {offsets = [8, 0], sizes = [8, 128], strides = [1, 1]} : vector<32x128xf32> to vector<8x128xf32>
    %144 = vector.extract_strided_slice %141 {offsets = [16, 0], sizes = [8, 128], strides = [1, 1]} : vector<32x128xf32> to vector<8x128xf32>
    %145 = vector.extract_strided_slice %141 {offsets = [24, 0], sizes = [8, 128], strides = [1, 1]} : vector<32x128xf32> to vector<8x128xf32>
    %c0_94 = arith.constant 0 : index
    %c0_95 = arith.constant 0 : index
    %146 = vector.load %arg7[%c0_94, %c0_95] : memref<8x128xf32, #tpu.memory_space<vmem>>, vector<8x128xf32>
    %147 = arith.mulf %144, %146 : vector<8x128xf32>
    %148 = arith.mulf %142, %143 : vector<8x128xf32>
    %149 = arith.addf %147, %148 : vector<8x128xf32>
    %150 = math.tanh %149 : vector<8x128xf32>
    %151 = arith.mulf %145, %150 : vector<8x128xf32>
    %c0_96 = arith.constant 0 : index
    %c0_97 = arith.constant 0 : index
    %152 = vector.load %arg7[%c0_96, %c0_97] : memref<8x128xf32, #tpu.memory_space<vmem>>, vector<8x128xf32>
    tpu.vector_store %arg7[%c0_96, %c0_97], %149 {strides = array<i32>} : memref<8x128xf32, #tpu.memory_space<vmem>>, vector<8x128xf32>,
    %c3_98 = arith.constant 3 : index
    %c0_99 = arith.constant 0 : index
    %c0_100 = arith.constant 0 : index
    %153 = vector.load %arg5[%c3_98, %c0_99, %c0_100] : memref<16x8x128xf32, #tpu.memory_space<vmem>>, vector<1x8x128xf32>
    %154 = vector.shape_cast %153 : vector<1x8x128xf32> to vector<8x128xf32>
    %155 = vector.shape_cast %151 : vector<8x128xf32> to vector<1x8x128xf32>
    tpu.vector_store %arg5[%c3_98, %c0_99, %c0_100], %155 {strides = array<i32>} : memref<16x8x128xf32, #tpu.memory_space<vmem>>, vector<1x8x128xf32>,
    %c1_i32_101 = arith.constant 1 : i32
    %156 = tpu.dynamic_rotate %151 by %c1_i32_101 dim 1 : vector<8x128xf32>, i32 -> vector<8x128xf32>
    %157 = vector.broadcast %3 : vector<1x128xf32> to vector<8x128xf32>
    %158 = arith.mulf %156, %157 : vector<8x128xf32>
    %c16_102 = arith.constant 16 : index
    %c0_103 = arith.constant 0 : index
    %159 = vector.load %arg6[%c16_102, %c0_103] : memref<40x128xf32, #tpu.memory_space<vmem>>, vector<8x128xf32>
    tpu.vector_store %arg6[%c16_102, %c0_103], %158 {strides = array<i32>} : memref<40x128xf32, #tpu.memory_space<vmem>>, vector<8x128xf32>,
    %c24_104 = arith.constant 24 : index
    %c0_105 = arith.constant 0 : index
    %160 = vector.load %arg6[%c24_104, %c0_105] : memref<40x128xf32, #tpu.memory_space<vmem>>, vector<8x128xf32>
    tpu.vector_store %arg6[%c24_104, %c0_105], %151 {strides = array<i32>} : memref<40x128xf32, #tpu.memory_space<vmem>>, vector<8x128xf32>,
    %c127_i32_106 = arith.constant 127 : i32
    %161 = tpu.dynamic_rotate %151 by %c127_i32_106 dim 1 : vector<8x128xf32>, i32 -> vector<8x128xf32>
    %162 = vector.broadcast %4 : vector<1x128xf32> to vector<8x128xf32>
    %163 = arith.mulf %161, %162 : vector<8x128xf32>
    %c32_107 = arith.constant 32 : index
    %c0_108 = arith.constant 0 : index
    %164 = vector.load %arg6[%c32_107, %c0_108] : memref<40x128xf32, #tpu.memory_space<vmem>>, vector<8x128xf32>
    tpu.vector_store %arg6[%c32_107, %c0_108], %163 {strides = array<i32>} : memref<40x128xf32, #tpu.memory_space<vmem>>, vector<8x128xf32>,
    %c4 = arith.constant 4 : index
    %c0_109 = arith.constant 0 : index
    %c0_110 = arith.constant 0 : index
    %165 = vector.load %arg1[%c4, %c0_109, %c0_110] : memref<16x8x128xf32, #tpu.memory_space<vmem>>, vector<1x8x128xf32>
    %166 = vector.shape_cast %165 : vector<1x8x128xf32> to vector<8x128xf32>
    %c1_i32_111 = arith.constant 1 : i32
    %167 = tpu.dynamic_rotate %166 by %c1_i32_111 dim 1 : vector<8x128xf32>, i32 -> vector<8x128xf32>
    %168 = vector.broadcast %3 : vector<1x128xf32> to vector<8x128xf32>
    %169 = arith.mulf %167, %168 : vector<8x128xf32>
    %c0_112 = arith.constant 0 : index
    %c0_113 = arith.constant 0 : index
    %170 = vector.load %arg6[%c0_112, %c0_113] : memref<40x128xf32, #tpu.memory_space<vmem>>, vector<8x128xf32>
    tpu.vector_store %arg6[%c0_112, %c0_113], %169 {strides = array<i32>} : memref<40x128xf32, #tpu.memory_space<vmem>>, vector<8x128xf32>,
    %c8_114 = arith.constant 8 : index
    %c0_115 = arith.constant 0 : index
    %171 = vector.load %arg6[%c8_114, %c0_115] : memref<40x128xf32, #tpu.memory_space<vmem>>, vector<8x128xf32>
    tpu.vector_store %arg6[%c8_114, %c0_115], %166 {strides = array<i32>} : memref<40x128xf32, #tpu.memory_space<vmem>>, vector<8x128xf32>,
    %c0_116 = arith.constant 0 : index
    %c0_117 = arith.constant 0 : index
    %172 = vector.load %arg6[%c0_116, %c0_117] : memref<40x128xf32, #tpu.memory_space<vmem>>, vector<40x128xf32>
    %cst_118 = arith.constant dense<0.000000e+00> : vector<32x128xf32>
    %173 = tpu.matmul %0, %172, %cst_118 {dimension_numbers = #tpu.dot_dimension_numbers<[1], [0], [0], [1], [0, 0, 1, 1], [], []>} : vector<32x40xf32>, vector<40x128xf32>, vector<32x128xf32> -> vector<32x128xf32>
    %174 = vector.broadcast %1 : vector<32x1xf32> to vector<32x128xf32>
    %175 = arith.addf %173, %174 : vector<32x128xf32>
    %176 = arith.negf %175 : vector<32x128xf32>
    %177 = math.exp %176 : vector<32x128xf32>
    %cst_119 = arith.constant 1.000000e+00 : f32
    %178 = vector.broadcast %cst_119 : f32 to vector<32x128xf32>
    %179 = arith.addf %178, %177 : vector<32x128xf32>
    %180 = arith.divf %178, %179 : vector<32x128xf32>
    %181 = vector.extract_strided_slice %180 {offsets = [0, 0], sizes = [8, 128], strides = [1, 1]} : vector<32x128xf32> to vector<8x128xf32>
    %182 = vector.extract_strided_slice %180 {offsets = [8, 0], sizes = [8, 128], strides = [1, 1]} : vector<32x128xf32> to vector<8x128xf32>
    %183 = vector.extract_strided_slice %180 {offsets = [16, 0], sizes = [8, 128], strides = [1, 1]} : vector<32x128xf32> to vector<8x128xf32>
    %184 = vector.extract_strided_slice %180 {offsets = [24, 0], sizes = [8, 128], strides = [1, 1]} : vector<32x128xf32> to vector<8x128xf32>
    %c0_120 = arith.constant 0 : index
    %c0_121 = arith.constant 0 : index
    %185 = vector.load %arg7[%c0_120, %c0_121] : memref<8x128xf32, #tpu.memory_space<vmem>>, vector<8x128xf32>
    %186 = arith.mulf %183, %185 : vector<8x128xf32>
    %187 = arith.mulf %181, %182 : vector<8x128xf32>
    %188 = arith.addf %186, %187 : vector<8x128xf32>
    %189 = math.tanh %188 : vector<8x128xf32>
    %190 = arith.mulf %184, %189 : vector<8x128xf32>
    %c0_122 = arith.constant 0 : index
    %c0_123 = arith.constant 0 : index
    %191 = vector.load %arg7[%c0_122, %c0_123] : memref<8x128xf32, #tpu.memory_space<vmem>>, vector<8x128xf32>
    tpu.vector_store %arg7[%c0_122, %c0_123], %188 {strides = array<i32>} : memref<8x128xf32, #tpu.memory_space<vmem>>, vector<8x128xf32>,
    %c4_124 = arith.constant 4 : index
    %c0_125 = arith.constant 0 : index
    %c0_126 = arith.constant 0 : index
    %192 = vector.load %arg5[%c4_124, %c0_125, %c0_126] : memref<16x8x128xf32, #tpu.memory_space<vmem>>, vector<1x8x128xf32>
    %193 = vector.shape_cast %192 : vector<1x8x128xf32> to vector<8x128xf32>
    %194 = vector.shape_cast %190 : vector<8x128xf32> to vector<1x8x128xf32>
    tpu.vector_store %arg5[%c4_124, %c0_125, %c0_126], %194 {strides = array<i32>} : memref<16x8x128xf32, #tpu.memory_space<vmem>>, vector<1x8x128xf32>,
    %c1_i32_127 = arith.constant 1 : i32
    %195 = tpu.dynamic_rotate %190 by %c1_i32_127 dim 1 : vector<8x128xf32>, i32 -> vector<8x128xf32>
    %196 = vector.broadcast %3 : vector<1x128xf32> to vector<8x128xf32>
    %197 = arith.mulf %195, %196 : vector<8x128xf32>
    %c16_128 = arith.constant 16 : index
    %c0_129 = arith.constant 0 : index
    %198 = vector.load %arg6[%c16_128, %c0_129] : memref<40x128xf32, #tpu.memory_space<vmem>>, vector<8x128xf32>
    tpu.vector_store %arg6[%c16_128, %c0_129], %197 {strides = array<i32>} : memref<40x128xf32, #tpu.memory_space<vmem>>, vector<8x128xf32>,
    %c24_130 = arith.constant 24 : index
    %c0_131 = arith.constant 0 : index
    %199 = vector.load %arg6[%c24_130, %c0_131] : memref<40x128xf32, #tpu.memory_space<vmem>>, vector<8x128xf32>
    tpu.vector_store %arg6[%c24_130, %c0_131], %190 {strides = array<i32>} : memref<40x128xf32, #tpu.memory_space<vmem>>, vector<8x128xf32>,
    %c127_i32_132 = arith.constant 127 : i32
    %200 = tpu.dynamic_rotate %190 by %c127_i32_132 dim 1 : vector<8x128xf32>, i32 -> vector<8x128xf32>
    %201 = vector.broadcast %4 : vector<1x128xf32> to vector<8x128xf32>
    %202 = arith.mulf %200, %201 : vector<8x128xf32>
    %c32_133 = arith.constant 32 : index
    %c0_134 = arith.constant 0 : index
    %203 = vector.load %arg6[%c32_133, %c0_134] : memref<40x128xf32, #tpu.memory_space<vmem>>, vector<8x128xf32>
    tpu.vector_store %arg6[%c32_133, %c0_134], %202 {strides = array<i32>} : memref<40x128xf32, #tpu.memory_space<vmem>>, vector<8x128xf32>,
    %c5 = arith.constant 5 : index
    %c0_135 = arith.constant 0 : index
    %c0_136 = arith.constant 0 : index
    %204 = vector.load %arg1[%c5, %c0_135, %c0_136] : memref<16x8x128xf32, #tpu.memory_space<vmem>>, vector<1x8x128xf32>
    %205 = vector.shape_cast %204 : vector<1x8x128xf32> to vector<8x128xf32>
    %c1_i32_137 = arith.constant 1 : i32
    %206 = tpu.dynamic_rotate %205 by %c1_i32_137 dim 1 : vector<8x128xf32>, i32 -> vector<8x128xf32>
    %207 = vector.broadcast %3 : vector<1x128xf32> to vector<8x128xf32>
    %208 = arith.mulf %206, %207 : vector<8x128xf32>
    %c0_138 = arith.constant 0 : index
    %c0_139 = arith.constant 0 : index
    %209 = vector.load %arg6[%c0_138, %c0_139] : memref<40x128xf32, #tpu.memory_space<vmem>>, vector<8x128xf32>
    tpu.vector_store %arg6[%c0_138, %c0_139], %208 {strides = array<i32>} : memref<40x128xf32, #tpu.memory_space<vmem>>, vector<8x128xf32>,
    %c8_140 = arith.constant 8 : index
    %c0_141 = arith.constant 0 : index
    %210 = vector.load %arg6[%c8_140, %c0_141] : memref<40x128xf32, #tpu.memory_space<vmem>>, vector<8x128xf32>
    tpu.vector_store %arg6[%c8_140, %c0_141], %205 {strides = array<i32>} : memref<40x128xf32, #tpu.memory_space<vmem>>, vector<8x128xf32>,
    %c0_142 = arith.constant 0 : index
    %c0_143 = arith.constant 0 : index
    %211 = vector.load %arg6[%c0_142, %c0_143] : memref<40x128xf32, #tpu.memory_space<vmem>>, vector<40x128xf32>
    %cst_144 = arith.constant dense<0.000000e+00> : vector<32x128xf32>
    %212 = tpu.matmul %0, %211, %cst_144 {dimension_numbers = #tpu.dot_dimension_numbers<[1], [0], [0], [1], [0, 0, 1, 1], [], []>} : vector<32x40xf32>, vector<40x128xf32>, vector<32x128xf32> -> vector<32x128xf32>
    %213 = vector.broadcast %1 : vector<32x1xf32> to vector<32x128xf32>
    %214 = arith.addf %212, %213 : vector<32x128xf32>
    %215 = arith.negf %214 : vector<32x128xf32>
    %216 = math.exp %215 : vector<32x128xf32>
    %cst_145 = arith.constant 1.000000e+00 : f32
    %217 = vector.broadcast %cst_145 : f32 to vector<32x128xf32>
    %218 = arith.addf %217, %216 : vector<32x128xf32>
    %219 = arith.divf %217, %218 : vector<32x128xf32>
    %220 = vector.extract_strided_slice %219 {offsets = [0, 0], sizes = [8, 128], strides = [1, 1]} : vector<32x128xf32> to vector<8x128xf32>
    %221 = vector.extract_strided_slice %219 {offsets = [8, 0], sizes = [8, 128], strides = [1, 1]} : vector<32x128xf32> to vector<8x128xf32>
    %222 = vector.extract_strided_slice %219 {offsets = [16, 0], sizes = [8, 128], strides = [1, 1]} : vector<32x128xf32> to vector<8x128xf32>
    %223 = vector.extract_strided_slice %219 {offsets = [24, 0], sizes = [8, 128], strides = [1, 1]} : vector<32x128xf32> to vector<8x128xf32>
    %c0_146 = arith.constant 0 : index
    %c0_147 = arith.constant 0 : index
    %224 = vector.load %arg7[%c0_146, %c0_147] : memref<8x128xf32, #tpu.memory_space<vmem>>, vector<8x128xf32>
    %225 = arith.mulf %222, %224 : vector<8x128xf32>
    %226 = arith.mulf %220, %221 : vector<8x128xf32>
    %227 = arith.addf %225, %226 : vector<8x128xf32>
    %228 = math.tanh %227 : vector<8x128xf32>
    %229 = arith.mulf %223, %228 : vector<8x128xf32>
    %c0_148 = arith.constant 0 : index
    %c0_149 = arith.constant 0 : index
    %230 = vector.load %arg7[%c0_148, %c0_149] : memref<8x128xf32, #tpu.memory_space<vmem>>, vector<8x128xf32>
    tpu.vector_store %arg7[%c0_148, %c0_149], %227 {strides = array<i32>} : memref<8x128xf32, #tpu.memory_space<vmem>>, vector<8x128xf32>,
    %c5_150 = arith.constant 5 : index
    %c0_151 = arith.constant 0 : index
    %c0_152 = arith.constant 0 : index
    %231 = vector.load %arg5[%c5_150, %c0_151, %c0_152] : memref<16x8x128xf32, #tpu.memory_space<vmem>>, vector<1x8x128xf32>
    %232 = vector.shape_cast %231 : vector<1x8x128xf32> to vector<8x128xf32>
    %233 = vector.shape_cast %229 : vector<8x128xf32> to vector<1x8x128xf32>
    tpu.vector_store %arg5[%c5_150, %c0_151, %c0_152], %233 {strides = array<i32>} : memref<16x8x128xf32, #tpu.memory_space<vmem>>, vector<1x8x128xf32>,
    %c1_i32_153 = arith.constant 1 : i32
    %234 = tpu.dynamic_rotate %229 by %c1_i32_153 dim 1 : vector<8x128xf32>, i32 -> vector<8x128xf32>
    %235 = vector.broadcast %3 : vector<1x128xf32> to vector<8x128xf32>
    %236 = arith.mulf %234, %235 : vector<8x128xf32>
    %c16_154 = arith.constant 16 : index
    %c0_155 = arith.constant 0 : index
    %237 = vector.load %arg6[%c16_154, %c0_155] : memref<40x128xf32, #tpu.memory_space<vmem>>, vector<8x128xf32>
    tpu.vector_store %arg6[%c16_154, %c0_155], %236 {strides = array<i32>} : memref<40x128xf32, #tpu.memory_space<vmem>>, vector<8x128xf32>,
    %c24_156 = arith.constant 24 : index
    %c0_157 = arith.constant 0 : index
    %238 = vector.load %arg6[%c24_156, %c0_157] : memref<40x128xf32, #tpu.memory_space<vmem>>, vector<8x128xf32>
    tpu.vector_store %arg6[%c24_156, %c0_157], %229 {strides = array<i32>} : memref<40x128xf32, #tpu.memory_space<vmem>>, vector<8x128xf32>,
    %c127_i32_158 = arith.constant 127 : i32
    %239 = tpu.dynamic_rotate %229 by %c127_i32_158 dim 1 : vector<8x128xf32>, i32 -> vector<8x128xf32>
    %240 = vector.broadcast %4 : vector<1x128xf32> to vector<8x128xf32>
    %241 = arith.mulf %239, %240 : vector<8x128xf32>
    %c32_159 = arith.constant 32 : index
    %c0_160 = arith.constant 0 : index
    %242 = vector.load %arg6[%c32_159, %c0_160] : memref<40x128xf32, #tpu.memory_space<vmem>>, vector<8x128xf32>
    tpu.vector_store %arg6[%c32_159, %c0_160], %241 {strides = array<i32>} : memref<40x128xf32, #tpu.memory_space<vmem>>, vector<8x128xf32>,
    %c6 = arith.constant 6 : index
    %c0_161 = arith.constant 0 : index
    %c0_162 = arith.constant 0 : index
    %243 = vector.load %arg1[%c6, %c0_161, %c0_162] : memref<16x8x128xf32, #tpu.memory_space<vmem>>, vector<1x8x128xf32>
    %244 = vector.shape_cast %243 : vector<1x8x128xf32> to vector<8x128xf32>
    %c1_i32_163 = arith.constant 1 : i32
    %245 = tpu.dynamic_rotate %244 by %c1_i32_163 dim 1 : vector<8x128xf32>, i32 -> vector<8x128xf32>
    %246 = vector.broadcast %3 : vector<1x128xf32> to vector<8x128xf32>
    %247 = arith.mulf %245, %246 : vector<8x128xf32>
    %c0_164 = arith.constant 0 : index
    %c0_165 = arith.constant 0 : index
    %248 = vector.load %arg6[%c0_164, %c0_165] : memref<40x128xf32, #tpu.memory_space<vmem>>, vector<8x128xf32>
    tpu.vector_store %arg6[%c0_164, %c0_165], %247 {strides = array<i32>} : memref<40x128xf32, #tpu.memory_space<vmem>>, vector<8x128xf32>,
    %c8_166 = arith.constant 8 : index
    %c0_167 = arith.constant 0 : index
    %249 = vector.load %arg6[%c8_166, %c0_167] : memref<40x128xf32, #tpu.memory_space<vmem>>, vector<8x128xf32>
    tpu.vector_store %arg6[%c8_166, %c0_167], %244 {strides = array<i32>} : memref<40x128xf32, #tpu.memory_space<vmem>>, vector<8x128xf32>,
    %c0_168 = arith.constant 0 : index
    %c0_169 = arith.constant 0 : index
    %250 = vector.load %arg6[%c0_168, %c0_169] : memref<40x128xf32, #tpu.memory_space<vmem>>, vector<40x128xf32>
    %cst_170 = arith.constant dense<0.000000e+00> : vector<32x128xf32>
    %251 = tpu.matmul %0, %250, %cst_170 {dimension_numbers = #tpu.dot_dimension_numbers<[1], [0], [0], [1], [0, 0, 1, 1], [], []>} : vector<32x40xf32>, vector<40x128xf32>, vector<32x128xf32> -> vector<32x128xf32>
    %252 = vector.broadcast %1 : vector<32x1xf32> to vector<32x128xf32>
    %253 = arith.addf %251, %252 : vector<32x128xf32>
    %254 = arith.negf %253 : vector<32x128xf32>
    %255 = math.exp %254 : vector<32x128xf32>
    %cst_171 = arith.constant 1.000000e+00 : f32
    %256 = vector.broadcast %cst_171 : f32 to vector<32x128xf32>
    %257 = arith.addf %256, %255 : vector<32x128xf32>
    %258 = arith.divf %256, %257 : vector<32x128xf32>
    %259 = vector.extract_strided_slice %258 {offsets = [0, 0], sizes = [8, 128], strides = [1, 1]} : vector<32x128xf32> to vector<8x128xf32>
    %260 = vector.extract_strided_slice %258 {offsets = [8, 0], sizes = [8, 128], strides = [1, 1]} : vector<32x128xf32> to vector<8x128xf32>
    %261 = vector.extract_strided_slice %258 {offsets = [16, 0], sizes = [8, 128], strides = [1, 1]} : vector<32x128xf32> to vector<8x128xf32>
    %262 = vector.extract_strided_slice %258 {offsets = [24, 0], sizes = [8, 128], strides = [1, 1]} : vector<32x128xf32> to vector<8x128xf32>
    %c0_172 = arith.constant 0 : index
    %c0_173 = arith.constant 0 : index
    %263 = vector.load %arg7[%c0_172, %c0_173] : memref<8x128xf32, #tpu.memory_space<vmem>>, vector<8x128xf32>
    %264 = arith.mulf %261, %263 : vector<8x128xf32>
    %265 = arith.mulf %259, %260 : vector<8x128xf32>
    %266 = arith.addf %264, %265 : vector<8x128xf32>
    %267 = math.tanh %266 : vector<8x128xf32>
    %268 = arith.mulf %262, %267 : vector<8x128xf32>
    %c0_174 = arith.constant 0 : index
    %c0_175 = arith.constant 0 : index
    %269 = vector.load %arg7[%c0_174, %c0_175] : memref<8x128xf32, #tpu.memory_space<vmem>>, vector<8x128xf32>
    tpu.vector_store %arg7[%c0_174, %c0_175], %266 {strides = array<i32>} : memref<8x128xf32, #tpu.memory_space<vmem>>, vector<8x128xf32>,
    %c6_176 = arith.constant 6 : index
    %c0_177 = arith.constant 0 : index
    %c0_178 = arith.constant 0 : index
    %270 = vector.load %arg5[%c6_176, %c0_177, %c0_178] : memref<16x8x128xf32, #tpu.memory_space<vmem>>, vector<1x8x128xf32>
    %271 = vector.shape_cast %270 : vector<1x8x128xf32> to vector<8x128xf32>
    %272 = vector.shape_cast %268 : vector<8x128xf32> to vector<1x8x128xf32>
    tpu.vector_store %arg5[%c6_176, %c0_177, %c0_178], %272 {strides = array<i32>} : memref<16x8x128xf32, #tpu.memory_space<vmem>>, vector<1x8x128xf32>,
    %c1_i32_179 = arith.constant 1 : i32
    %273 = tpu.dynamic_rotate %268 by %c1_i32_179 dim 1 : vector<8x128xf32>, i32 -> vector<8x128xf32>
    %274 = vector.broadcast %3 : vector<1x128xf32> to vector<8x128xf32>
    %275 = arith.mulf %273, %274 : vector<8x128xf32>
    %c16_180 = arith.constant 16 : index
    %c0_181 = arith.constant 0 : index
    %276 = vector.load %arg6[%c16_180, %c0_181] : memref<40x128xf32, #tpu.memory_space<vmem>>, vector<8x128xf32>
    tpu.vector_store %arg6[%c16_180, %c0_181], %275 {strides = array<i32>} : memref<40x128xf32, #tpu.memory_space<vmem>>, vector<8x128xf32>,
    %c24_182 = arith.constant 24 : index
    %c0_183 = arith.constant 0 : index
    %277 = vector.load %arg6[%c24_182, %c0_183] : memref<40x128xf32, #tpu.memory_space<vmem>>, vector<8x128xf32>
    tpu.vector_store %arg6[%c24_182, %c0_183], %268 {strides = array<i32>} : memref<40x128xf32, #tpu.memory_space<vmem>>, vector<8x128xf32>,
    %c127_i32_184 = arith.constant 127 : i32
    %278 = tpu.dynamic_rotate %268 by %c127_i32_184 dim 1 : vector<8x128xf32>, i32 -> vector<8x128xf32>
    %279 = vector.broadcast %4 : vector<1x128xf32> to vector<8x128xf32>
    %280 = arith.mulf %278, %279 : vector<8x128xf32>
    %c32_185 = arith.constant 32 : index
    %c0_186 = arith.constant 0 : index
    %281 = vector.load %arg6[%c32_185, %c0_186] : memref<40x128xf32, #tpu.memory_space<vmem>>, vector<8x128xf32>
    tpu.vector_store %arg6[%c32_185, %c0_186], %280 {strides = array<i32>} : memref<40x128xf32, #tpu.memory_space<vmem>>, vector<8x128xf32>,
    %c7 = arith.constant 7 : index
    %c0_187 = arith.constant 0 : index
    %c0_188 = arith.constant 0 : index
    %282 = vector.load %arg1[%c7, %c0_187, %c0_188] : memref<16x8x128xf32, #tpu.memory_space<vmem>>, vector<1x8x128xf32>
    %283 = vector.shape_cast %282 : vector<1x8x128xf32> to vector<8x128xf32>
    %c1_i32_189 = arith.constant 1 : i32
    %284 = tpu.dynamic_rotate %283 by %c1_i32_189 dim 1 : vector<8x128xf32>, i32 -> vector<8x128xf32>
    %285 = vector.broadcast %3 : vector<1x128xf32> to vector<8x128xf32>
    %286 = arith.mulf %284, %285 : vector<8x128xf32>
    %c0_190 = arith.constant 0 : index
    %c0_191 = arith.constant 0 : index
    %287 = vector.load %arg6[%c0_190, %c0_191] : memref<40x128xf32, #tpu.memory_space<vmem>>, vector<8x128xf32>
    tpu.vector_store %arg6[%c0_190, %c0_191], %286 {strides = array<i32>} : memref<40x128xf32, #tpu.memory_space<vmem>>, vector<8x128xf32>,
    %c8_192 = arith.constant 8 : index
    %c0_193 = arith.constant 0 : index
    %288 = vector.load %arg6[%c8_192, %c0_193] : memref<40x128xf32, #tpu.memory_space<vmem>>, vector<8x128xf32>
    tpu.vector_store %arg6[%c8_192, %c0_193], %283 {strides = array<i32>} : memref<40x128xf32, #tpu.memory_space<vmem>>, vector<8x128xf32>,
    %c0_194 = arith.constant 0 : index
    %c0_195 = arith.constant 0 : index
    %289 = vector.load %arg6[%c0_194, %c0_195] : memref<40x128xf32, #tpu.memory_space<vmem>>, vector<40x128xf32>
    %cst_196 = arith.constant dense<0.000000e+00> : vector<32x128xf32>
    %290 = tpu.matmul %0, %289, %cst_196 {dimension_numbers = #tpu.dot_dimension_numbers<[1], [0], [0], [1], [0, 0, 1, 1], [], []>} : vector<32x40xf32>, vector<40x128xf32>, vector<32x128xf32> -> vector<32x128xf32>
    %291 = vector.broadcast %1 : vector<32x1xf32> to vector<32x128xf32>
    %292 = arith.addf %290, %291 : vector<32x128xf32>
    %293 = arith.negf %292 : vector<32x128xf32>
    %294 = math.exp %293 : vector<32x128xf32>
    %cst_197 = arith.constant 1.000000e+00 : f32
    %295 = vector.broadcast %cst_197 : f32 to vector<32x128xf32>
    %296 = arith.addf %295, %294 : vector<32x128xf32>
    %297 = arith.divf %295, %296 : vector<32x128xf32>
    %298 = vector.extract_strided_slice %297 {offsets = [0, 0], sizes = [8, 128], strides = [1, 1]} : vector<32x128xf32> to vector<8x128xf32>
    %299 = vector.extract_strided_slice %297 {offsets = [8, 0], sizes = [8, 128], strides = [1, 1]} : vector<32x128xf32> to vector<8x128xf32>
    %300 = vector.extract_strided_slice %297 {offsets = [16, 0], sizes = [8, 128], strides = [1, 1]} : vector<32x128xf32> to vector<8x128xf32>
    %301 = vector.extract_strided_slice %297 {offsets = [24, 0], sizes = [8, 128], strides = [1, 1]} : vector<32x128xf32> to vector<8x128xf32>
    %c0_198 = arith.constant 0 : index
    %c0_199 = arith.constant 0 : index
    %302 = vector.load %arg7[%c0_198, %c0_199] : memref<8x128xf32, #tpu.memory_space<vmem>>, vector<8x128xf32>
    %303 = arith.mulf %300, %302 : vector<8x128xf32>
    %304 = arith.mulf %298, %299 : vector<8x128xf32>
    %305 = arith.addf %303, %304 : vector<8x128xf32>
    %306 = math.tanh %305 : vector<8x128xf32>
    %307 = arith.mulf %301, %306 : vector<8x128xf32>
    %c0_200 = arith.constant 0 : index
    %c0_201 = arith.constant 0 : index
    %308 = vector.load %arg7[%c0_200, %c0_201] : memref<8x128xf32, #tpu.memory_space<vmem>>, vector<8x128xf32>
    tpu.vector_store %arg7[%c0_200, %c0_201], %305 {strides = array<i32>} : memref<8x128xf32, #tpu.memory_space<vmem>>, vector<8x128xf32>,
    %c7_202 = arith.constant 7 : index
    %c0_203 = arith.constant 0 : index
    %c0_204 = arith.constant 0 : index
    %309 = vector.load %arg5[%c7_202, %c0_203, %c0_204] : memref<16x8x128xf32, #tpu.memory_space<vmem>>, vector<1x8x128xf32>
    %310 = vector.shape_cast %309 : vector<1x8x128xf32> to vector<8x128xf32>
    %311 = vector.shape_cast %307 : vector<8x128xf32> to vector<1x8x128xf32>
    tpu.vector_store %arg5[%c7_202, %c0_203, %c0_204], %311 {strides = array<i32>} : memref<16x8x128xf32, #tpu.memory_space<vmem>>, vector<1x8x128xf32>,
    %c1_i32_205 = arith.constant 1 : i32
    %312 = tpu.dynamic_rotate %307 by %c1_i32_205 dim 1 : vector<8x128xf32>, i32 -> vector<8x128xf32>
    %313 = vector.broadcast %3 : vector<1x128xf32> to vector<8x128xf32>
    %314 = arith.mulf %312, %313 : vector<8x128xf32>
    %c16_206 = arith.constant 16 : index
    %c0_207 = arith.constant 0 : index
    %315 = vector.load %arg6[%c16_206, %c0_207] : memref<40x128xf32, #tpu.memory_space<vmem>>, vector<8x128xf32>
    tpu.vector_store %arg6[%c16_206, %c0_207], %314 {strides = array<i32>} : memref<40x128xf32, #tpu.memory_space<vmem>>, vector<8x128xf32>,
    %c24_208 = arith.constant 24 : index
    %c0_209 = arith.constant 0 : index
    %316 = vector.load %arg6[%c24_208, %c0_209] : memref<40x128xf32, #tpu.memory_space<vmem>>, vector<8x128xf32>
    tpu.vector_store %arg6[%c24_208, %c0_209], %307 {strides = array<i32>} : memref<40x128xf32, #tpu.memory_space<vmem>>, vector<8x128xf32>,
    %c127_i32_210 = arith.constant 127 : i32
    %317 = tpu.dynamic_rotate %307 by %c127_i32_210 dim 1 : vector<8x128xf32>, i32 -> vector<8x128xf32>
    %318 = vector.broadcast %4 : vector<1x128xf32> to vector<8x128xf32>
    %319 = arith.mulf %317, %318 : vector<8x128xf32>
    %c32_211 = arith.constant 32 : index
    %c0_212 = arith.constant 0 : index
    %320 = vector.load %arg6[%c32_211, %c0_212] : memref<40x128xf32, #tpu.memory_space<vmem>>, vector<8x128xf32>
    tpu.vector_store %arg6[%c32_211, %c0_212], %319 {strides = array<i32>} : memref<40x128xf32, #tpu.memory_space<vmem>>, vector<8x128xf32>,
    %c8_213 = arith.constant 8 : index
    %c0_214 = arith.constant 0 : index
    %c0_215 = arith.constant 0 : index
    %321 = vector.load %arg1[%c8_213, %c0_214, %c0_215] : memref<16x8x128xf32, #tpu.memory_space<vmem>>, vector<1x8x128xf32>
    %322 = vector.shape_cast %321 : vector<1x8x128xf32> to vector<8x128xf32>
    %c1_i32_216 = arith.constant 1 : i32
    %323 = tpu.dynamic_rotate %322 by %c1_i32_216 dim 1 : vector<8x128xf32>, i32 -> vector<8x128xf32>
    %324 = vector.broadcast %3 : vector<1x128xf32> to vector<8x128xf32>
    %325 = arith.mulf %323, %324 : vector<8x128xf32>
    %c0_217 = arith.constant 0 : index
    %c0_218 = arith.constant 0 : index
    %326 = vector.load %arg6[%c0_217, %c0_218] : memref<40x128xf32, #tpu.memory_space<vmem>>, vector<8x128xf32>
    tpu.vector_store %arg6[%c0_217, %c0_218], %325 {strides = array<i32>} : memref<40x128xf32, #tpu.memory_space<vmem>>, vector<8x128xf32>,
    %c8_219 = arith.constant 8 : index
    %c0_220 = arith.constant 0 : index
    %327 = vector.load %arg6[%c8_219, %c0_220] : memref<40x128xf32, #tpu.memory_space<vmem>>, vector<8x128xf32>
    tpu.vector_store %arg6[%c8_219, %c0_220], %322 {strides = array<i32>} : memref<40x128xf32, #tpu.memory_space<vmem>>, vector<8x128xf32>,
    %c0_221 = arith.constant 0 : index
    %c0_222 = arith.constant 0 : index
    %328 = vector.load %arg6[%c0_221, %c0_222] : memref<40x128xf32, #tpu.memory_space<vmem>>, vector<40x128xf32>
    %cst_223 = arith.constant dense<0.000000e+00> : vector<32x128xf32>
    %329 = tpu.matmul %0, %328, %cst_223 {dimension_numbers = #tpu.dot_dimension_numbers<[1], [0], [0], [1], [0, 0, 1, 1], [], []>} : vector<32x40xf32>, vector<40x128xf32>, vector<32x128xf32> -> vector<32x128xf32>
    %330 = vector.broadcast %1 : vector<32x1xf32> to vector<32x128xf32>
    %331 = arith.addf %329, %330 : vector<32x128xf32>
    %332 = arith.negf %331 : vector<32x128xf32>
    %333 = math.exp %332 : vector<32x128xf32>
    %cst_224 = arith.constant 1.000000e+00 : f32
    %334 = vector.broadcast %cst_224 : f32 to vector<32x128xf32>
    %335 = arith.addf %334, %333 : vector<32x128xf32>
    %336 = arith.divf %334, %335 : vector<32x128xf32>
    %337 = vector.extract_strided_slice %336 {offsets = [0, 0], sizes = [8, 128], strides = [1, 1]} : vector<32x128xf32> to vector<8x128xf32>
    %338 = vector.extract_strided_slice %336 {offsets = [8, 0], sizes = [8, 128], strides = [1, 1]} : vector<32x128xf32> to vector<8x128xf32>
    %339 = vector.extract_strided_slice %336 {offsets = [16, 0], sizes = [8, 128], strides = [1, 1]} : vector<32x128xf32> to vector<8x128xf32>
    %340 = vector.extract_strided_slice %336 {offsets = [24, 0], sizes = [8, 128], strides = [1, 1]} : vector<32x128xf32> to vector<8x128xf32>
    %c0_225 = arith.constant 0 : index
    %c0_226 = arith.constant 0 : index
    %341 = vector.load %arg7[%c0_225, %c0_226] : memref<8x128xf32, #tpu.memory_space<vmem>>, vector<8x128xf32>
    %342 = arith.mulf %339, %341 : vector<8x128xf32>
    %343 = arith.mulf %337, %338 : vector<8x128xf32>
    %344 = arith.addf %342, %343 : vector<8x128xf32>
    %345 = math.tanh %344 : vector<8x128xf32>
    %346 = arith.mulf %340, %345 : vector<8x128xf32>
    %c0_227 = arith.constant 0 : index
    %c0_228 = arith.constant 0 : index
    %347 = vector.load %arg7[%c0_227, %c0_228] : memref<8x128xf32, #tpu.memory_space<vmem>>, vector<8x128xf32>
    tpu.vector_store %arg7[%c0_227, %c0_228], %344 {strides = array<i32>} : memref<8x128xf32, #tpu.memory_space<vmem>>, vector<8x128xf32>,
    %c8_229 = arith.constant 8 : index
    %c0_230 = arith.constant 0 : index
    %c0_231 = arith.constant 0 : index
    %348 = vector.load %arg5[%c8_229, %c0_230, %c0_231] : memref<16x8x128xf32, #tpu.memory_space<vmem>>, vector<1x8x128xf32>
    %349 = vector.shape_cast %348 : vector<1x8x128xf32> to vector<8x128xf32>
    %350 = vector.shape_cast %346 : vector<8x128xf32> to vector<1x8x128xf32>
    tpu.vector_store %arg5[%c8_229, %c0_230, %c0_231], %350 {strides = array<i32>} : memref<16x8x128xf32, #tpu.memory_space<vmem>>, vector<1x8x128xf32>,
    %c1_i32_232 = arith.constant 1 : i32
    %351 = tpu.dynamic_rotate %346 by %c1_i32_232 dim 1 : vector<8x128xf32>, i32 -> vector<8x128xf32>
    %352 = vector.broadcast %3 : vector<1x128xf32> to vector<8x128xf32>
    %353 = arith.mulf %351, %352 : vector<8x128xf32>
    %c16_233 = arith.constant 16 : index
    %c0_234 = arith.constant 0 : index
    %354 = vector.load %arg6[%c16_233, %c0_234] : memref<40x128xf32, #tpu.memory_space<vmem>>, vector<8x128xf32>
    tpu.vector_store %arg6[%c16_233, %c0_234], %353 {strides = array<i32>} : memref<40x128xf32, #tpu.memory_space<vmem>>, vector<8x128xf32>,
    %c24_235 = arith.constant 24 : index
    %c0_236 = arith.constant 0 : index
    %355 = vector.load %arg6[%c24_235, %c0_236] : memref<40x128xf32, #tpu.memory_space<vmem>>, vector<8x128xf32>
    tpu.vector_store %arg6[%c24_235, %c0_236], %346 {strides = array<i32>} : memref<40x128xf32, #tpu.memory_space<vmem>>, vector<8x128xf32>,
    %c127_i32_237 = arith.constant 127 : i32
    %356 = tpu.dynamic_rotate %346 by %c127_i32_237 dim 1 : vector<8x128xf32>, i32 -> vector<8x128xf32>
    %357 = vector.broadcast %4 : vector<1x128xf32> to vector<8x128xf32>
    %358 = arith.mulf %356, %357 : vector<8x128xf32>
    %c32_238 = arith.constant 32 : index
    %c0_239 = arith.constant 0 : index
    %359 = vector.load %arg6[%c32_238, %c0_239] : memref<40x128xf32, #tpu.memory_space<vmem>>, vector<8x128xf32>
    tpu.vector_store %arg6[%c32_238, %c0_239], %358 {strides = array<i32>} : memref<40x128xf32, #tpu.memory_space<vmem>>, vector<8x128xf32>,
    %c9 = arith.constant 9 : index
    %c0_240 = arith.constant 0 : index
    %c0_241 = arith.constant 0 : index
    %360 = vector.load %arg1[%c9, %c0_240, %c0_241] : memref<16x8x128xf32, #tpu.memory_space<vmem>>, vector<1x8x128xf32>
    %361 = vector.shape_cast %360 : vector<1x8x128xf32> to vector<8x128xf32>
    %c1_i32_242 = arith.constant 1 : i32
    %362 = tpu.dynamic_rotate %361 by %c1_i32_242 dim 1 : vector<8x128xf32>, i32 -> vector<8x128xf32>
    %363 = vector.broadcast %3 : vector<1x128xf32> to vector<8x128xf32>
    %364 = arith.mulf %362, %363 : vector<8x128xf32>
    %c0_243 = arith.constant 0 : index
    %c0_244 = arith.constant 0 : index
    %365 = vector.load %arg6[%c0_243, %c0_244] : memref<40x128xf32, #tpu.memory_space<vmem>>, vector<8x128xf32>
    tpu.vector_store %arg6[%c0_243, %c0_244], %364 {strides = array<i32>} : memref<40x128xf32, #tpu.memory_space<vmem>>, vector<8x128xf32>,
    %c8_245 = arith.constant 8 : index
    %c0_246 = arith.constant 0 : index
    %366 = vector.load %arg6[%c8_245, %c0_246] : memref<40x128xf32, #tpu.memory_space<vmem>>, vector<8x128xf32>
    tpu.vector_store %arg6[%c8_245, %c0_246], %361 {strides = array<i32>} : memref<40x128xf32, #tpu.memory_space<vmem>>, vector<8x128xf32>,
    %c0_247 = arith.constant 0 : index
    %c0_248 = arith.constant 0 : index
    %367 = vector.load %arg6[%c0_247, %c0_248] : memref<40x128xf32, #tpu.memory_space<vmem>>, vector<40x128xf32>
    %cst_249 = arith.constant dense<0.000000e+00> : vector<32x128xf32>
    %368 = tpu.matmul %0, %367, %cst_249 {dimension_numbers = #tpu.dot_dimension_numbers<[1], [0], [0], [1], [0, 0, 1, 1], [], []>} : vector<32x40xf32>, vector<40x128xf32>, vector<32x128xf32> -> vector<32x128xf32>
    %369 = vector.broadcast %1 : vector<32x1xf32> to vector<32x128xf32>
    %370 = arith.addf %368, %369 : vector<32x128xf32>
    %371 = arith.negf %370 : vector<32x128xf32>
    %372 = math.exp %371 : vector<32x128xf32>
    %cst_250 = arith.constant 1.000000e+00 : f32
    %373 = vector.broadcast %cst_250 : f32 to vector<32x128xf32>
    %374 = arith.addf %373, %372 : vector<32x128xf32>
    %375 = arith.divf %373, %374 : vector<32x128xf32>
    %376 = vector.extract_strided_slice %375 {offsets = [0, 0], sizes = [8, 128], strides = [1, 1]} : vector<32x128xf32> to vector<8x128xf32>
    %377 = vector.extract_strided_slice %375 {offsets = [8, 0], sizes = [8, 128], strides = [1, 1]} : vector<32x128xf32> to vector<8x128xf32>
    %378 = vector.extract_strided_slice %375 {offsets = [16, 0], sizes = [8, 128], strides = [1, 1]} : vector<32x128xf32> to vector<8x128xf32>
    %379 = vector.extract_strided_slice %375 {offsets = [24, 0], sizes = [8, 128], strides = [1, 1]} : vector<32x128xf32> to vector<8x128xf32>
    %c0_251 = arith.constant 0 : index
    %c0_252 = arith.constant 0 : index
    %380 = vector.load %arg7[%c0_251, %c0_252] : memref<8x128xf32, #tpu.memory_space<vmem>>, vector<8x128xf32>
    %381 = arith.mulf %378, %380 : vector<8x128xf32>
    %382 = arith.mulf %376, %377 : vector<8x128xf32>
    %383 = arith.addf %381, %382 : vector<8x128xf32>
    %384 = math.tanh %383 : vector<8x128xf32>
    %385 = arith.mulf %379, %384 : vector<8x128xf32>
    %c0_253 = arith.constant 0 : index
    %c0_254 = arith.constant 0 : index
    %386 = vector.load %arg7[%c0_253, %c0_254] : memref<8x128xf32, #tpu.memory_space<vmem>>, vector<8x128xf32>
    tpu.vector_store %arg7[%c0_253, %c0_254], %383 {strides = array<i32>} : memref<8x128xf32, #tpu.memory_space<vmem>>, vector<8x128xf32>,
    %c9_255 = arith.constant 9 : index
    %c0_256 = arith.constant 0 : index
    %c0_257 = arith.constant 0 : index
    %387 = vector.load %arg5[%c9_255, %c0_256, %c0_257] : memref<16x8x128xf32, #tpu.memory_space<vmem>>, vector<1x8x128xf32>
    %388 = vector.shape_cast %387 : vector<1x8x128xf32> to vector<8x128xf32>
    %389 = vector.shape_cast %385 : vector<8x128xf32> to vector<1x8x128xf32>
    tpu.vector_store %arg5[%c9_255, %c0_256, %c0_257], %389 {strides = array<i32>} : memref<16x8x128xf32, #tpu.memory_space<vmem>>, vector<1x8x128xf32>,
    %c1_i32_258 = arith.constant 1 : i32
    %390 = tpu.dynamic_rotate %385 by %c1_i32_258 dim 1 : vector<8x128xf32>, i32 -> vector<8x128xf32>
    %391 = vector.broadcast %3 : vector<1x128xf32> to vector<8x128xf32>
    %392 = arith.mulf %390, %391 : vector<8x128xf32>
    %c16_259 = arith.constant 16 : index
    %c0_260 = arith.constant 0 : index
    %393 = vector.load %arg6[%c16_259, %c0_260] : memref<40x128xf32, #tpu.memory_space<vmem>>, vector<8x128xf32>
    tpu.vector_store %arg6[%c16_259, %c0_260], %392 {strides = array<i32>} : memref<40x128xf32, #tpu.memory_space<vmem>>, vector<8x128xf32>,
    %c24_261 = arith.constant 24 : index
    %c0_262 = arith.constant 0 : index
    %394 = vector.load %arg6[%c24_261, %c0_262] : memref<40x128xf32, #tpu.memory_space<vmem>>, vector<8x128xf32>
    tpu.vector_store %arg6[%c24_261, %c0_262], %385 {strides = array<i32>} : memref<40x128xf32, #tpu.memory_space<vmem>>, vector<8x128xf32>,
    %c127_i32_263 = arith.constant 127 : i32
    %395 = tpu.dynamic_rotate %385 by %c127_i32_263 dim 1 : vector<8x128xf32>, i32 -> vector<8x128xf32>
    %396 = vector.broadcast %4 : vector<1x128xf32> to vector<8x128xf32>
    %397 = arith.mulf %395, %396 : vector<8x128xf32>
    %c32_264 = arith.constant 32 : index
    %c0_265 = arith.constant 0 : index
    %398 = vector.load %arg6[%c32_264, %c0_265] : memref<40x128xf32, #tpu.memory_space<vmem>>, vector<8x128xf32>
    tpu.vector_store %arg6[%c32_264, %c0_265], %397 {strides = array<i32>} : memref<40x128xf32, #tpu.memory_space<vmem>>, vector<8x128xf32>,
    %c10 = arith.constant 10 : index
    %c0_266 = arith.constant 0 : index
    %c0_267 = arith.constant 0 : index
    %399 = vector.load %arg1[%c10, %c0_266, %c0_267] : memref<16x8x128xf32, #tpu.memory_space<vmem>>, vector<1x8x128xf32>
    %400 = vector.shape_cast %399 : vector<1x8x128xf32> to vector<8x128xf32>
    %c1_i32_268 = arith.constant 1 : i32
    %401 = tpu.dynamic_rotate %400 by %c1_i32_268 dim 1 : vector<8x128xf32>, i32 -> vector<8x128xf32>
    %402 = vector.broadcast %3 : vector<1x128xf32> to vector<8x128xf32>
    %403 = arith.mulf %401, %402 : vector<8x128xf32>
    %c0_269 = arith.constant 0 : index
    %c0_270 = arith.constant 0 : index
    %404 = vector.load %arg6[%c0_269, %c0_270] : memref<40x128xf32, #tpu.memory_space<vmem>>, vector<8x128xf32>
    tpu.vector_store %arg6[%c0_269, %c0_270], %403 {strides = array<i32>} : memref<40x128xf32, #tpu.memory_space<vmem>>, vector<8x128xf32>,
    %c8_271 = arith.constant 8 : index
    %c0_272 = arith.constant 0 : index
    %405 = vector.load %arg6[%c8_271, %c0_272] : memref<40x128xf32, #tpu.memory_space<vmem>>, vector<8x128xf32>
    tpu.vector_store %arg6[%c8_271, %c0_272], %400 {strides = array<i32>} : memref<40x128xf32, #tpu.memory_space<vmem>>, vector<8x128xf32>,
    %c0_273 = arith.constant 0 : index
    %c0_274 = arith.constant 0 : index
    %406 = vector.load %arg6[%c0_273, %c0_274] : memref<40x128xf32, #tpu.memory_space<vmem>>, vector<40x128xf32>
    %cst_275 = arith.constant dense<0.000000e+00> : vector<32x128xf32>
    %407 = tpu.matmul %0, %406, %cst_275 {dimension_numbers = #tpu.dot_dimension_numbers<[1], [0], [0], [1], [0, 0, 1, 1], [], []>} : vector<32x40xf32>, vector<40x128xf32>, vector<32x128xf32> -> vector<32x128xf32>
    %408 = vector.broadcast %1 : vector<32x1xf32> to vector<32x128xf32>
    %409 = arith.addf %407, %408 : vector<32x128xf32>
    %410 = arith.negf %409 : vector<32x128xf32>
    %411 = math.exp %410 : vector<32x128xf32>
    %cst_276 = arith.constant 1.000000e+00 : f32
    %412 = vector.broadcast %cst_276 : f32 to vector<32x128xf32>
    %413 = arith.addf %412, %411 : vector<32x128xf32>
    %414 = arith.divf %412, %413 : vector<32x128xf32>
    %415 = vector.extract_strided_slice %414 {offsets = [0, 0], sizes = [8, 128], strides = [1, 1]} : vector<32x128xf32> to vector<8x128xf32>
    %416 = vector.extract_strided_slice %414 {offsets = [8, 0], sizes = [8, 128], strides = [1, 1]} : vector<32x128xf32> to vector<8x128xf32>
    %417 = vector.extract_strided_slice %414 {offsets = [16, 0], sizes = [8, 128], strides = [1, 1]} : vector<32x128xf32> to vector<8x128xf32>
    %418 = vector.extract_strided_slice %414 {offsets = [24, 0], sizes = [8, 128], strides = [1, 1]} : vector<32x128xf32> to vector<8x128xf32>
    %c0_277 = arith.constant 0 : index
    %c0_278 = arith.constant 0 : index
    %419 = vector.load %arg7[%c0_277, %c0_278] : memref<8x128xf32, #tpu.memory_space<vmem>>, vector<8x128xf32>
    %420 = arith.mulf %417, %419 : vector<8x128xf32>
    %421 = arith.mulf %415, %416 : vector<8x128xf32>
    %422 = arith.addf %420, %421 : vector<8x128xf32>
    %423 = math.tanh %422 : vector<8x128xf32>
    %424 = arith.mulf %418, %423 : vector<8x128xf32>
    %c0_279 = arith.constant 0 : index
    %c0_280 = arith.constant 0 : index
    %425 = vector.load %arg7[%c0_279, %c0_280] : memref<8x128xf32, #tpu.memory_space<vmem>>, vector<8x128xf32>
    tpu.vector_store %arg7[%c0_279, %c0_280], %422 {strides = array<i32>} : memref<8x128xf32, #tpu.memory_space<vmem>>, vector<8x128xf32>,
    %c10_281 = arith.constant 10 : index
    %c0_282 = arith.constant 0 : index
    %c0_283 = arith.constant 0 : index
    %426 = vector.load %arg5[%c10_281, %c0_282, %c0_283] : memref<16x8x128xf32, #tpu.memory_space<vmem>>, vector<1x8x128xf32>
    %427 = vector.shape_cast %426 : vector<1x8x128xf32> to vector<8x128xf32>
    %428 = vector.shape_cast %424 : vector<8x128xf32> to vector<1x8x128xf32>
    tpu.vector_store %arg5[%c10_281, %c0_282, %c0_283], %428 {strides = array<i32>} : memref<16x8x128xf32, #tpu.memory_space<vmem>>, vector<1x8x128xf32>,
    %c1_i32_284 = arith.constant 1 : i32
    %429 = tpu.dynamic_rotate %424 by %c1_i32_284 dim 1 : vector<8x128xf32>, i32 -> vector<8x128xf32>
    %430 = vector.broadcast %3 : vector<1x128xf32> to vector<8x128xf32>
    %431 = arith.mulf %429, %430 : vector<8x128xf32>
    %c16_285 = arith.constant 16 : index
    %c0_286 = arith.constant 0 : index
    %432 = vector.load %arg6[%c16_285, %c0_286] : memref<40x128xf32, #tpu.memory_space<vmem>>, vector<8x128xf32>
    tpu.vector_store %arg6[%c16_285, %c0_286], %431 {strides = array<i32>} : memref<40x128xf32, #tpu.memory_space<vmem>>, vector<8x128xf32>,
    %c24_287 = arith.constant 24 : index
    %c0_288 = arith.constant 0 : index
    %433 = vector.load %arg6[%c24_287, %c0_288] : memref<40x128xf32, #tpu.memory_space<vmem>>, vector<8x128xf32>
    tpu.vector_store %arg6[%c24_287, %c0_288], %424 {strides = array<i32>} : memref<40x128xf32, #tpu.memory_space<vmem>>, vector<8x128xf32>,
    %c127_i32_289 = arith.constant 127 : i32
    %434 = tpu.dynamic_rotate %424 by %c127_i32_289 dim 1 : vector<8x128xf32>, i32 -> vector<8x128xf32>
    %435 = vector.broadcast %4 : vector<1x128xf32> to vector<8x128xf32>
    %436 = arith.mulf %434, %435 : vector<8x128xf32>
    %c32_290 = arith.constant 32 : index
    %c0_291 = arith.constant 0 : index
    %437 = vector.load %arg6[%c32_290, %c0_291] : memref<40x128xf32, #tpu.memory_space<vmem>>, vector<8x128xf32>
    tpu.vector_store %arg6[%c32_290, %c0_291], %436 {strides = array<i32>} : memref<40x128xf32, #tpu.memory_space<vmem>>, vector<8x128xf32>,
    %c11 = arith.constant 11 : index
    %c0_292 = arith.constant 0 : index
    %c0_293 = arith.constant 0 : index
    %438 = vector.load %arg1[%c11, %c0_292, %c0_293] : memref<16x8x128xf32, #tpu.memory_space<vmem>>, vector<1x8x128xf32>
    %439 = vector.shape_cast %438 : vector<1x8x128xf32> to vector<8x128xf32>
    %c1_i32_294 = arith.constant 1 : i32
    %440 = tpu.dynamic_rotate %439 by %c1_i32_294 dim 1 : vector<8x128xf32>, i32 -> vector<8x128xf32>
    %441 = vector.broadcast %3 : vector<1x128xf32> to vector<8x128xf32>
    %442 = arith.mulf %440, %441 : vector<8x128xf32>
    %c0_295 = arith.constant 0 : index
    %c0_296 = arith.constant 0 : index
    %443 = vector.load %arg6[%c0_295, %c0_296] : memref<40x128xf32, #tpu.memory_space<vmem>>, vector<8x128xf32>
    tpu.vector_store %arg6[%c0_295, %c0_296], %442 {strides = array<i32>} : memref<40x128xf32, #tpu.memory_space<vmem>>, vector<8x128xf32>,
    %c8_297 = arith.constant 8 : index
    %c0_298 = arith.constant 0 : index
    %444 = vector.load %arg6[%c8_297, %c0_298] : memref<40x128xf32, #tpu.memory_space<vmem>>, vector<8x128xf32>
    tpu.vector_store %arg6[%c8_297, %c0_298], %439 {strides = array<i32>} : memref<40x128xf32, #tpu.memory_space<vmem>>, vector<8x128xf32>,
    %c0_299 = arith.constant 0 : index
    %c0_300 = arith.constant 0 : index
    %445 = vector.load %arg6[%c0_299, %c0_300] : memref<40x128xf32, #tpu.memory_space<vmem>>, vector<40x128xf32>
    %cst_301 = arith.constant dense<0.000000e+00> : vector<32x128xf32>
    %446 = tpu.matmul %0, %445, %cst_301 {dimension_numbers = #tpu.dot_dimension_numbers<[1], [0], [0], [1], [0, 0, 1, 1], [], []>} : vector<32x40xf32>, vector<40x128xf32>, vector<32x128xf32> -> vector<32x128xf32>
    %447 = vector.broadcast %1 : vector<32x1xf32> to vector<32x128xf32>
    %448 = arith.addf %446, %447 : vector<32x128xf32>
    %449 = arith.negf %448 : vector<32x128xf32>
    %450 = math.exp %449 : vector<32x128xf32>
    %cst_302 = arith.constant 1.000000e+00 : f32
    %451 = vector.broadcast %cst_302 : f32 to vector<32x128xf32>
    %452 = arith.addf %451, %450 : vector<32x128xf32>
    %453 = arith.divf %451, %452 : vector<32x128xf32>
    %454 = vector.extract_strided_slice %453 {offsets = [0, 0], sizes = [8, 128], strides = [1, 1]} : vector<32x128xf32> to vector<8x128xf32>
    %455 = vector.extract_strided_slice %453 {offsets = [8, 0], sizes = [8, 128], strides = [1, 1]} : vector<32x128xf32> to vector<8x128xf32>
    %456 = vector.extract_strided_slice %453 {offsets = [16, 0], sizes = [8, 128], strides = [1, 1]} : vector<32x128xf32> to vector<8x128xf32>
    %457 = vector.extract_strided_slice %453 {offsets = [24, 0], sizes = [8, 128], strides = [1, 1]} : vector<32x128xf32> to vector<8x128xf32>
    %c0_303 = arith.constant 0 : index
    %c0_304 = arith.constant 0 : index
    %458 = vector.load %arg7[%c0_303, %c0_304] : memref<8x128xf32, #tpu.memory_space<vmem>>, vector<8x128xf32>
    %459 = arith.mulf %456, %458 : vector<8x128xf32>
    %460 = arith.mulf %454, %455 : vector<8x128xf32>
    %461 = arith.addf %459, %460 : vector<8x128xf32>
    %462 = math.tanh %461 : vector<8x128xf32>
    %463 = arith.mulf %457, %462 : vector<8x128xf32>
    %c0_305 = arith.constant 0 : index
    %c0_306 = arith.constant 0 : index
    %464 = vector.load %arg7[%c0_305, %c0_306] : memref<8x128xf32, #tpu.memory_space<vmem>>, vector<8x128xf32>
    tpu.vector_store %arg7[%c0_305, %c0_306], %461 {strides = array<i32>} : memref<8x128xf32, #tpu.memory_space<vmem>>, vector<8x128xf32>,
    %c11_307 = arith.constant 11 : index
    %c0_308 = arith.constant 0 : index
    %c0_309 = arith.constant 0 : index
    %465 = vector.load %arg5[%c11_307, %c0_308, %c0_309] : memref<16x8x128xf32, #tpu.memory_space<vmem>>, vector<1x8x128xf32>
    %466 = vector.shape_cast %465 : vector<1x8x128xf32> to vector<8x128xf32>
    %467 = vector.shape_cast %463 : vector<8x128xf32> to vector<1x8x128xf32>
    tpu.vector_store %arg5[%c11_307, %c0_308, %c0_309], %467 {strides = array<i32>} : memref<16x8x128xf32, #tpu.memory_space<vmem>>, vector<1x8x128xf32>,
    %c1_i32_310 = arith.constant 1 : i32
    %468 = tpu.dynamic_rotate %463 by %c1_i32_310 dim 1 : vector<8x128xf32>, i32 -> vector<8x128xf32>
    %469 = vector.broadcast %3 : vector<1x128xf32> to vector<8x128xf32>
    %470 = arith.mulf %468, %469 : vector<8x128xf32>
    %c16_311 = arith.constant 16 : index
    %c0_312 = arith.constant 0 : index
    %471 = vector.load %arg6[%c16_311, %c0_312] : memref<40x128xf32, #tpu.memory_space<vmem>>, vector<8x128xf32>
    tpu.vector_store %arg6[%c16_311, %c0_312], %470 {strides = array<i32>} : memref<40x128xf32, #tpu.memory_space<vmem>>, vector<8x128xf32>,
    %c24_313 = arith.constant 24 : index
    %c0_314 = arith.constant 0 : index
    %472 = vector.load %arg6[%c24_313, %c0_314] : memref<40x128xf32, #tpu.memory_space<vmem>>, vector<8x128xf32>
    tpu.vector_store %arg6[%c24_313, %c0_314], %463 {strides = array<i32>} : memref<40x128xf32, #tpu.memory_space<vmem>>, vector<8x128xf32>,
    %c127_i32_315 = arith.constant 127 : i32
    %473 = tpu.dynamic_rotate %463 by %c127_i32_315 dim 1 : vector<8x128xf32>, i32 -> vector<8x128xf32>
    %474 = vector.broadcast %4 : vector<1x128xf32> to vector<8x128xf32>
    %475 = arith.mulf %473, %474 : vector<8x128xf32>
    %c32_316 = arith.constant 32 : index
    %c0_317 = arith.constant 0 : index
    %476 = vector.load %arg6[%c32_316, %c0_317] : memref<40x128xf32, #tpu.memory_space<vmem>>, vector<8x128xf32>
    tpu.vector_store %arg6[%c32_316, %c0_317], %475 {strides = array<i32>} : memref<40x128xf32, #tpu.memory_space<vmem>>, vector<8x128xf32>,
    %c12 = arith.constant 12 : index
    %c0_318 = arith.constant 0 : index
    %c0_319 = arith.constant 0 : index
    %477 = vector.load %arg1[%c12, %c0_318, %c0_319] : memref<16x8x128xf32, #tpu.memory_space<vmem>>, vector<1x8x128xf32>
    %478 = vector.shape_cast %477 : vector<1x8x128xf32> to vector<8x128xf32>
    %c1_i32_320 = arith.constant 1 : i32
    %479 = tpu.dynamic_rotate %478 by %c1_i32_320 dim 1 : vector<8x128xf32>, i32 -> vector<8x128xf32>
    %480 = vector.broadcast %3 : vector<1x128xf32> to vector<8x128xf32>
    %481 = arith.mulf %479, %480 : vector<8x128xf32>
    %c0_321 = arith.constant 0 : index
    %c0_322 = arith.constant 0 : index
    %482 = vector.load %arg6[%c0_321, %c0_322] : memref<40x128xf32, #tpu.memory_space<vmem>>, vector<8x128xf32>
    tpu.vector_store %arg6[%c0_321, %c0_322], %481 {strides = array<i32>} : memref<40x128xf32, #tpu.memory_space<vmem>>, vector<8x128xf32>,
    %c8_323 = arith.constant 8 : index
    %c0_324 = arith.constant 0 : index
    %483 = vector.load %arg6[%c8_323, %c0_324] : memref<40x128xf32, #tpu.memory_space<vmem>>, vector<8x128xf32>
    tpu.vector_store %arg6[%c8_323, %c0_324], %478 {strides = array<i32>} : memref<40x128xf32, #tpu.memory_space<vmem>>, vector<8x128xf32>,
    %c0_325 = arith.constant 0 : index
    %c0_326 = arith.constant 0 : index
    %484 = vector.load %arg6[%c0_325, %c0_326] : memref<40x128xf32, #tpu.memory_space<vmem>>, vector<40x128xf32>
    %cst_327 = arith.constant dense<0.000000e+00> : vector<32x128xf32>
    %485 = tpu.matmul %0, %484, %cst_327 {dimension_numbers = #tpu.dot_dimension_numbers<[1], [0], [0], [1], [0, 0, 1, 1], [], []>} : vector<32x40xf32>, vector<40x128xf32>, vector<32x128xf32> -> vector<32x128xf32>
    %486 = vector.broadcast %1 : vector<32x1xf32> to vector<32x128xf32>
    %487 = arith.addf %485, %486 : vector<32x128xf32>
    %488 = arith.negf %487 : vector<32x128xf32>
    %489 = math.exp %488 : vector<32x128xf32>
    %cst_328 = arith.constant 1.000000e+00 : f32
    %490 = vector.broadcast %cst_328 : f32 to vector<32x128xf32>
    %491 = arith.addf %490, %489 : vector<32x128xf32>
    %492 = arith.divf %490, %491 : vector<32x128xf32>
    %493 = vector.extract_strided_slice %492 {offsets = [0, 0], sizes = [8, 128], strides = [1, 1]} : vector<32x128xf32> to vector<8x128xf32>
    %494 = vector.extract_strided_slice %492 {offsets = [8, 0], sizes = [8, 128], strides = [1, 1]} : vector<32x128xf32> to vector<8x128xf32>
    %495 = vector.extract_strided_slice %492 {offsets = [16, 0], sizes = [8, 128], strides = [1, 1]} : vector<32x128xf32> to vector<8x128xf32>
    %496 = vector.extract_strided_slice %492 {offsets = [24, 0], sizes = [8, 128], strides = [1, 1]} : vector<32x128xf32> to vector<8x128xf32>
    %c0_329 = arith.constant 0 : index
    %c0_330 = arith.constant 0 : index
    %497 = vector.load %arg7[%c0_329, %c0_330] : memref<8x128xf32, #tpu.memory_space<vmem>>, vector<8x128xf32>
    %498 = arith.mulf %495, %497 : vector<8x128xf32>
    %499 = arith.mulf %493, %494 : vector<8x128xf32>
    %500 = arith.addf %498, %499 : vector<8x128xf32>
    %501 = math.tanh %500 : vector<8x128xf32>
    %502 = arith.mulf %496, %501 : vector<8x128xf32>
    %c0_331 = arith.constant 0 : index
    %c0_332 = arith.constant 0 : index
    %503 = vector.load %arg7[%c0_331, %c0_332] : memref<8x128xf32, #tpu.memory_space<vmem>>, vector<8x128xf32>
    tpu.vector_store %arg7[%c0_331, %c0_332], %500 {strides = array<i32>} : memref<8x128xf32, #tpu.memory_space<vmem>>, vector<8x128xf32>,
    %c12_333 = arith.constant 12 : index
    %c0_334 = arith.constant 0 : index
    %c0_335 = arith.constant 0 : index
    %504 = vector.load %arg5[%c12_333, %c0_334, %c0_335] : memref<16x8x128xf32, #tpu.memory_space<vmem>>, vector<1x8x128xf32>
    %505 = vector.shape_cast %504 : vector<1x8x128xf32> to vector<8x128xf32>
    %506 = vector.shape_cast %502 : vector<8x128xf32> to vector<1x8x128xf32>
    tpu.vector_store %arg5[%c12_333, %c0_334, %c0_335], %506 {strides = array<i32>} : memref<16x8x128xf32, #tpu.memory_space<vmem>>, vector<1x8x128xf32>,
    %c1_i32_336 = arith.constant 1 : i32
    %507 = tpu.dynamic_rotate %502 by %c1_i32_336 dim 1 : vector<8x128xf32>, i32 -> vector<8x128xf32>
    %508 = vector.broadcast %3 : vector<1x128xf32> to vector<8x128xf32>
    %509 = arith.mulf %507, %508 : vector<8x128xf32>
    %c16_337 = arith.constant 16 : index
    %c0_338 = arith.constant 0 : index
    %510 = vector.load %arg6[%c16_337, %c0_338] : memref<40x128xf32, #tpu.memory_space<vmem>>, vector<8x128xf32>
    tpu.vector_store %arg6[%c16_337, %c0_338], %509 {strides = array<i32>} : memref<40x128xf32, #tpu.memory_space<vmem>>, vector<8x128xf32>,
    %c24_339 = arith.constant 24 : index
    %c0_340 = arith.constant 0 : index
    %511 = vector.load %arg6[%c24_339, %c0_340] : memref<40x128xf32, #tpu.memory_space<vmem>>, vector<8x128xf32>
    tpu.vector_store %arg6[%c24_339, %c0_340], %502 {strides = array<i32>} : memref<40x128xf32, #tpu.memory_space<vmem>>, vector<8x128xf32>,
    %c127_i32_341 = arith.constant 127 : i32
    %512 = tpu.dynamic_rotate %502 by %c127_i32_341 dim 1 : vector<8x128xf32>, i32 -> vector<8x128xf32>
    %513 = vector.broadcast %4 : vector<1x128xf32> to vector<8x128xf32>
    %514 = arith.mulf %512, %513 : vector<8x128xf32>
    %c32_342 = arith.constant 32 : index
    %c0_343 = arith.constant 0 : index
    %515 = vector.load %arg6[%c32_342, %c0_343] : memref<40x128xf32, #tpu.memory_space<vmem>>, vector<8x128xf32>
    tpu.vector_store %arg6[%c32_342, %c0_343], %514 {strides = array<i32>} : memref<40x128xf32, #tpu.memory_space<vmem>>, vector<8x128xf32>,
    %c13 = arith.constant 13 : index
    %c0_344 = arith.constant 0 : index
    %c0_345 = arith.constant 0 : index
    %516 = vector.load %arg1[%c13, %c0_344, %c0_345] : memref<16x8x128xf32, #tpu.memory_space<vmem>>, vector<1x8x128xf32>
    %517 = vector.shape_cast %516 : vector<1x8x128xf32> to vector<8x128xf32>
    %c1_i32_346 = arith.constant 1 : i32
    %518 = tpu.dynamic_rotate %517 by %c1_i32_346 dim 1 : vector<8x128xf32>, i32 -> vector<8x128xf32>
    %519 = vector.broadcast %3 : vector<1x128xf32> to vector<8x128xf32>
    %520 = arith.mulf %518, %519 : vector<8x128xf32>
    %c0_347 = arith.constant 0 : index
    %c0_348 = arith.constant 0 : index
    %521 = vector.load %arg6[%c0_347, %c0_348] : memref<40x128xf32, #tpu.memory_space<vmem>>, vector<8x128xf32>
    tpu.vector_store %arg6[%c0_347, %c0_348], %520 {strides = array<i32>} : memref<40x128xf32, #tpu.memory_space<vmem>>, vector<8x128xf32>,
    %c8_349 = arith.constant 8 : index
    %c0_350 = arith.constant 0 : index
    %522 = vector.load %arg6[%c8_349, %c0_350] : memref<40x128xf32, #tpu.memory_space<vmem>>, vector<8x128xf32>
    tpu.vector_store %arg6[%c8_349, %c0_350], %517 {strides = array<i32>} : memref<40x128xf32, #tpu.memory_space<vmem>>, vector<8x128xf32>,
    %c0_351 = arith.constant 0 : index
    %c0_352 = arith.constant 0 : index
    %523 = vector.load %arg6[%c0_351, %c0_352] : memref<40x128xf32, #tpu.memory_space<vmem>>, vector<40x128xf32>
    %cst_353 = arith.constant dense<0.000000e+00> : vector<32x128xf32>
    %524 = tpu.matmul %0, %523, %cst_353 {dimension_numbers = #tpu.dot_dimension_numbers<[1], [0], [0], [1], [0, 0, 1, 1], [], []>} : vector<32x40xf32>, vector<40x128xf32>, vector<32x128xf32> -> vector<32x128xf32>
    %525 = vector.broadcast %1 : vector<32x1xf32> to vector<32x128xf32>
    %526 = arith.addf %524, %525 : vector<32x128xf32>
    %527 = arith.negf %526 : vector<32x128xf32>
    %528 = math.exp %527 : vector<32x128xf32>
    %cst_354 = arith.constant 1.000000e+00 : f32
    %529 = vector.broadcast %cst_354 : f32 to vector<32x128xf32>
    %530 = arith.addf %529, %528 : vector<32x128xf32>
    %531 = arith.divf %529, %530 : vector<32x128xf32>
    %532 = vector.extract_strided_slice %531 {offsets = [0, 0], sizes = [8, 128], strides = [1, 1]} : vector<32x128xf32> to vector<8x128xf32>
    %533 = vector.extract_strided_slice %531 {offsets = [8, 0], sizes = [8, 128], strides = [1, 1]} : vector<32x128xf32> to vector<8x128xf32>
    %534 = vector.extract_strided_slice %531 {offsets = [16, 0], sizes = [8, 128], strides = [1, 1]} : vector<32x128xf32> to vector<8x128xf32>
    %535 = vector.extract_strided_slice %531 {offsets = [24, 0], sizes = [8, 128], strides = [1, 1]} : vector<32x128xf32> to vector<8x128xf32>
    %c0_355 = arith.constant 0 : index
    %c0_356 = arith.constant 0 : index
    %536 = vector.load %arg7[%c0_355, %c0_356] : memref<8x128xf32, #tpu.memory_space<vmem>>, vector<8x128xf32>
    %537 = arith.mulf %534, %536 : vector<8x128xf32>
    %538 = arith.mulf %532, %533 : vector<8x128xf32>
    %539 = arith.addf %537, %538 : vector<8x128xf32>
    %540 = math.tanh %539 : vector<8x128xf32>
    %541 = arith.mulf %535, %540 : vector<8x128xf32>
    %c0_357 = arith.constant 0 : index
    %c0_358 = arith.constant 0 : index
    %542 = vector.load %arg7[%c0_357, %c0_358] : memref<8x128xf32, #tpu.memory_space<vmem>>, vector<8x128xf32>
    tpu.vector_store %arg7[%c0_357, %c0_358], %539 {strides = array<i32>} : memref<8x128xf32, #tpu.memory_space<vmem>>, vector<8x128xf32>,
    %c13_359 = arith.constant 13 : index
    %c0_360 = arith.constant 0 : index
    %c0_361 = arith.constant 0 : index
    %543 = vector.load %arg5[%c13_359, %c0_360, %c0_361] : memref<16x8x128xf32, #tpu.memory_space<vmem>>, vector<1x8x128xf32>
    %544 = vector.shape_cast %543 : vector<1x8x128xf32> to vector<8x128xf32>
    %545 = vector.shape_cast %541 : vector<8x128xf32> to vector<1x8x128xf32>
    tpu.vector_store %arg5[%c13_359, %c0_360, %c0_361], %545 {strides = array<i32>} : memref<16x8x128xf32, #tpu.memory_space<vmem>>, vector<1x8x128xf32>,
    %c1_i32_362 = arith.constant 1 : i32
    %546 = tpu.dynamic_rotate %541 by %c1_i32_362 dim 1 : vector<8x128xf32>, i32 -> vector<8x128xf32>
    %547 = vector.broadcast %3 : vector<1x128xf32> to vector<8x128xf32>
    %548 = arith.mulf %546, %547 : vector<8x128xf32>
    %c16_363 = arith.constant 16 : index
    %c0_364 = arith.constant 0 : index
    %549 = vector.load %arg6[%c16_363, %c0_364] : memref<40x128xf32, #tpu.memory_space<vmem>>, vector<8x128xf32>
    tpu.vector_store %arg6[%c16_363, %c0_364], %548 {strides = array<i32>} : memref<40x128xf32, #tpu.memory_space<vmem>>, vector<8x128xf32>,
    %c24_365 = arith.constant 24 : index
    %c0_366 = arith.constant 0 : index
    %550 = vector.load %arg6[%c24_365, %c0_366] : memref<40x128xf32, #tpu.memory_space<vmem>>, vector<8x128xf32>
    tpu.vector_store %arg6[%c24_365, %c0_366], %541 {strides = array<i32>} : memref<40x128xf32, #tpu.memory_space<vmem>>, vector<8x128xf32>,
    %c127_i32_367 = arith.constant 127 : i32
    %551 = tpu.dynamic_rotate %541 by %c127_i32_367 dim 1 : vector<8x128xf32>, i32 -> vector<8x128xf32>
    %552 = vector.broadcast %4 : vector<1x128xf32> to vector<8x128xf32>
    %553 = arith.mulf %551, %552 : vector<8x128xf32>
    %c32_368 = arith.constant 32 : index
    %c0_369 = arith.constant 0 : index
    %554 = vector.load %arg6[%c32_368, %c0_369] : memref<40x128xf32, #tpu.memory_space<vmem>>, vector<8x128xf32>
    tpu.vector_store %arg6[%c32_368, %c0_369], %553 {strides = array<i32>} : memref<40x128xf32, #tpu.memory_space<vmem>>, vector<8x128xf32>,
    %c14 = arith.constant 14 : index
    %c0_370 = arith.constant 0 : index
    %c0_371 = arith.constant 0 : index
    %555 = vector.load %arg1[%c14, %c0_370, %c0_371] : memref<16x8x128xf32, #tpu.memory_space<vmem>>, vector<1x8x128xf32>
    %556 = vector.shape_cast %555 : vector<1x8x128xf32> to vector<8x128xf32>
    %c1_i32_372 = arith.constant 1 : i32
    %557 = tpu.dynamic_rotate %556 by %c1_i32_372 dim 1 : vector<8x128xf32>, i32 -> vector<8x128xf32>
    %558 = vector.broadcast %3 : vector<1x128xf32> to vector<8x128xf32>
    %559 = arith.mulf %557, %558 : vector<8x128xf32>
    %c0_373 = arith.constant 0 : index
    %c0_374 = arith.constant 0 : index
    %560 = vector.load %arg6[%c0_373, %c0_374] : memref<40x128xf32, #tpu.memory_space<vmem>>, vector<8x128xf32>
    tpu.vector_store %arg6[%c0_373, %c0_374], %559 {strides = array<i32>} : memref<40x128xf32, #tpu.memory_space<vmem>>, vector<8x128xf32>,
    %c8_375 = arith.constant 8 : index
    %c0_376 = arith.constant 0 : index
    %561 = vector.load %arg6[%c8_375, %c0_376] : memref<40x128xf32, #tpu.memory_space<vmem>>, vector<8x128xf32>
    tpu.vector_store %arg6[%c8_375, %c0_376], %556 {strides = array<i32>} : memref<40x128xf32, #tpu.memory_space<vmem>>, vector<8x128xf32>,
    %c0_377 = arith.constant 0 : index
    %c0_378 = arith.constant 0 : index
    %562 = vector.load %arg6[%c0_377, %c0_378] : memref<40x128xf32, #tpu.memory_space<vmem>>, vector<40x128xf32>
    %cst_379 = arith.constant dense<0.000000e+00> : vector<32x128xf32>
    %563 = tpu.matmul %0, %562, %cst_379 {dimension_numbers = #tpu.dot_dimension_numbers<[1], [0], [0], [1], [0, 0, 1, 1], [], []>} : vector<32x40xf32>, vector<40x128xf32>, vector<32x128xf32> -> vector<32x128xf32>
    %564 = vector.broadcast %1 : vector<32x1xf32> to vector<32x128xf32>
    %565 = arith.addf %563, %564 : vector<32x128xf32>
    %566 = arith.negf %565 : vector<32x128xf32>
    %567 = math.exp %566 : vector<32x128xf32>
    %cst_380 = arith.constant 1.000000e+00 : f32
    %568 = vector.broadcast %cst_380 : f32 to vector<32x128xf32>
    %569 = arith.addf %568, %567 : vector<32x128xf32>
    %570 = arith.divf %568, %569 : vector<32x128xf32>
    %571 = vector.extract_strided_slice %570 {offsets = [0, 0], sizes = [8, 128], strides = [1, 1]} : vector<32x128xf32> to vector<8x128xf32>
    %572 = vector.extract_strided_slice %570 {offsets = [8, 0], sizes = [8, 128], strides = [1, 1]} : vector<32x128xf32> to vector<8x128xf32>
    %573 = vector.extract_strided_slice %570 {offsets = [16, 0], sizes = [8, 128], strides = [1, 1]} : vector<32x128xf32> to vector<8x128xf32>
    %574 = vector.extract_strided_slice %570 {offsets = [24, 0], sizes = [8, 128], strides = [1, 1]} : vector<32x128xf32> to vector<8x128xf32>
    %c0_381 = arith.constant 0 : index
    %c0_382 = arith.constant 0 : index
    %575 = vector.load %arg7[%c0_381, %c0_382] : memref<8x128xf32, #tpu.memory_space<vmem>>, vector<8x128xf32>
    %576 = arith.mulf %573, %575 : vector<8x128xf32>
    %577 = arith.mulf %571, %572 : vector<8x128xf32>
    %578 = arith.addf %576, %577 : vector<8x128xf32>
    %579 = math.tanh %578 : vector<8x128xf32>
    %580 = arith.mulf %574, %579 : vector<8x128xf32>
    %c0_383 = arith.constant 0 : index
    %c0_384 = arith.constant 0 : index
    %581 = vector.load %arg7[%c0_383, %c0_384] : memref<8x128xf32, #tpu.memory_space<vmem>>, vector<8x128xf32>
    tpu.vector_store %arg7[%c0_383, %c0_384], %578 {strides = array<i32>} : memref<8x128xf32, #tpu.memory_space<vmem>>, vector<8x128xf32>,
    %c14_385 = arith.constant 14 : index
    %c0_386 = arith.constant 0 : index
    %c0_387 = arith.constant 0 : index
    %582 = vector.load %arg5[%c14_385, %c0_386, %c0_387] : memref<16x8x128xf32, #tpu.memory_space<vmem>>, vector<1x8x128xf32>
    %583 = vector.shape_cast %582 : vector<1x8x128xf32> to vector<8x128xf32>
    %584 = vector.shape_cast %580 : vector<8x128xf32> to vector<1x8x128xf32>
    tpu.vector_store %arg5[%c14_385, %c0_386, %c0_387], %584 {strides = array<i32>} : memref<16x8x128xf32, #tpu.memory_space<vmem>>, vector<1x8x128xf32>,
    %c1_i32_388 = arith.constant 1 : i32
    %585 = tpu.dynamic_rotate %580 by %c1_i32_388 dim 1 : vector<8x128xf32>, i32 -> vector<8x128xf32>
    %586 = vector.broadcast %3 : vector<1x128xf32> to vector<8x128xf32>
    %587 = arith.mulf %585, %586 : vector<8x128xf32>
    %c16_389 = arith.constant 16 : index
    %c0_390 = arith.constant 0 : index
    %588 = vector.load %arg6[%c16_389, %c0_390] : memref<40x128xf32, #tpu.memory_space<vmem>>, vector<8x128xf32>
    tpu.vector_store %arg6[%c16_389, %c0_390], %587 {strides = array<i32>} : memref<40x128xf32, #tpu.memory_space<vmem>>, vector<8x128xf32>,
    %c24_391 = arith.constant 24 : index
    %c0_392 = arith.constant 0 : index
    %589 = vector.load %arg6[%c24_391, %c0_392] : memref<40x128xf32, #tpu.memory_space<vmem>>, vector<8x128xf32>
    tpu.vector_store %arg6[%c24_391, %c0_392], %580 {strides = array<i32>} : memref<40x128xf32, #tpu.memory_space<vmem>>, vector<8x128xf32>,
    %c127_i32_393 = arith.constant 127 : i32
    %590 = tpu.dynamic_rotate %580 by %c127_i32_393 dim 1 : vector<8x128xf32>, i32 -> vector<8x128xf32>
    %591 = vector.broadcast %4 : vector<1x128xf32> to vector<8x128xf32>
    %592 = arith.mulf %590, %591 : vector<8x128xf32>
    %c32_394 = arith.constant 32 : index
    %c0_395 = arith.constant 0 : index
    %593 = vector.load %arg6[%c32_394, %c0_395] : memref<40x128xf32, #tpu.memory_space<vmem>>, vector<8x128xf32>
    tpu.vector_store %arg6[%c32_394, %c0_395], %592 {strides = array<i32>} : memref<40x128xf32, #tpu.memory_space<vmem>>, vector<8x128xf32>,
    %c15 = arith.constant 15 : index
    %c0_396 = arith.constant 0 : index
    %c0_397 = arith.constant 0 : index
    %594 = vector.load %arg1[%c15, %c0_396, %c0_397] : memref<16x8x128xf32, #tpu.memory_space<vmem>>, vector<1x8x128xf32>
    %595 = vector.shape_cast %594 : vector<1x8x128xf32> to vector<8x128xf32>
    %c1_i32_398 = arith.constant 1 : i32
    %596 = tpu.dynamic_rotate %595 by %c1_i32_398 dim 1 : vector<8x128xf32>, i32 -> vector<8x128xf32>
    %597 = vector.broadcast %3 : vector<1x128xf32> to vector<8x128xf32>
    %598 = arith.mulf %596, %597 : vector<8x128xf32>
    %c0_399 = arith.constant 0 : index
    %c0_400 = arith.constant 0 : index
    %599 = vector.load %arg6[%c0_399, %c0_400] : memref<40x128xf32, #tpu.memory_space<vmem>>, vector<8x128xf32>
    tpu.vector_store %arg6[%c0_399, %c0_400], %598 {strides = array<i32>} : memref<40x128xf32, #tpu.memory_space<vmem>>, vector<8x128xf32>,
    %c8_401 = arith.constant 8 : index
    %c0_402 = arith.constant 0 : index
    %600 = vector.load %arg6[%c8_401, %c0_402] : memref<40x128xf32, #tpu.memory_space<vmem>>, vector<8x128xf32>
    tpu.vector_store %arg6[%c8_401, %c0_402], %595 {strides = array<i32>} : memref<40x128xf32, #tpu.memory_space<vmem>>, vector<8x128xf32>,
    %c0_403 = arith.constant 0 : index
    %c0_404 = arith.constant 0 : index
    %601 = vector.load %arg6[%c0_403, %c0_404] : memref<40x128xf32, #tpu.memory_space<vmem>>, vector<40x128xf32>
    %cst_405 = arith.constant dense<0.000000e+00> : vector<32x128xf32>
    %602 = tpu.matmul %0, %601, %cst_405 {dimension_numbers = #tpu.dot_dimension_numbers<[1], [0], [0], [1], [0, 0, 1, 1], [], []>} : vector<32x40xf32>, vector<40x128xf32>, vector<32x128xf32> -> vector<32x128xf32>
    %603 = vector.broadcast %1 : vector<32x1xf32> to vector<32x128xf32>
    %604 = arith.addf %602, %603 : vector<32x128xf32>
    %605 = arith.negf %604 : vector<32x128xf32>
    %606 = math.exp %605 : vector<32x128xf32>
    %cst_406 = arith.constant 1.000000e+00 : f32
    %607 = vector.broadcast %cst_406 : f32 to vector<32x128xf32>
    %608 = arith.addf %607, %606 : vector<32x128xf32>
    %609 = arith.divf %607, %608 : vector<32x128xf32>
    %610 = vector.extract_strided_slice %609 {offsets = [0, 0], sizes = [8, 128], strides = [1, 1]} : vector<32x128xf32> to vector<8x128xf32>
    %611 = vector.extract_strided_slice %609 {offsets = [8, 0], sizes = [8, 128], strides = [1, 1]} : vector<32x128xf32> to vector<8x128xf32>
    %612 = vector.extract_strided_slice %609 {offsets = [16, 0], sizes = [8, 128], strides = [1, 1]} : vector<32x128xf32> to vector<8x128xf32>
    %613 = vector.extract_strided_slice %609 {offsets = [24, 0], sizes = [8, 128], strides = [1, 1]} : vector<32x128xf32> to vector<8x128xf32>
    %c0_407 = arith.constant 0 : index
    %c0_408 = arith.constant 0 : index
    %614 = vector.load %arg7[%c0_407, %c0_408] : memref<8x128xf32, #tpu.memory_space<vmem>>, vector<8x128xf32>
    %615 = arith.mulf %612, %614 : vector<8x128xf32>
    %616 = arith.mulf %610, %611 : vector<8x128xf32>
    %617 = arith.addf %615, %616 : vector<8x128xf32>
    %618 = math.tanh %617 : vector<8x128xf32>
    %619 = arith.mulf %613, %618 : vector<8x128xf32>
    %c0_409 = arith.constant 0 : index
    %c0_410 = arith.constant 0 : index
    %620 = vector.load %arg7[%c0_409, %c0_410] : memref<8x128xf32, #tpu.memory_space<vmem>>, vector<8x128xf32>
    tpu.vector_store %arg7[%c0_409, %c0_410], %617 {strides = array<i32>} : memref<8x128xf32, #tpu.memory_space<vmem>>, vector<8x128xf32>,
    %c15_411 = arith.constant 15 : index
    %c0_412 = arith.constant 0 : index
    %c0_413 = arith.constant 0 : index
    %621 = vector.load %arg5[%c15_411, %c0_412, %c0_413] : memref<16x8x128xf32, #tpu.memory_space<vmem>>, vector<1x8x128xf32>
    %622 = vector.shape_cast %621 : vector<1x8x128xf32> to vector<8x128xf32>
    %623 = vector.shape_cast %619 : vector<8x128xf32> to vector<1x8x128xf32>
    tpu.vector_store %arg5[%c15_411, %c0_412, %c0_413], %623 {strides = array<i32>} : memref<16x8x128xf32, #tpu.memory_space<vmem>>, vector<1x8x128xf32>,
    %c1_i32_414 = arith.constant 1 : i32
    %624 = tpu.dynamic_rotate %619 by %c1_i32_414 dim 1 : vector<8x128xf32>, i32 -> vector<8x128xf32>
    %625 = vector.broadcast %3 : vector<1x128xf32> to vector<8x128xf32>
    %626 = arith.mulf %624, %625 : vector<8x128xf32>
    %c16_415 = arith.constant 16 : index
    %c0_416 = arith.constant 0 : index
    %627 = vector.load %arg6[%c16_415, %c0_416] : memref<40x128xf32, #tpu.memory_space<vmem>>, vector<8x128xf32>
    tpu.vector_store %arg6[%c16_415, %c0_416], %626 {strides = array<i32>} : memref<40x128xf32, #tpu.memory_space<vmem>>, vector<8x128xf32>,
    %c24_417 = arith.constant 24 : index
    %c0_418 = arith.constant 0 : index
    %628 = vector.load %arg6[%c24_417, %c0_418] : memref<40x128xf32, #tpu.memory_space<vmem>>, vector<8x128xf32>
    tpu.vector_store %arg6[%c24_417, %c0_418], %619 {strides = array<i32>} : memref<40x128xf32, #tpu.memory_space<vmem>>, vector<8x128xf32>,
    %c127_i32_419 = arith.constant 127 : i32
    %629 = tpu.dynamic_rotate %619 by %c127_i32_419 dim 1 : vector<8x128xf32>, i32 -> vector<8x128xf32>
    %630 = vector.broadcast %4 : vector<1x128xf32> to vector<8x128xf32>
    %631 = arith.mulf %629, %630 : vector<8x128xf32>
    %c32_420 = arith.constant 32 : index
    %c0_421 = arith.constant 0 : index
    %632 = vector.load %arg6[%c32_420, %c0_421] : memref<40x128xf32, #tpu.memory_space<vmem>>, vector<8x128xf32>
    tpu.vector_store %arg6[%c32_420, %c0_421], %631 {strides = array<i32>} : memref<40x128xf32, #tpu.memory_space<vmem>>, vector<8x128xf32>,
    return
  }
  func.func @transform_0(%arg0: i32) -> (i32, i32, i32) {
    %c0_i32 = arith.constant 0 : i32
    %c0_i32_0 = arith.constant 0 : i32
    %c0_i32_1 = arith.constant 0 : i32
    %c0_i32_2 = arith.constant 0 : i32
    return %c0_i32, %c0_i32_0, %c0_i32_1 : i32, i32, i32
  }
  func.func @transform_1(%arg0: i32) -> (i32, i32) {
    %c0_i32 = arith.constant 0 : i32
    %c0_i32_0 = arith.constant 0 : i32
    %c0_i32_1 = arith.constant 0 : i32
    return %c0_i32, %c0_i32_0 : i32, i32
  }
  func.func @transform_2(%arg0: i32) -> (i32, i32) {
    %c0_i32 = arith.constant 0 : i32
    %c0_i32_0 = arith.constant 0 : i32
    %c0_i32_1 = arith.constant 0 : i32
    return %c0_i32, %c0_i32_0 : i32, i32
  }
  func.func @transform_3(%arg0: i32) -> (i32, i32) {
    %c0_i32 = arith.constant 0 : i32
    %c0_i32_0 = arith.constant 0 : i32
    %c0_i32_1 = arith.constant 0 : i32
    return %c0_i32, %c0_i32_0 : i32, i32
  }
  func.func @transform_4(%arg0: i32) -> (i32, i32, i32) {
    %c0_i32 = arith.constant 0 : i32
    %c0_i32_0 = arith.constant 0 : i32
    %c0_i32_1 = arith.constant 0 : i32
    %c0_i32_2 = arith.constant 0 : i32
    return %c0_i32, %c0_i32_0, %c0_i32_1 : i32, i32, i32
  }
}

module attributes {stable_mosaic.version = 11 : i64} {
  func.func @_head_kernel(%arg0: i32, %arg1: memref<8x512xf32, #tpu.memory_space<vmem>>, %arg2: memref<10x8xf32, #tpu.memory_space<vmem>>, %arg3: memref<10x1xf32, #tpu.memory_space<vmem>>, %arg4: memref<10x512xf32, #tpu.memory_space<vmem>>) attributes {dimension_semantics = [#tpu.dimension_semantics<parallel>], iteration_bounds = array<i64: 1>, scalar_prefetch = 0 : i64, scratch_operands = 0 : i64, tpu.core_type = #tpu.core_type<tc>, window_params = [{transform_indices = @transform_0, window_bounds = array<i64: 8, 512>}, {pipeline_mode = #tpu.pipeline_mode<synchronous>, transform_indices = @transform_1, window_bounds = array<i64: 10, 8>}, {pipeline_mode = #tpu.pipeline_mode<synchronous>, transform_indices = @transform_2, window_bounds = array<i64: 10, 1>}, {transform_indices = @transform_3, window_bounds = array<i64: 10, 512>}]} {
    %c0 = arith.constant 0 : index
    %c0_0 = arith.constant 0 : index
    %0 = vector.load %arg2[%c0, %c0_0] : memref<10x8xf32, #tpu.memory_space<vmem>>, vector<10x8xf32>
    %c0_1 = arith.constant 0 : index
    %c0_2 = arith.constant 0 : index
    %1 = vector.load %arg1[%c0_1, %c0_2] : memref<8x512xf32, #tpu.memory_space<vmem>>, vector<8x512xf32>
    %cst = arith.constant dense<0.000000e+00> : vector<10x512xf32>
    %2 = tpu.matmul %0, %1, %cst {dimension_numbers = #tpu.dot_dimension_numbers<[1], [0], [0], [1], [0, 0, 1, 1], [], []>} : vector<10x8xf32>, vector<8x512xf32>, vector<10x512xf32> -> vector<10x512xf32>
    %c0_3 = arith.constant 0 : index
    %c0_4 = arith.constant 0 : index
    %3 = vector.load %arg3[%c0_3, %c0_4] : memref<10x1xf32, #tpu.memory_space<vmem>>, vector<10x1xf32>
    %4 = vector.broadcast %3 : vector<10x1xf32> to vector<10x512xf32>
    %5 = arith.addf %2, %4 : vector<10x512xf32>
    %6 = arith.negf %5 : vector<10x512xf32>
    %7 = math.exp %6 : vector<10x512xf32>
    %cst_5 = arith.constant 1.000000e+00 : f32
    %8 = vector.broadcast %cst_5 : f32 to vector<10x512xf32>
    %9 = arith.addf %8, %7 : vector<10x512xf32>
    %10 = arith.divf %8, %9 : vector<10x512xf32>
    %c0_6 = arith.constant 0 : index
    %c0_7 = arith.constant 0 : index
    %11 = vector.load %arg4[%c0_6, %c0_7] : memref<10x512xf32, #tpu.memory_space<vmem>>, vector<10x512xf32>
    tpu.vector_store %arg4[%c0_6, %c0_7], %10 {strides = array<i32>} : memref<10x512xf32, #tpu.memory_space<vmem>>, vector<10x512xf32>,
    return
  }
  func.func @transform_0(%arg0: i32) -> (i32, i32) {
    %c0_i32 = arith.constant 0 : i32
    %c0_i32_0 = arith.constant 0 : i32
    return %c0_i32, %arg0 : i32, i32
  }
  func.func @transform_1(%arg0: i32) -> (i32, i32) {
    %c0_i32 = arith.constant 0 : i32
    %c0_i32_0 = arith.constant 0 : i32
    %c0_i32_1 = arith.constant 0 : i32
    return %c0_i32, %c0_i32_0 : i32, i32
  }
  func.func @transform_2(%arg0: i32) -> (i32, i32) {
    %c0_i32 = arith.constant 0 : i32
    %c0_i32_0 = arith.constant 0 : i32
    %c0_i32_1 = arith.constant 0 : i32
    return %c0_i32, %c0_i32_0 : i32, i32
  }
  func.func @transform_3(%arg0: i32) -> (i32, i32) {
    %c0_i32 = arith.constant 0 : i32
    %c0_i32_0 = arith.constant 0 : i32
    return %c0_i32, %arg0 : i32, i32
  }
}

</mosaic_0001>

<llo_original>
// kernel: pixelrnn_forward.4
$region0: #{pixelrnn_forward.4}
  #allocation0 [shape = 'u32[]', space=smem, size = 0x4, offset = 0x4, fixed_abs, tag = 'smem constant byte address 0x4 - core index']
  #allocation1 [shape = 'u32[144,128]{1,0:T(1,128)}', space=vmem, size = 0x12000, scoped, tag = 'internal scratch']
  %s0 = inlined_call_operand.vmem [shape: f32[24,2048], index: 0, kind: input, shape index: {}]
  %s1 = inlined_call_operand.vmem [shape: f32[8,24], index: 1, kind: input, shape index: {}]
  %s2 = inlined_call_operand.vmem [shape: f32[8,1], index: 2, kind: input, shape index: {}]
  %s3 = inlined_call_operand.vmem [shape: f32[16,8,128], index: 3, kind: output, shape index: {}]
  %s4 = sld [smem:[#allocation0]]
  $region22: #{pixelrnn_forward.4} parent=0
    _
  %s6 = ssub.s32 1, %s4
  %s7 = scalar_select 0, %s6, %s4
  // Predicated region
  $region2: #{pixelrnn_forward.4} parent=0 // pred_check
    _
  $region3: #{pixelrnn_forward.4} parent=0 // pred_check_branch
    %9 = sbr.rel (0) target = $region5
  $region4: #{pixelrnn_forward.4} parent=0 // pred_region
    _
  $region5: #{pixelrnn_forward.4} parent=0 // pred_fallthru
    _
  // Predicated region
  $region6: #{pixelrnn_forward.4} parent=0 // pred_check
    _
  $region7: #{pixelrnn_forward.4} parent=0 // pred_check_branch
    %11 = sbr.rel (0) target = $region9
  $region8: #{pixelrnn_forward.4} parent=0 // pred_region
    _
  $region9: #{pixelrnn_forward.4} parent=0 // pred_fallthru
    _
  // Predicated region
  $region10: #{pixelrnn_forward.4} parent=0 // pred_check
    _
  $region11: #{pixelrnn_forward.4} parent=0 // pred_check_branch
    %13 = sbr.rel (0) target = $region13
  $region12: #{pixelrnn_forward.4} parent=0 // pred_region
    _
  $region13: #{pixelrnn_forward.4} parent=0 // pred_fallthru
    _
  %v14 = vld [vmem:[%s1] sm:$0xff]
  %v15 = vld [vmem:[%s0] sm:$0xff]
  %v16 = vld [vmem:[%s0 + $0x8] sm:$0xff]
  %v17 = vld [vmem:[%s0 + $0x10] sm:$0xff]
  %v18 = vld [vmem:[%s0 + $0x18] sm:$0xff]
  %v19 = vld [vmem:[%s0 + $0x20] sm:$0xff]
  %v20 = vld [vmem:[%s0 + $0x28] sm:$0xff]
  %v21 = vld [vmem:[%s0 + $0x30] sm:$0xff]
  %v22 = vld [vmem:[%s0 + $0x38] sm:$0xff]
  %v23 = vld [vmem:[%s0 + $0x40] sm:$0xff]
  %v24 = vld [vmem:[%s0 + $0x48] sm:$0xff]
  %v25 = vld [vmem:[%s0 + $0x50] sm:$0xff]
  %v26 = vld [vmem:[%s0 + $0x58] sm:$0xff]
  %v27 = vld [vmem:[%s0 + $0x60] sm:$0xff]
  %v28 = vld [vmem:[%s0 + $0x68] sm:$0xff]
  %v29 = vld [vmem:[%s0 + $0x70] sm:$0xff]
  %v30 = vld [vmem:[%s0 + $0x78] sm:$0xff]
  %v31 = vld [vmem:[%s0 + $0x80] sm:$0xff]
  %v32 = vld [vmem:[%s0 + $0x88] sm:$0xff]
  %v33 = vld [vmem:[%s0 + $0x90] sm:$0xff]
  %v34 = vld [vmem:[%s0 + $0x98] sm:$0xff]
  %v35 = vld [vmem:[%s0 + $0xa0] sm:$0xff]
  %v36 = vld [vmem:[%s0 + $0xa8] sm:$0xff]
  %v37 = vld [vmem:[%s0 + $0xb0] sm:$0xff]
  %v38 = vld [vmem:[%s0 + $0xb8] sm:$0xff]
  %v39 = vld [vmem:[%s0 + $0xc0] sm:$0xff]
  %v40 = vld [vmem:[%s0 + $0xc8] sm:$0xff]
  %v41 = vld [vmem:[%s0 + $0xd0] sm:$0xff]
  %v42 = vld [vmem:[%s0 + $0xd8] sm:$0xff]
  %v43 = vld [vmem:[%s0 + $0xe0] sm:$0xff]
  %v44 = vld [vmem:[%s0 + $0xe8] sm:$0xff]
  %v45 = vld [vmem:[%s0 + $0xf0] sm:$0xff]
  %v46 = vld [vmem:[%s0 + $0xf8] sm:$0xff]
  %v47 = vld [vmem:[%s0 + $0x100] sm:$0xff]
  %v48 = vld [vmem:[%s0 + $0x108] sm:$0xff]
  %v49 = vld [vmem:[%s0 + $0x110] sm:$0xff]
  %v50 = vld [vmem:[%s0 + $0x118] sm:$0xff]
  %v51 = vld [vmem:[%s0 + $0x120] sm:$0xff]
  %v52 = vld [vmem:[%s0 + $0x128] sm:$0xff]
  %v53 = vld [vmem:[%s0 + $0x130] sm:$0xff]
  %v54 = vld [vmem:[%s0 + $0x138] sm:$0xff]
  %v55 = vld [vmem:[%s0 + $0x140] sm:$0xff]
  %v56 = vld [vmem:[%s0 + $0x148] sm:$0xff]
  %v57 = vld [vmem:[%s0 + $0x150] sm:$0xff]
  %v58 = vld [vmem:[%s0 + $0x158] sm:$0xff]
  %v59 = vld [vmem:[%s0 + $0x160] sm:$0xff]
  %v60 = vld [vmem:[%s0 + $0x168] sm:$0xff]
  %v61 = vld [vmem:[%s0 + $0x170] sm:$0xff]
  %v62 = vld [vmem:[%s0 + $0x178] sm:$0xff]
  %v63 = vld [vmem:[%s2] sm:$0xff]
  %65 = vset.pattern.permute.xlu0 0
  %66 = vperm.xlu0 %65, %v63
  %v67 = vpop.permute.xlu0 %66
  %vm69 = vcmask 195584
  %v71 = vsel %vm69, %v14, 0
  %73 = vmatprep.subr.mxu0 0.0
  %74 = vmatpush1.msra.mxu0 0.0
  %75 = vmatprep.subr.mxu0 0.0
  %76 = vmatpush1.msra.mxu0 0.0
  %77 = vmatprep.subr.mxu0 0.0
  %78 = vmatpush1.msra.mxu0 0.0
  %79 = vmatprep.subr.mxu0 0.0
  %80 = vmatpush1.msra.mxu0 0.0
  %81 = vmatprep.subr.mxu0 0.0
  %82 = vmatpush1.msra.mxu0 0.0
  %83 = vmatprep.subr.mxu0 0.0
  %84 = vmatpush1.msra.mxu0 0.0
  %85 = vmatprep.subr.mxu0 0.0
  %86 = vmatpush1.msra.mxu0 0.0
  %87 = vmatprep.subr.mxu0 0.0
  %88 = vmatpush1.msra.mxu0 0.0
  %89 = vmatprep.subr.mxu0 0.0
  %90 = vmatpush1.msra.mxu0 0.0
  %91 = vmatprep.subr.mxu0 0.0
  %92 = vmatpush1.msra.mxu0 0.0
  %93 = vmatprep.subr.mxu0 0.0
  %94 = vmatpush1.msra.mxu0 0.0
  %95 = vmatprep.subr.mxu0 0.0
  %96 = vmatpush1.msra.mxu0 0.0
  %97 = vmatprep.subr.mxu0 0.0
  %98 = vmatpush1.msra.mxu0 0.0
  %99 = vmatprep.subr.mxu0 %v48
  %100 = vmatpush1.msra.mxu0 %v47
  %101 = vmatprep.subr.mxu0 %v32
  %102 = vmatpush1.msra.mxu0 %v31
  %103 = vmatprep.subr.mxu0 %v16
  %104 = vmatpush1.msra.mxu0 %v15
  %105 = vmatprep.subr.mxu0 0.0
  %106 = vmatpush2.msra.mxu0 0.0
  %107 = vmatprep.subr.mxu0 0.0
  %108 = vmatpush2.msra.mxu0 0.0
  %109 = vmatprep.subr.mxu0 0.0
  %110 = vmatpush2.msra.mxu0 0.0
  %111 = vmatprep.subr.mxu0 0.0
  %112 = vmatpush2.msra.mxu0 0.0
  %113 = vmatprep.subr.mxu0 0.0
  %114 = vmatpush2.msra.mxu0 0.0
  %115 = vmatprep.subr.mxu0 0.0
  %116 = vmatpush2.msra.mxu0 0.0
  %117 = vmatprep.subr.mxu0 0.0
  %118 = vmatpush2.msra.mxu0 0.0
  %119 = vmatprep.subr.mxu0 0.0
  %120 = vmatpush2.msra.mxu0 0.0
  %121 = vmatprep.subr.mxu0 0.0
  %122 = vmatpush2.msra.mxu0 0.0
  %123 = vmatprep.subr.mxu0 0.0
  %124 = vmatpush2.msra.mxu0 0.0
  %125 = vmatprep.subr.mxu0 0.0
  %126 = vmatpush2.msra.mxu0 0.0
  %127 = vmatprep.subr.mxu0 0.0
  %128 = vmatpush2.msra.mxu0 0.0
  %129 = vmatprep.subr.mxu0 0.0
  %130 = vmatpush2.msra.mxu0 0.0
  %131 = vmatprep.subr.mxu0 0.0
  %132 = vmatpush2.msra.mxu0 0.0
  %133 = vmatprep.subr.mxu0 0.0
  %134 = vmatpush2.msra.mxu0 0.0
  %135 = vmatprep.subr.mxu0 0.0
  %136 = vmatpush2.msra.mxu0 0.0
  %137 = vmatprep.mubr.f32.mxu0 0.0
  %138 = vmatmul.mubr.f32.gmra.mxu0 %v71
  %v139 = vpop.f32.mrf.mxu0
  %v140 = vadd.f32 %v67, %v139
  %v141 = vpop.f32.mrf.mxu0
  %v142 = vadd.f32 %v67, %v141
  %143 = vdwg.mxu0
  %144 = vmatprep.subr.mxu0 0.0
  %145 = vmatpush1.msra.mxu0 0.0
  %146 = vmatprep.subr.mxu0 0.0
  %147 = vmatpush1.msra.mxu0 0.0
  %148 = vmatprep.subr.mxu0 0.0
  %149 = vmatpush1.msra.mxu0 0.0
  %150 = vmatprep.subr.mxu0 0.0
  %151 = vmatpush1.msra.mxu0 0.0
  %152 = vmatprep.subr.mxu0 0.0
  %153 = vmatpush1.msra.mxu0 0.0
  %154 = vmatprep.subr.mxu0 0.0
  %155 = vmatpush1.msra.mxu0 0.0
  %156 = vmatprep.subr.mxu0 0.0
  %157 = vmatpush1.msra.mxu0 0.0
  %158 = vmatprep.subr.mxu0 0.0
  %159 = vmatpush1.msra.mxu0 0.0
  %160 = vmatprep.subr.mxu0 0.0
  %161 = vmatpush1.msra.mxu0 0.0
  %162 = vmatprep.subr.mxu0 0.0
  %163 = vmatpush1.msra.mxu0 0.0
  %164 = vmatprep.subr.mxu0 0.0
  %165 = vmatpush1.msra.mxu0 0.0
  %166 = vmatprep.subr.mxu0 0.0
  %167 = vmatpush1.msra.mxu0 0.0
  %168 = vmatprep.subr.mxu0 0.0
  %169 = vmatpush1.msra.mxu0 0.0
  %170 = vmatprep.subr.mxu0 %v50
  %171 = vmatpush1.msra.mxu0 %v49
  %172 = vmatprep.subr.mxu0 %v34
  %173 = vmatpush1.msra.mxu0 %v33
  %174 = vmatprep.subr.mxu0 %v18
  %175 = vmatpush1.msra.mxu0 %v17
  %176 = vmatprep.subr.mxu0 0.0
  %177 = vmatpush2.msra.mxu0 0.0
  %178 = vmatprep.subr.mxu0 0.0
  %179 = vmatpush2.msra.mxu0 0.0
  %180 = vmatprep.subr.mxu0 0.0
  %181 = vmatpush2.msra.mxu0 0.0
  %182 = vmatprep.subr.mxu0 0.0
  %183 = vmatpush2.msra.mxu0 0.0
  %184 = vmatprep.subr.mxu0 0.0
  %185 = vmatpush2.msra.mxu0 0.0
  %186 = vmatprep.subr.mxu0 0.0
  %187 = vmatpush2.msra.mxu0 0.0
  %188 = vmatprep.subr.mxu0 0.0
  %189 = vmatpush2.msra.mxu0 0.0
  %190 = vmatprep.subr.mxu0 0.0
  %191 = vmatpush2.msra.mxu0 0.0
  %192 = vmatprep.subr.mxu0 0.0
  %193 = vmatpush2.msra.mxu0 0.0
  %194 = vmatprep.subr.mxu0 0.0
  %195 = vmatpush2.msra.mxu0 0.0
  %196 = vmatprep.subr.mxu0 0.0
  %197 = vmatpush2.msra.mxu0 0.0
  %198 = vmatprep.subr.mxu0 0.0
  %199 = vmatpush2.msra.mxu0 0.0
  %200 = vmatprep.subr.mxu0 0.0
  %201 = vmatpush2.msra.mxu0 0.0
  %202 = vmatprep.subr.mxu0 0.0
  %203 = vmatpush2.msra.mxu0 0.0
  %204 = vmatprep.subr.mxu0 0.0
  %205 = vmatpush2.msra.mxu0 0.0
  %206 = vmatprep.subr.mxu0 0.0
  %207 = vmatpush2.msra.mxu0 0.0
  %208 = vmatprep.mubr.f32.mxu0 0.0
  %209 = vmatmul.mubr.f32.gmra.mxu0 %v71
  %v210 = vpop.f32.mrf.mxu0
  %v211 = vadd.f32 %v67, %v210
  %v212 = vpop.f32.mrf.mxu0
  %v213 = vadd.f32 %v67, %v212
  %214 = vdwg.mxu0
  %215 = vmatprep.subr.mxu0 0.0
  %216 = vmatpush1.msra.mxu0 0.0
  %217 = vmatprep.subr.mxu0 0.0
  %218 = vmatpush1.msra.mxu0 0.0
  %219 = vmatprep.subr.mxu0 0.0
  %220 = vmatpush1.msra.mxu0 0.0
  %221 = vmatprep.subr.mxu0 0.0
  %222 = vmatpush1.msra.mxu0 0.0
  %223 = vmatprep.subr.mxu0 0.0
  %224 = vmatpush1.msra.mxu0 0.0
  %225 = vmatprep.subr.mxu0 0.0
  %226 = vmatpush1.msra.mxu0 0.0
  %227 = vmatprep.subr.mxu0 0.0
  %228 = vmatpush1.msra.mxu0 0.0
  %229 = vmatprep.subr.mxu0 0.0
  %230 = vmatpush1.msra.mxu0 0.0
  %231 = vmatprep.subr.mxu0 0.0
  %232 = vmatpush1.msra.mxu0 0.0
  %233 = vmatprep.subr.mxu0 0.0
  %234 = vmatpush1.msra.mxu0 0.0
  %235 = vmatprep.subr.mxu0 0.0
  %236 = vmatpush1.msra.mxu0 0.0
  %237 = vmatprep.subr.mxu0 0.0
  %238 = vmatpush1.msra.mxu0 0.0
  %239 = vmatprep.subr.mxu0 0.0
  %240 = vmatpush1.msra.mxu0 0.0
  %241 = vmatprep.subr.mxu0 %v52
  %242 = vmatpush1.msra.mxu0 %v51
  %243 = vmatprep.subr.mxu0 %v36
  %244 = vmatpush1.msra.mxu0 %v35
  %245 = vmatprep.subr.mxu0 %v20
  %246 = vmatpush1.msra.mxu0 %v19
  %247 = vmatprep.subr.mxu0 0.0
  %248 = vmatpush2.msra.mxu0 0.0
  %249 = vmatprep.subr.mxu0 0.0
  %250 = vmatpush2.msra.mxu0 0.0
  %251 = vmatprep.subr.mxu0 0.0
  %252 = vmatpush2.msra.mxu0 0.0
  %253 = vmatprep.subr.mxu0 0.0
  %254 = vmatpush2.msra.mxu0 0.0
  %255 = vmatprep.subr.mxu0 0.0
  %256 = vmatpush2.msra.mxu0 0.0
  %257 = vmatprep.subr.mxu0 0.0
  %258 = vmatpush2.msra.mxu0 0.0
  %259 = vmatprep.subr.mxu0 0.0
  %260 = vmatpush2.msra.mxu0 0.0
  %261 = vmatprep.subr.mxu0 0.0
  %262 = vmatpush2.msra.mxu0 0.0
  %263 = vmatprep.subr.mxu0 0.0
  %264 = vmatpush2.msra.mxu0 0.0
  %265 = vmatprep.subr.mxu0 0.0
  %266 = vmatpush2.msra.mxu0 0.0
  %267 = vmatprep.subr.mxu0 0.0
  %268 = vmatpush2.msra.mxu0 0.0
  %269 = vmatprep.subr.mxu0 0.0
  %270 = vmatpush2.msra.mxu0 0.0
  %271 = vmatprep.subr.mxu0 0.0
  %272 = vmatpush2.msra.mxu0 0.0
  %273 = vmatprep.subr.mxu0 0.0
  %274 = vmatpush2.msra.mxu0 0.0
  %275 = vmatprep.subr.mxu0 0.0
  %276 = vmatpush2.msra.mxu0 0.0
  %277 = vmatprep.subr.mxu0 0.0
  %278 = vmatpush2.msra.mxu0 0.0
  %279 = vmatprep.mubr.f32.mxu0 0.0
  %280 = vmatmul.mubr.f32.gmra.mxu0 %v71
  %v281 = vpop.f32.mrf.mxu0
  %v282 = vadd.f32 %v67, %v281
  %v283 = vpop.f32.mrf.mxu0
  %v284 = vadd.f32 %v67, %v283
  %285 = vdwg.mxu0
  %286 = vmatprep.subr.mxu0 0.0
  %287 = vmatpush1.msra.mxu0 0.0
  %288 = vmatprep.subr.mxu0 0.0
  %289 = vmatpush1.msra.mxu0 0.0
  %290 = vmatprep.subr.mxu0 0.0
  %291 = vmatpush1.msra.mxu0 0.0
  %292 = vmatprep.subr.mxu0 0.0
  %293 = vmatpush1.msra.mxu0 0.0
  %294 = vmatprep.subr.mxu0 0.0
  %295 = vmatpush1.msra.mxu0 0.0
  %296 = vmatprep.subr.mxu0 0.0
  %297 = vmatpush1.msra.mxu0 0.0
  %298 = vmatprep.subr.mxu0 0.0
  %299 = vmatpush1.msra.mxu0 0.0
  %300 = vmatprep.subr.mxu0 0.0
  %301 = vmatpush1.msra.mxu0 0.0
  %302 = vmatprep.subr.mxu0 0.0
  %303 = vmatpush1.msra.mxu0 0.0
  %304 = vmatprep.subr.mxu0 0.0
  %305 = vmatpush1.msra.mxu0 0.0
  %306 = vmatprep.subr.mxu0 0.0
  %307 = vmatpush1.msra.mxu0 0.0
  %308 = vmatprep.subr.mxu0 0.0
  %309 = vmatpush1.msra.mxu0 0.0
  %310 = vmatprep.subr.mxu0 0.0
  %311 = vmatpush1.msra.mxu0 0.0
  %312 = vmatprep.subr.mxu0 %v54
  %313 = vmatpush1.msra.mxu0 %v53
  %314 = vmatprep.subr.mxu0 %v38
  %315 = vmatpush1.msra.mxu0 %v37
  %316 = vmatprep.subr.mxu0 %v22
  %317 = vmatpush1.msra.mxu0 %v21
  %318 = vmatprep.subr.mxu0 0.0
  %319 = vmatpush2.msra.mxu0 0.0
  %320 = vmatprep.subr.mxu0 0.0
  %321 = vmatpush2.msra.mxu0 0.0
  %322 = vmatprep.subr.mxu0 0.0
  %323 = vmatpush2.msra.mxu0 0.0
  %324 = vmatprep.subr.mxu0 0.0
  %325 = vmatpush2.msra.mxu0 0.0
  %326 = vmatprep.subr.mxu0 0.0
  %327 = vmatpush2.msra.mxu0 0.0
  %328 = vmatprep.subr.mxu0 0.0
  %329 = vmatpush2.msra.mxu0 0.0
  %330 = vmatprep.subr.mxu0 0.0
  %331 = vmatpush2.msra.mxu0 0.0
  %332 = vmatprep.subr.mxu0 0.0
  %333 = vmatpush2.msra.mxu0 0.0
  %334 = vmatprep.subr.mxu0 0.0
  %335 = vmatpush2.msra.mxu0 0.0
  %336 = vmatprep.subr.mxu0 0.0
  %337 = vmatpush2.msra.mxu0 0.0
  %338 = vmatprep.subr.mxu0 0.0
  %339 = vmatpush2.msra.mxu0 0.0
  %340 = vmatprep.subr.mxu0 0.0
  %341 = vmatpush2.msra.mxu0 0.0
  %342 = vmatprep.subr.mxu0 0.0
  %343 = vmatpush2.msra.mxu0 0.0
  %344 = vmatprep.subr.mxu0 0.0
  %345 = vmatpush2.msra.mxu0 0.0
  %346 = vmatprep.subr.mxu0 0.0
  %347 = vmatpush2.msra.mxu0 0.0
  %348 = vmatprep.subr.mxu0 0.0
  %349 = vmatpush2.msra.mxu0 0.0
  %350 = vmatprep.mubr.f32.mxu0 0.0
  %351 = vmatmul.mubr.f32.gmra.mxu0 %v71
  %v352 = vpop.f32.mrf.mxu0
  %v353 = vadd.f32 %v67, %v352
  %v354 = vpop.f32.mrf.mxu0
  %v355 = vadd.f32 %v67, %v354
  %356 = vdwg.mxu0
  %357 = vmatprep.subr.mxu0 0.0
  %358 = vmatpush1.msra.mxu0 0.0
  %359 = vmatprep.subr.mxu0 0.0
  %360 = vmatpush1.msra.mxu0 0.0
  %361 = vmatprep.subr.mxu0 0.0
  %362 = vmatpush1.msra.mxu0 0.0
  %363 = vmatprep.subr.mxu0 0.0
  %364 = vmatpush1.msra.mxu0 0.0
  %365 = vmatprep.subr.mxu0 0.0
  %366 = vmatpush1.msra.mxu0 0.0
  %367 = vmatprep.subr.mxu0 0.0
  %368 = vmatpush1.msra.mxu0 0.0
  %369 = vmatprep.subr.mxu0 0.0
  %370 = vmatpush1.msra.mxu0 0.0
  %371 = vmatprep.subr.mxu0 0.0
  %372 = vmatpush1.msra.mxu0 0.0
  %373 = vmatprep.subr.mxu0 0.0
  %374 = vmatpush1.msra.mxu0 0.0
  %375 = vmatprep.subr.mxu0 0.0
  %376 = vmatpush1.msra.mxu0 0.0
  %377 = vmatprep.subr.mxu0 0.0
  %378 = vmatpush1.msra.mxu0 0.0
  %379 = vmatprep.subr.mxu0 0.0
  %380 = vmatpush1.msra.mxu0 0.0
  %381 = vmatprep.subr.mxu0 0.0
  %382 = vmatpush1.msra.mxu0 0.0
  %383 = vmatprep.subr.mxu0 %v56
  %384 = vmatpush1.msra.mxu0 %v55
  %385 = vmatprep.subr.mxu0 %v40
  %386 = vmatpush1.msra.mxu0 %v39
  %387 = vmatprep.subr.mxu0 %v24
  %388 = vmatpush1.msra.mxu0 %v23
  %389 = vmatprep.subr.mxu0 0.0
  %390 = vmatpush2.msra.mxu0 0.0
  %391 = vmatprep.subr.mxu0 0.0
  %392 = vmatpush2.msra.mxu0 0.0
  %393 = vmatprep.subr.mxu0 0.0
  %394 = vmatpush2.msra.mxu0 0.0
  %395 = vmatprep.subr.mxu0 0.0
  %396 = vmatpush2.msra.mxu0 0.0
  %397 = vmatprep.subr.mxu0 0.0
  %398 = vmatpush2.msra.mxu0 0.0
  %399 = vmatprep.subr.mxu0 0.0
  %400 = vmatpush2.msra.mxu0 0.0
  %401 = vmatprep.subr.mxu0 0.0
  %402 = vmatpush2.msra.mxu0 0.0
  %403 = vmatprep.subr.mxu0 0.0
  %404 = vmatpush2.msra.mxu0 0.0
  %405 = vmatprep.subr.mxu0 0.0
  %406 = vmatpush2.msra.mxu0 0.0
  %407 = vmatprep.subr.mxu0 0.0
  %408 = vmatpush2.msra.mxu0 0.0
  %409 = vmatprep.subr.mxu0 0.0
  %410 = vmatpush2.msra.mxu0 0.0
  %411 = vmatprep.subr.mxu0 0.0
  %412 = vmatpush2.msra.mxu0 0.0
  %413 = vmatprep.subr.mxu0 0.0
  %414 = vmatpush2.msra.mxu0 0.0
  %415 = vmatprep.subr.mxu0 0.0
  %416 = vmatpush2.msra.mxu0 0.0
  %417 = vmatprep.subr.mxu0 0.0
  %418 = vmatpush2.msra.mxu0 0.0
  %419 = vmatprep.subr.mxu0 0.0
  %420 = vmatpush2.msra.mxu0 0.0
  %421 = vmatprep.mubr.f32.mxu0 0.0
  %422 = vmatmul.mubr.f32.gmra.mxu0 %v71
  %v423 = vpop.f32.mrf.mxu0
  %v424 = vadd.f32 %v67, %v423
  %v425 = vpop.f32.mrf.mxu0
  %v426 = vadd.f32 %v67, %v425
  %427 = vdwg.mxu0
  %428 = vmatprep.subr.mxu0 0.0
  %429 = vmatpush1.msra.mxu0 0.0
  %430 = vmatprep.subr.mxu0 0.0
  %431 = vmatpush1.msra.mxu0 0.0
  %432 = vmatprep.subr.mxu0 0.0
  %433 = vmatpush1.msra.mxu0 0.0
  %434 = vmatprep.subr.mxu0 0.0
  %435 = vmatpush1.msra.mxu0 0.0
  %436 = vmatprep.subr.mxu0 0.0
  %437 = vmatpush1.msra.mxu0 0.0
  %438 = vmatprep.subr.mxu0 0.0
  %439 = vmatpush1.msra.mxu0 0.0
  %440 = vmatprep.subr.mxu0 0.0
  %441 = vmatpush1.msra.mxu0 0.0
  %442 = vmatprep.subr.mxu0 0.0
  %443 = vmatpush1.msra.mxu0 0.0
  %444 = vmatprep.subr.mxu0 0.0
  %445 = vmatpush1.msra.mxu0 0.0
  %446 = vmatprep.subr.mxu0 0.0
  %447 = vmatpush1.msra.mxu0 0.0
  %448 = vmatprep.subr.mxu0 0.0
  %449 = vmatpush1.msra.mxu0 0.0
  %450 = vmatprep.subr.mxu0 0.0
  %451 = vmatpush1.msra.mxu0 0.0
  %452 = vmatprep.subr.mxu0 0.0
  %453 = vmatpush1.msra.mxu0 0.0
  %454 = vmatprep.subr.mxu0 %v58
  %455 = vmatpush1.msra.mxu0 %v57
  %456 = vmatprep.subr.mxu0 %v42
  %457 = vmatpush1.msra.mxu0 %v41
  %458 = vmatprep.subr.mxu0 %v26
  %459 = vmatpush1.msra.mxu0 %v25
  %460 = vmatprep.subr.mxu0 0.0
  %461 = vmatpush2.msra.mxu0 0.0
  %462 = vmatprep.subr.mxu0 0.0
  %463 = vmatpush2.msra.mxu0 0.0
  %464 = vmatprep.subr.mxu0 0.0
  %465 = vmatpush2.msra.mxu0 0.0
  %466 = vmatprep.subr.mxu0 0.0
  %467 = vmatpush2.msra.mxu0 0.0
  %468 = vmatprep.subr.mxu0 0.0
  %469 = vmatpush2.msra.mxu0 0.0
  %470 = vmatprep.subr.mxu0 0.0
  %471 = vmatpush2.msra.mxu0 0.0
  %472 = vmatprep.subr.mxu0 0.0
  %473 = vmatpush2.msra.mxu0 0.0
  %474 = vmatprep.subr.mxu0 0.0
  %475 = vmatpush2.msra.mxu0 0.0
  %476 = vmatprep.subr.mxu0 0.0
  %477 = vmatpush2.msra.mxu0 0.0
  %478 = vmatprep.subr.mxu0 0.0
  %479 = vmatpush2.msra.mxu0 0.0
  %480 = vmatprep.subr.mxu0 0.0
  %481 = vmatpush2.msra.mxu0 0.0
  %482 = vmatprep.subr.mxu0 0.0
  %483 = vmatpush2.msra.mxu0 0.0
  %484 = vmatprep.subr.mxu0 0.0
  %485 = vmatpush2.msra.mxu0 0.0
  %486 = vmatprep.subr.mxu0 0.0
  %487 = vmatpush2.msra.mxu0 0.0
  %488 = vmatprep.subr.mxu0 0.0
  %489 = vmatpush2.msra.mxu0 0.0
  %490 = vmatprep.subr.mxu0 0.0
  %491 = vmatpush2.msra.mxu0 0.0
  %492 = vmatprep.mubr.f32.mxu0 0.0
  %493 = vmatmul.mubr.f32.gmra.mxu0 %v71
  %v494 = vpop.f32.mrf.mxu0
  %v495 = vadd.f32 %v67, %v494
  %v496 = vpop.f32.mrf.mxu0
  %v497 = vadd.f32 %v67, %v496
  %498 = vdwg.mxu0
  %499 = vmatprep.subr.mxu0 0.0
  %500 = vmatpush1.msra.mxu0 0.0
  %501 = vmatprep.subr.mxu0 0.0
  %502 = vmatpush1.msra.mxu0 0.0
  %503 = vmatprep.subr.mxu0 0.0
  %504 = vmatpush1.msra.mxu0 0.0
  %505 = vmatprep.subr.mxu0 0.0
  %506 = vmatpush1.msra.mxu0 0.0
  %507 = vmatprep.subr.mxu0 0.0
  %508 = vmatpush1.msra.mxu0 0.0
  %509 = vmatprep.subr.mxu0 0.0
  %510 = vmatpush1.msra.mxu0 0.0
  %511 = vmatprep.subr.mxu0 0.0
  %512 = vmatpush1.msra.mxu0 0.0
  %513 = vmatprep.subr.mxu0 0.0
  %514 = vmatpush1.msra.mxu0 0.0
  %515 = vmatprep.subr.mxu0 0.0
  %516 = vmatpush1.msra.mxu0 0.0
  %517 = vmatprep.subr.mxu0 0.0
  %518 = vmatpush1.msra.mxu0 0.0
  %519 = vmatprep.subr.mxu0 0.0
  %520 = vmatpush1.msra.mxu0 0.0
  %521 = vmatprep.subr.mxu0 0.0
  %522 = vmatpush1.msra.mxu0 0.0
  %523 = vmatprep.subr.mxu0 0.0
  %524 = vmatpush1.msra.mxu0 0.0
  %525 = vmatprep.subr.mxu0 %v60
  %526 = vmatpush1.msra.mxu0 %v59
  %527 = vmatprep.subr.mxu0 %v44
  %528 = vmatpush1.msra.mxu0 %v43
  %529 = vmatprep.subr.mxu0 %v28
  %530 = vmatpush1.msra.mxu0 %v27
  %531 = vmatprep.subr.mxu0 0.0
  %532 = vmatpush2.msra.mxu0 0.0
  %533 = vmatprep.subr.mxu0 0.0
  %534 = vmatpush2.msra.mxu0 0.0
  %535 = vmatprep.subr.mxu0 0.0
  %536 = vmatpush2.msra.mxu0 0.0
  %537 = vmatprep.subr.mxu0 0.0
  %538 = vmatpush2.msra.mxu0 0.0
  %539 = vmatprep.subr.mxu0 0.0
  %540 = vmatpush2.msra.mxu0 0.0
  %541 = vmatprep.subr.mxu0 0.0
  %542 = vmatpush2.msra.mxu0 0.0
  %543 = vmatprep.subr.mxu0 0.0
  %544 = vmatpush2.msra.mxu0 0.0
  %545 = vmatprep.subr.mxu0 0.0
  %546 = vmatpush2.msra.mxu0 0.0
  %547 = vmatprep.subr.mxu0 0.0
  %548 = vmatpush2.msra.mxu0 0.0
  %549 = vmatprep.subr.mxu0 0.0
  %550 = vmatpush2.msra.mxu0 0.0
  %551 = vmatprep.subr.mxu0 0.0
  %552 = vmatpush2.msra.mxu0 0.0
  %553 = vmatprep.subr.mxu0 0.0
  %554 = vmatpush2.msra.mxu0 0.0
  %555 = vmatprep.subr.mxu0 0.0
  %556 = vmatpush2.msra.mxu0 0.0
  %557 = vmatprep.subr.mxu0 0.0
  %558 = vmatpush2.msra.mxu0 0.0
  %559 = vmatprep.subr.mxu0 0.0
  %560 = vmatpush2.msra.mxu0 0.0
  %561 = vmatprep.subr.mxu0 0.0
  %562 = vmatpush2.msra.mxu0 0.0
  %563 = vmatprep.mubr.f32.mxu0 0.0
  %564 = vmatmul.mubr.f32.gmra.mxu0 %v71
  %v565 = vpop.f32.mrf.mxu0
  %v566 = vadd.f32 %v67, %v565
  %v567 = vpop.f32.mrf.mxu0
  %v568 = vadd.f32 %v67, %v567
  %569 = vdwg.mxu0
  %570 = vmatprep.subr.mxu0 0.0
  %571 = vmatpush1.msra.mxu0 0.0
  %572 = vmatprep.subr.mxu0 0.0
  %573 = vmatpush1.msra.mxu0 0.0
  %574 = vmatprep.subr.mxu0 0.0
  %575 = vmatpush1.msra.mxu0 0.0
  %576 = vmatprep.subr.mxu0 0.0
  %577 = vmatpush1.msra.mxu0 0.0
  %578 = vmatprep.subr.mxu0 0.0
  %579 = vmatpush1.msra.mxu0 0.0
  %580 = vmatprep.subr.mxu0 0.0
  %581 = vmatpush1.msra.mxu0 0.0
  %582 = vmatprep.subr.mxu0 0.0
  %583 = vmatpush1.msra.mxu0 0.0
  %584 = vmatprep.subr.mxu0 0.0
  %585 = vmatpush1.msra.mxu0 0.0
  %586 = vmatprep.subr.mxu0 0.0
  %587 = vmatpush1.msra.mxu0 0.0
  %588 = vmatprep.subr.mxu0 0.0
  %589 = vmatpush1.msra.mxu0 0.0
  %590 = vmatprep.subr.mxu0 0.0
  %591 = vmatpush1.msra.mxu0 0.0
  %592 = vmatprep.subr.mxu0 0.0
  %593 = vmatpush1.msra.mxu0 0.0
  %594 = vmatprep.subr.mxu0 0.0
  %595 = vmatpush1.msra.mxu0 0.0
  %596 = vmatprep.subr.mxu0 %v62
  %597 = vmatpush1.msra.mxu0 %v61
  %598 = vmatprep.subr.mxu0 %v46
  %599 = vmatpush1.msra.mxu0 %v45
  %600 = vmatprep.subr.mxu0 %v30
  %601 = vmatpush1.msra.mxu0 %v29
  %602 = vmatprep.subr.mxu0 0.0
  %603 = vmatpush2.msra.mxu0 0.0
  %604 = vmatprep.subr.mxu0 0.0
  %605 = vmatpush2.msra.mxu0 0.0
  %606 = vmatprep.subr.mxu0 0.0
  %607 = vmatpush2.msra.mxu0 0.0
  %608 = vmatprep.subr.mxu0 0.0
  %609 = vmatpush2.msra.mxu0 0.0
  %610 = vmatprep.subr.mxu0 0.0
  %611 = vmatpush2.msra.mxu0 0.0
  %612 = vmatprep.subr.mxu0 0.0
  %613 = vmatpush2.msra.mxu0 0.0
  %614 = vmatprep.subr.mxu0 0.0
  %615 = vmatpush2.msra.mxu0 0.0
  %616 = vmatprep.subr.mxu0 0.0
  %617 = vmatpush2.msra.mxu0 0.0
  %618 = vmatprep.subr.mxu0 0.0
  %619 = vmatpush2.msra.mxu0 0.0
  %620 = vmatprep.subr.mxu0 0.0
  %621 = vmatpush2.msra.mxu0 0.0
  %622 = vmatprep.subr.mxu0 0.0
  %623 = vmatpush2.msra.mxu0 0.0
  %624 = vmatprep.subr.mxu0 0.0
  %625 = vmatpush2.msra.mxu0 0.0
  %626 = vmatprep.subr.mxu0 0.0
  %627 = vmatpush2.msra.mxu0 0.0
  %628 = vmatprep.subr.mxu0 0.0
  %629 = vmatpush2.msra.mxu0 0.0
  %630 = vmatprep.subr.mxu0 0.0
  %631 = vmatpush2.msra.mxu0 0.0
  %632 = vmatprep.subr.mxu0 0.0
  %633 = vmatpush2.msra.mxu0 0.0
  %634 = vmatprep.mubr.f32.mxu0 0.0
  %635 = vmatmul.mubr.f32.gmra.mxu0 %v71
  %v636 = vpop.f32.mrf.mxu0
  %v637 = vadd.f32 %v67, %v636
  %v638 = vpop.f32.mrf.mxu0
  %v639 = vadd.f32 %v67, %v638
  %640 = vdwg.mxu0
  %641 = vst [vmem:[%s3] sm:$0xff] %v140
  %s642 = scalar_lea.vmem %s3, 8
  %643 = vst [vmem:[%s642] sm:$0xff] %v142
  %s644 = scalar_lea.vmem %s3, 16
  %645 = vst [vmem:[%s644] sm:$0xff] %v211
  %s646 = scalar_lea.vmem %s3, 24
  %647 = vst [vmem:[%s646] sm:$0xff] %v213
  %s648 = scalar_lea.vmem %s3, 32
  %649 = vst [vmem:[%s648] sm:$0xff] %v282
  %s650 = scalar_lea.vmem %s3, 40
  %651 = vst [vmem:[%s650] sm:$0xff] %v284
  %s652 = scalar_lea.vmem %s3, 48
  %653 = vst [vmem:[%s652] sm:$0xff] %v353
  %s654 = scalar_lea.vmem %s3, 56
  %655 = vst [vmem:[%s654] sm:$0xff] %v355
  %s656 = scalar_lea.vmem %s3, 64
  %657 = vst [vmem:[%s656] sm:$0xff] %v424
  %s658 = scalar_lea.vmem %s3, 72
  %659 = vst [vmem:[%s658] sm:$0xff] %v426
  %s660 = scalar_lea.vmem %s3, 80
  %661 = vst [vmem:[%s660] sm:$0xff] %v495
  %s662 = scalar_lea.vmem %s3, 88
  %663 = vst [vmem:[%s662] sm:$0xff] %v497
  %s664 = scalar_lea.vmem %s3, 96
  %665 = vst [vmem:[%s664] sm:$0xff] %v566
  %s666 = scalar_lea.vmem %s3, 104
  %667 = vst [vmem:[%s666] sm:$0xff] %v568
  %s668 = scalar_lea.vmem %s3, 112
  %669 = vst [vmem:[%s668] sm:$0xff] %v637
  %s670 = scalar_lea.vmem %s3, 120
  %671 = vst [vmem:[%s670] sm:$0xff] %v639
  // Predicated region
  $region14: #{pixelrnn_forward.4} parent=0 // pred_check
    _
  $region15: #{pixelrnn_forward.4} parent=0 // pred_check_branch
    %673 = sbr.rel (0) target = $region17
  $region16: #{pixelrnn_forward.4} parent=0 // pred_region
    _
  $region17: #{pixelrnn_forward.4} parent=0 // pred_fallthru
    _
  // Predicated region
  $region18: #{pixelrnn_forward.4} parent=0 // pred_check
    _
  $region19: #{pixelrnn_forward.4} parent=0 // pred_check_branch
    %675 = sbr.rel (0) target = $region21
  $region20: #{pixelrnn_forward.4} parent=0 // pred_region
    _
  $region21: #{pixelrnn_forward.4} parent=0 // pred_fallthru
    _

// kernel: pixelrnn_forward.7
$region0: #{pixelrnn_forward.7}
  #allocation0 [shape = 'u32[]', space=smem, size = 0x4, offset = 0x4, fixed_abs, tag = 'smem constant byte address 0x4 - core index']
  #allocation1 [shape = 'u32[144,128]{1,0:T(1,128)}', space=vmem, size = 0x12000, scoped, tag = 'internal scratch']
  %s0 = inlined_call_operand.vmem [shape: f32[8,512], index: 0, kind: input, shape index: {}]
  %s1 = inlined_call_operand.vmem [shape: f32[10,8], index: 1, kind: input, shape index: {}]
  %s2 = inlined_call_operand.vmem [shape: f32[10,1], index: 2, kind: input, shape index: {}]
  %s3 = inlined_call_operand.vmem [shape: f32[10,512], index: 3, kind: output, shape index: {}]
  %s4 = sld [smem:[#allocation0]]
  $region22: #{pixelrnn_forward.7} parent=0
    _
  %s6 = ssub.s32 1, %s4
  %s7 = scalar_select 0, %s6, %s4
  // Predicated region
  $region2: #{pixelrnn_forward.7} parent=0 // pred_check
    _
  $region3: #{pixelrnn_forward.7} parent=0 // pred_check_branch
    %9 = sbr.rel (0) target = $region5
  $region4: #{pixelrnn_forward.7} parent=0 // pred_region
    _
  $region5: #{pixelrnn_forward.7} parent=0 // pred_fallthru
    _
  // Predicated region
  $region6: #{pixelrnn_forward.7} parent=0 // pred_check
    _
  $region7: #{pixelrnn_forward.7} parent=0 // pred_check_branch
    %11 = sbr.rel (0) target = $region9
  $region8: #{pixelrnn_forward.7} parent=0 // pred_region
    _
  $region9: #{pixelrnn_forward.7} parent=0 // pred_fallthru
    _
  // Predicated region
  $region10: #{pixelrnn_forward.7} parent=0 // pred_check
    _
  $region11: #{pixelrnn_forward.7} parent=0 // pred_check_branch
    %13 = sbr.rel (0) target = $region13
  $region12: #{pixelrnn_forward.7} parent=0 // pred_region
    _
  $region13: #{pixelrnn_forward.7} parent=0 // pred_fallthru
    _
  %v14 = vld [vmem:[%s1] sm:$0xff]
  %v15 = vld [vmem:[%s1 + $0x8] sm:$0x3]
  %v16 = vld [vmem:[%s0] sm:$0xff]
  %v17 = vld [vmem:[%s0 + $0x8] sm:$0xff]
  %v18 = vld [vmem:[%s0 + $0x10] sm:$0xff]
  %v19 = vld [vmem:[%s0 + $0x18] sm:$0xff]
  %v20 = vld [vmem:[%s2] sm:$0xff]
  %v21 = vld [vmem:[%s2 + $0x8] sm:$0x3]
  %23 = vset.pattern.permute.xlu0 0
  %24 = vperm.xlu0 %23, %v20
  %v25 = vpop.permute.xlu0 %24
  %28 = vset.pattern.permute.xlu0 0
  %29 = vperm.xlu0 %28, %v21
  %v30 = vpop.permute.xlu0 %29
  %vm32 = vcmask 64512
  %v34 = vsel %vm32, %v14, 0
  %v37 = vsel %vm32, %v15, 0
  %39 = vmatprep.subr.mxu0 0.0
  %40 = vmatpush1.msra.mxu0 0.0
  %41 = vmatprep.subr.mxu0 0.0
  %42 = vmatpush1.msra.mxu0 0.0
  %43 = vmatprep.subr.mxu0 0.0
  %44 = vmatpush1.msra.mxu0 0.0
  %45 = vmatprep.subr.mxu0 0.0
  %46 = vmatpush1.msra.mxu0 0.0
  %47 = vmatprep.subr.mxu0 0.0
  %48 = vmatpush1.msra.mxu0 0.0
  %49 = vmatprep.subr.mxu0 0.0
  %50 = vmatpush1.msra.mxu0 0.0
  %51 = vmatprep.subr.mxu0 0.0
  %52 = vmatpush1.msra.mxu0 0.0
  %53 = vmatprep.subr.mxu0 0.0
  %54 = vmatpush1.msra.mxu0 0.0
  %55 = vmatprep.subr.mxu0 0.0
  %56 = vmatpush1.msra.mxu0 0.0
  %57 = vmatprep.subr.mxu0 0.0
  %58 = vmatpush1.msra.mxu0 0.0
  %59 = vmatprep.subr.mxu0 0.0
  %60 = vmatpush1.msra.mxu0 0.0
  %61 = vmatprep.subr.mxu0 0.0
  %62 = vmatpush1.msra.mxu0 0.0
  %63 = vmatprep.subr.mxu0 0.0
  %64 = vmatpush1.msra.mxu0 0.0
  %65 = vmatprep.subr.mxu0 0.0
  %66 = vmatpush1.msra.mxu0 0.0
  %67 = vmatprep.subr.mxu0 0.0
  %68 = vmatpush1.msra.mxu0 0.0
  %69 = vmatprep.subr.mxu0 %v17
  %70 = vmatpush1.msra.mxu0 %v16
  %71 = vmatprep.subr.mxu0 0.0
  %72 = vmatpush2.msra.mxu0 0.0
  %73 = vmatprep.subr.mxu0 0.0
  %74 = vmatpush2.msra.mxu0 0.0
  %75 = vmatprep.subr.mxu0 0.0
  %76 = vmatpush2.msra.mxu0 0.0
  %77 = vmatprep.subr.mxu0 0.0
  %78 = vmatpush2.msra.mxu0 0.0
  %79 = vmatprep.subr.mxu0 0.0
  %80 = vmatpush2.msra.mxu0 0.0
  %81 = vmatprep.subr.mxu0 0.0
  %82 = vmatpush2.msra.mxu0 0.0
  %83 = vmatprep.subr.mxu0 0.0
  %84 = vmatpush2.msra.mxu0 0.0
  %85 = vmatprep.subr.mxu0 0.0
  %86 = vmatpush2.msra.mxu0 0.0
  %87 = vmatprep.subr.mxu0 0.0
  %88 = vmatpush2.msra.mxu0 0.0
  %89 = vmatprep.subr.mxu0 0.0
  %90 = vmatpush2.msra.mxu0 0.0
  %91 = vmatprep.subr.mxu0 0.0
  %92 = vmatpush2.msra.mxu0 0.0
  %93 = vmatprep.subr.mxu0 0.0
  %94 = vmatpush2.msra.mxu0 0.0
  %95 = vmatprep.subr.mxu0 0.0
  %96 = vmatpush2.msra.mxu0 0.0
  %97 = vmatprep.subr.mxu0 0.0
  %98 = vmatpush2.msra.mxu0 0.0
  %99 = vmatprep.subr.mxu0 0.0
  %100 = vmatpush2.msra.mxu0 0.0
  %101 = vmatprep.subr.mxu0 0.0
  %102 = vmatpush2.msra.mxu0 0.0
  %103 = vmatprep.mubr.f32.mxu0 0.0
  %104 = vmatmul.mubr.f32.gmra.mxu0 %v34
  %v105 = vpop.f32.mrf.mxu0
  %v106 = vadd.f32 %v25, %v105
  %v107 = vpop.f32.mrf.mxu0
  %v108 = vadd.f32 %v25, %v107
  %109 = vmatprep.mubr.f32.mxu0 0.0
  %110 = vmatmul.mubr.f32.gmra.mxu0 %v37
  %v111 = vpop.f32.mrf.mxu0
  %v112 = vadd.f32 %v30, %v111
  %v113 = vpop.f32.mrf.mxu0
  %v114 = vadd.f32 %v30, %v113
  %115 = vdwg.mxu0
  %116 = vmatprep.subr.mxu0 0.0
  %117 = vmatpush1.msra.mxu0 0.0
  %118 = vmatprep.subr.mxu0 0.0
  %119 = vmatpush1.msra.mxu0 0.0
  %120 = vmatprep.subr.mxu0 0.0
  %121 = vmatpush1.msra.mxu0 0.0
  %122 = vmatprep.subr.mxu0 0.0
  %123 = vmatpush1.msra.mxu0 0.0
  %124 = vmatprep.subr.mxu0 0.0
  %125 = vmatpush1.msra.mxu0 0.0
  %126 = vmatprep.subr.mxu0 0.0
  %127 = vmatpush1.msra.mxu0 0.0
  %128 = vmatprep.subr.mxu0 0.0
  %129 = vmatpush1.msra.mxu0 0.0
  %130 = vmatprep.subr.mxu0 0.0
  %131 = vmatpush1.msra.mxu0 0.0
  %132 = vmatprep.subr.mxu0 0.0
  %133 = vmatpush1.msra.mxu0 0.0
  %134 = vmatprep.subr.mxu0 0.0
  %135 = vmatpush1.msra.mxu0 0.0
  %136 = vmatprep.subr.mxu0 0.0
  %137 = vmatpush1.msra.mxu0 0.0
  %138 = vmatprep.subr.mxu0 0.0
  %139 = vmatpush1.msra.mxu0 0.0
  %140 = vmatprep.subr.mxu0 0.0
  %141 = vmatpush1.msra.mxu0 0.0
  %142 = vmatprep.subr.mxu0 0.0
  %143 = vmatpush1.msra.mxu0 0.0
  %144 = vmatprep.subr.mxu0 0.0
  %145 = vmatpush1.msra.mxu0 0.0
  %146 = vmatprep.subr.mxu0 %v19
  %147 = vmatpush1.msra.mxu0 %v18
  %148 = vmatprep.subr.mxu0 0.0
  %149 = vmatpush2.msra.mxu0 0.0
  %150 = vmatprep.subr.mxu0 0.0
  %151 = vmatpush2.msra.mxu0 0.0
  %152 = vmatprep.subr.mxu0 0.0
  %153 = vmatpush2.msra.mxu0 0.0
  %154 = vmatprep.subr.mxu0 0.0
  %155 = vmatpush2.msra.mxu0 0.0
  %156 = vmatprep.subr.mxu0 0.0
  %157 = vmatpush2.msra.mxu0 0.0
  %158 = vmatprep.subr.mxu0 0.0
  %159 = vmatpush2.msra.mxu0 0.0
  %160 = vmatprep.subr.mxu0 0.0
  %161 = vmatpush2.msra.mxu0 0.0
  %162 = vmatprep.subr.mxu0 0.0
  %163 = vmatpush2.msra.mxu0 0.0
  %164 = vmatprep.subr.mxu0 0.0
  %165 = vmatpush2.msra.mxu0 0.0
  %166 = vmatprep.subr.mxu0 0.0
  %167 = vmatpush2.msra.mxu0 0.0
  %168 = vmatprep.subr.mxu0 0.0
  %169 = vmatpush2.msra.mxu0 0.0
  %170 = vmatprep.subr.mxu0 0.0
  %171 = vmatpush2.msra.mxu0 0.0
  %172 = vmatprep.subr.mxu0 0.0
  %173 = vmatpush2.msra.mxu0 0.0
  %174 = vmatprep.subr.mxu0 0.0
  %175 = vmatpush2.msra.mxu0 0.0
  %176 = vmatprep.subr.mxu0 0.0
  %177 = vmatpush2.msra.mxu0 0.0
  %178 = vmatprep.subr.mxu0 0.0
  %179 = vmatpush2.msra.mxu0 0.0
  %180 = vmatprep.mubr.f32.mxu0 0.0
  %181 = vmatmul.mubr.f32.gmra.mxu0 %v34
  %v182 = vpop.f32.mrf.mxu0
  %v183 = vadd.f32 %v25, %v182
  %v184 = vpop.f32.mrf.mxu0
  %v185 = vadd.f32 %v25, %v184
  %186 = vmatprep.mubr.f32.mxu0 0.0
  %187 = vmatmul.mubr.f32.gmra.mxu0 %v37
  %v188 = vpop.f32.mrf.mxu0
  %v189 = vadd.f32 %v30, %v188
  %v190 = vpop.f32.mrf.mxu0
  %v191 = vadd.f32 %v30, %v190
  %192 = vdwg.mxu0
  %v193 = vxor.u32 %v106, 2147483648
  %v194 = vxor.u32 %v108, 2147483648
  %v195 = vxor.u32 %v183, 2147483648
  %v196 = vxor.u32 %v185, 2147483648
  %v197 = vxor.u32 %v112, 2147483648
  %v198 = vxor.u32 %v114, 2147483648
  %v199 = vxor.u32 %v189, 2147483648
  %v200 = vxor.u32 %v191, 2147483648
  %v201 = vmul.f32 %v193, 1.442695
  %v202 = vpow.pop %v201
  %v203 = vmul.f32 %v194, 1.442695
  %v204 = vpow.pop %v203
  %v205 = vmul.f32 %v195, 1.442695
  %v206 = vpow.pop %v205
  %v207 = vmul.f32 %v196, 1.442695
  %v208 = vpow.pop %v207
  %v209 = vmul.f32 %v197, 1.442695
  %v210 = vpow.pop %v209
  %v211 = vmul.f32 %v198, 1.442695
  %v212 = vpow.pop %v211
  %v213 = vmul.f32 %v199, 1.442695
  %v214 = vpow.pop %v213
  %v215 = vmul.f32 %v200, 1.442695
  %v216 = vpow.pop %v215
  %v217 = vadd.f32 %v202, 1.0
  %v218 = vadd.f32 %v204, 1.0
  %v219 = vadd.f32 %v206, 1.0
  %v220 = vadd.f32 %v208, 1.0
  %v221 = vadd.f32 %v210, 1.0
  %v222 = vadd.f32 %v212, 1.0
  %v223 = vadd.f32 %v214, 1.0
  %v224 = vadd.f32 %v216, 1.0
  %v225 = vrcp.pop %v217
  %v226 = vmul.f32 1.0, %v225
  %v227 = vrcp.pop %v218
  %v228 = vmul.f32 1.0, %v227
  %v229 = vrcp.pop %v219
  %v230 = vmul.f32 1.0, %v229
  %v231 = vrcp.pop %v220
  %v232 = vmul.f32 1.0, %v231
  %v233 = vrcp.pop %v221
  %v234 = vmul.f32 1.0, %v233
  %v235 = vrcp.pop %v222
  %v236 = vmul.f32 1.0, %v235
  %v237 = vrcp.pop %v223
  %v238 = vmul.f32 1.0, %v237
  %v239 = vrcp.pop %v224
  %v240 = vmul.f32 1.0, %v239
  %241 = vst [vmem:[%s3] sm:$0xff] %v226
  %242 = vst [vmem:[%s3 + $0x8] sm:$0xff] %v228
  %243 = vst [vmem:[%s3 + $0x10] sm:$0xff] %v230
  %244 = vst [vmem:[%s3 + $0x18] sm:$0xff] %v232
  %245 = vst [vmem:[%s3 + $0x20] sm:$0x3] %v234
  %246 = vst [vmem:[%s3 + $0x28] sm:$0x3] %v236
  %247 = vst [vmem:[%s3 + $0x30] sm:$0x3] %v238
  %248 = vst [vmem:[%s3 + $0x38] sm:$0x3] %v240
  // Predicated region
  $region14: #{pixelrnn_forward.7} parent=0 // pred_check
    _
  $region15: #{pixelrnn_forward.7} parent=0 // pred_check_branch
    %250 = sbr.rel (0) target = $region17
  $region16: #{pixelrnn_forward.7} parent=0 // pred_region
    _
  $region17: #{pixelrnn_forward.7} parent=0 // pred_fallthru
    _
  // Predicated region
  $region18: #{pixelrnn_forward.7} parent=0 // pred_check
    _
  $region19: #{pixelrnn_forward.7} parent=0 // pred_check_branch
    %252 = sbr.rel (0) target = $region21
  $region20: #{pixelrnn_forward.7} parent=0 // pred_region
    _
  $region21: #{pixelrnn_forward.7} parent=0 // pred_fallthru
    _

// kernel: pixelrnn_forward.5
$region0: #{pixelrnn_forward.5}
  #allocation0 [shape = 'u32[]', space=smem, size = 0x4, offset = 0x4, fixed_abs, tag = 'smem constant byte address 0x4 - core index']
  #allocation1 [shape = 'u32[144,128]{1,0:T(1,128)}', space=vmem, size = 0x12000, scoped, tag = 'internal scratch']
  #allocation2 [shape = 'f32[40,128]{1,0:T(8,128)}', space=vmem, size = 0x5000, scoped, tag = 'scratch operand']
  #allocation3 [shape = 'f32[8,128]{1,0:T(8,128)}', space=vmem, size = 0x1000, scoped, tag = 'scratch operand']
  %s0 = inlined_call_operand.vmem [shape: f32[16,8,128], index: 0, kind: input, shape index: {}]
  %s1 = inlined_call_operand.vmem [shape: f32[32,40], index: 1, kind: input, shape index: {}]
  %s2 = inlined_call_operand.vmem [shape: f32[32,1], index: 2, kind: input, shape index: {}]
  %s3 = inlined_call_operand.vmem [shape: f32[2,128], index: 3, kind: input, shape index: {}]
  %s4 = inlined_call_operand.vmem [shape: f32[16,8,128], index: 4, kind: output, shape index: {}]
  %s5 = sld [smem:[#allocation0]]
  $region26: #{pixelrnn_forward.5} parent=0
    _
  %s7 = ssub.s32 1, %s5
  %s8 = scalar_select 0, %s7, %s5
  // Predicated region
  $region2: #{pixelrnn_forward.5} parent=0 // pred_check
    _
  $region3: #{pixelrnn_forward.5} parent=0 // pred_check_branch
    %10 = sbr.rel (0) target = $region5
  $region4: #{pixelrnn_forward.5} parent=0 // pred_region
    _
  $region5: #{pixelrnn_forward.5} parent=0 // pred_fallthru
    _
  // Predicated region
  $region6: #{pixelrnn_forward.5} parent=0 // pred_check
    _
  $region7: #{pixelrnn_forward.5} parent=0 // pred_check_branch
    %12 = sbr.rel (0) target = $region9
  $region8: #{pixelrnn_forward.5} parent=0 // pred_region
    _
  $region9: #{pixelrnn_forward.5} parent=0 // pred_fallthru
    _
  // Predicated region
  $region10: #{pixelrnn_forward.5} parent=0 // pred_check
    _
  $region11: #{pixelrnn_forward.5} parent=0 // pred_check_branch
    %14 = sbr.rel (0) target = $region13
  $region12: #{pixelrnn_forward.5} parent=0 // pred_region
    _
  $region13: #{pixelrnn_forward.5} parent=0 // pred_fallthru
    _
  // Predicated region
  $region14: #{pixelrnn_forward.5} parent=0 // pred_check
    _
  $region15: #{pixelrnn_forward.5} parent=0 // pred_check_branch
    %16 = sbr.rel (0) target = $region17
  $region16: #{pixelrnn_forward.5} parent=0 // pred_region
    _
  $region17: #{pixelrnn_forward.5} parent=0 // pred_fallthru
    _
  %v17 = vld [vmem:[%s1] sm:$0xff]
  %v18 = vld [vmem:[%s1 + $0x8] sm:$0xff]
  %v19 = vld [vmem:[%s1 + $0x10] sm:$0xff]
  %v20 = vld [vmem:[%s1 + $0x18] sm:$0xff]
  %v21 = vld [vmem:[%s2] sm:$0xff]
  %v22 = vld [vmem:[%s2 + $0x8] sm:$0xff]
  %v23 = vld [vmem:[%s2 + $0x10] sm:$0xff]
  %v24 = vld [vmem:[%s2 + $0x18] sm:$0xff]
  %v25 = vld [vmem:[%s3] sm:$0x3]
  %26 = vst [vmem:[#allocation3] sm:$0xff] 0.0
  %27 = vst [vmem:[#allocation2] sm:$0xff] 0.0
  %28 = vst [vmem:[#allocation2 + $0x8] sm:$0xff] 0.0
  %29 = vst [vmem:[#allocation2 + $0x10] sm:$0xff] 0.0
  %30 = vst [vmem:[#allocation2 + $0x18] sm:$0xff] 0.0
  %31 = vst [vmem:[#allocation2 + $0x20] sm:$0xff] 0.0
  %v32 = vld [vmem:[%s0] sm:$0xff]
  %33 = vrot.lane.b32.xlu0 %v32, 1
  %v34 = vpop.permute.xlu0 %33
  %v35 = vlaneseq
  %v36 = vshrl.u32 %v35, 7
  %v37 = vsub.s32 0, %v36
  %v38 = vrot.slane %v25, %v37
  %v39 = vmul.f32 %v34, %v38
  %40 = vst [vmem:[#allocation2] sm:$0xff] %v39
  %41 = vst [vmem:[#allocation2 + $0x8] sm:$0xff] %v32
  %v42 = vld [vmem:[#allocation2] sm:$0xff]
  %v43 = vld [vmem:[#allocation2 + $0x8] sm:$0xff]
  %v44 = vld [vmem:[#allocation2 + $0x10] sm:$0xff]
  %v45 = vld [vmem:[#allocation2 + $0x18] sm:$0xff]
  %v46 = vld [vmem:[#allocation2 + $0x20] sm:$0xff]
  %48 = vset.pattern.permute.xlu0 0
  %49 = vperm.xlu0 %48, %v21
  %v50 = vpop.permute.xlu0 %49
  %53 = vset.pattern.permute.xlu0 0
  %54 = vperm.xlu0 %53, %v22
  %v55 = vpop.permute.xlu0 %54
  %58 = vset.pattern.permute.xlu0 0
  %59 = vperm.xlu0 %58, %v23
  %v60 = vpop.permute.xlu0 %59
  %63 = vset.pattern.permute.xlu0 0
  %64 = vperm.xlu0 %63, %v24
  %v65 = vpop.permute.xlu0 %64
  %vm67 = vcmask 326656
  %v69 = vsel %vm67, %v17, 0
  %v72 = vsel %vm67, %v18, 0
  %v75 = vsel %vm67, %v19, 0
  %v78 = vsel %vm67, %v20, 0
  %80 = vmatprep.subr.mxu0 0.0
  %81 = vmatpush1.msra.mxu0 0.0
  %82 = vmatprep.subr.mxu0 0.0
  %83 = vmatpush1.msra.mxu0 0.0
  %84 = vmatprep.subr.mxu0 0.0
  %85 = vmatpush1.msra.mxu0 0.0
  %86 = vmatprep.subr.mxu0 0.0
  %87 = vmatpush1.msra.mxu0 0.0
  %88 = vmatprep.subr.mxu0 0.0
  %89 = vmatpush1.msra.mxu0 0.0
  %90 = vmatprep.subr.mxu0 0.0
  %91 = vmatpush1.msra.mxu0 0.0
  %92 = vmatprep.subr.mxu0 0.0
  %93 = vmatpush1.msra.mxu0 0.0
  %94 = vmatprep.subr.mxu0 0.0
  %95 = vmatpush1.msra.mxu0 0.0
  %96 = vmatprep.subr.mxu0 0.0
  %97 = vmatpush1.msra.mxu0 0.0
  %98 = vmatprep.subr.mxu0 0.0
  %99 = vmatpush1.msra.mxu0 0.0
  %100 = vmatprep.subr.mxu0 0.0
  %101 = vmatpush1.msra.mxu0 0.0
  %102 = vmatprep.subr.mxu0 0.0
  %103 = vmatpush1.msra.mxu0 %v46
  %104 = vmatprep.subr.mxu0 0.0
  %105 = vmatpush1.msra.mxu0 %v45
  %106 = vmatprep.subr.mxu0 0.0
  %107 = vmatpush1.msra.mxu0 %v44
  %108 = vmatprep.subr.mxu0 0.0
  %109 = vmatpush1.msra.mxu0 %v43
  %110 = vmatprep.subr.mxu0 0.0
  %111 = vmatpush1.msra.mxu0 %v42
  %112 = vmatprep.subr.mxu0 0.0
  %113 = vmatpush2.msra.mxu0 0.0
  %114 = vmatprep.subr.mxu0 0.0
  %115 = vmatpush2.msra.mxu0 0.0
  %116 = vmatprep.subr.mxu0 0.0
  %117 = vmatpush2.msra.mxu0 0.0
  %118 = vmatprep.subr.mxu0 0.0
  %119 = vmatpush2.msra.mxu0 0.0
  %120 = vmatprep.subr.mxu0 0.0
  %121 = vmatpush2.msra.mxu0 0.0
  %122 = vmatprep.subr.mxu0 0.0
  %123 = vmatpush2.msra.mxu0 0.0
  %124 = vmatprep.subr.mxu0 0.0
  %125 = vmatpush2.msra.mxu0 0.0
  %126 = vmatprep.subr.mxu0 0.0
  %127 = vmatpush2.msra.mxu0 0.0
  %128 = vmatprep.subr.mxu0 0.0
  %129 = vmatpush2.msra.mxu0 0.0
  %130 = vmatprep.subr.mxu0 0.0
  %131 = vmatpush2.msra.mxu0 0.0
  %132 = vmatprep.subr.mxu0 0.0
  %133 = vmatpush2.msra.mxu0 0.0
  %134 = vmatprep.subr.mxu0 0.0
  %135 = vmatpush2.msra.mxu0 0.0
  %136 = vmatprep.subr.mxu0 0.0
  %137 = vmatpush2.msra.mxu0 0.0
  %138 = vmatprep.subr.mxu0 0.0
  %139 = vmatpush2.msra.mxu0 0.0
  %140 = vmatprep.subr.mxu0 0.0
  %141 = vmatpush2.msra.mxu0 0.0
  %142 = vmatprep.subr.mxu0 0.0
  %143 = vmatpush2.msra.mxu0 0.0
  %144 = vmatprep.mubr.f32.mxu0 0.0
  %145 = vmatmul.mubr.f32.gmra.mxu0 %v69
  %v146 = vpop.f32.mrf.mxu0
  %v147 = vadd.f32 %v50, %v146
  %v148 = vpop.f32.mrf.mxu0
  %149 = vmatprep.mubr.f32.mxu0 0.0
  %150 = vmatmul.mubr.f32.gmra.mxu0 %v72
  %v151 = vpop.f32.mrf.mxu0
  %v152 = vadd.f32 %v55, %v151
  %v153 = vpop.f32.mrf.mxu0
  %154 = vmatprep.mubr.f32.mxu0 0.0
  %155 = vmatmul.mubr.f32.gmra.mxu0 %v75
  %v156 = vpop.f32.mrf.mxu0
  %v157 = vadd.f32 %v60, %v156
  %v158 = vpop.f32.mrf.mxu0
  %159 = vmatprep.mubr.f32.mxu0 0.0
  %160 = vmatmul.mubr.f32.gmra.mxu0 %v78
  %v161 = vpop.f32.mrf.mxu0
  %v162 = vadd.f32 %v65, %v161
  %v163 = vpop.f32.mrf.mxu0
  %164 = vdwg.mxu0
  %v165 = vxor.u32 %v147, 2147483648
  %v166 = vxor.u32 %v152, 2147483648
  %v167 = vxor.u32 %v157, 2147483648
  %v168 = vxor.u32 %v162, 2147483648
  %v169 = vmul.f32 %v165, 1.442695
  %v170 = vpow.pop %v169
  %v171 = vmul.f32 %v166, 1.442695
  %v172 = vpow.pop %v171
  %v173 = vmul.f32 %v167, 1.442695
  %v174 = vpow.pop %v173
  %v175 = vmul.f32 %v168, 1.442695
  %v176 = vpow.pop %v175
  %v177 = vadd.f32 %v170, 1.0
  %v178 = vadd.f32 %v172, 1.0
  %v179 = vadd.f32 %v174, 1.0
  %v180 = vadd.f32 %v176, 1.0
  %v181 = vrcp.pop %v177
  %v182 = vmul.f32 1.0, %v181
  %v183 = vrcp.pop %v178
  %v184 = vmul.f32 1.0, %v183
  %v185 = vrcp.pop %v179
  %v186 = vmul.f32 1.0, %v185
  %v187 = vrcp.pop %v180
  %v188 = vmul.f32 1.0, %v187
  %v189 = vld [vmem:[#allocation3] sm:$0xff]
  %v190 = vmul.f32 %v186, %v189
  %v191 = vmul.f32 %v182, %v184
  %v192 = vadd.f32 %v190, %v191
  %v193 = vtanh.pop %v192
  %v194 = vmul.f32 %v188, %v193
  %195 = vst [vmem:[#allocation3] sm:$0xff] %v192
  %196 = vst [vmem:[%s4] sm:$0xff] %v194
  %197 = vrot.lane.b32.xlu0 %v194, 1
  %v198 = vpop.permute.xlu0 %197
  %v199 = vmul.f32 %v198, %v38
  %200 = vst [vmem:[#allocation2 + $0x10] sm:$0xff] %v199
  %201 = vst [vmem:[#allocation2 + $0x18] sm:$0xff] %v194
  %202 = vrot.lane.b32.xlu0 %v194, 127
  %v203 = vpop.permute.xlu0 %202
  %v204 = vlaneseq
  %v205 = vshrl.u32 %v204, 7
  %v206 = vsub.s32 1, %v205
  %v207 = vrot.slane %v25, %v206
  %v208 = vmul.f32 %v203, %v207
  %209 = vst [vmem:[#allocation2 + $0x20] sm:$0xff] %v208
  %s210 = scalar_lea.vmem %s0, 8
  %v211 = vld [vmem:[%s210] sm:$0xff]
  %212 = vrot.lane.b32.xlu0 %v211, 1
  %v213 = vpop.permute.xlu0 %212
  %v214 = vmul.f32 %v213, %v38
  %215 = vst [vmem:[#allocation2] sm:$0xff] %v214
  %216 = vst [vmem:[#allocation2 + $0x8] sm:$0xff] %v211
  %v217 = vld [vmem:[#allocation2] sm:$0xff]
  %v218 = vld [vmem:[#allocation2 + $0x8] sm:$0xff]
  %v219 = vld [vmem:[#allocation2 + $0x10] sm:$0xff]
  %v220 = vld [vmem:[#allocation2 + $0x18] sm:$0xff]
  %v221 = vld [vmem:[#allocation2 + $0x20] sm:$0xff]
  %222 = vmatprep.subr.mxu0 0.0
  %223 = vmatpush1.msra.mxu0 0.0
  %224 = vmatprep.subr.mxu0 0.0
  %225 = vmatpush1.msra.mxu0 0.0
  %226 = vmatprep.subr.mxu0 0.0
  %227 = vmatpush1.msra.mxu0 0.0
  %228 = vmatprep.subr.mxu0 0.0
  %229 = vmatpush1.msra.mxu0 0.0
  %230 = vmatprep.subr.mxu0 0.0
  %231 = vmatpush1.msra.mxu0 0.0
  %232 = vmatprep.subr.mxu0 0.0
  %233 = vmatpush1.msra.mxu0 0.0
  %234 = vmatprep.subr.mxu0 0.0
  %235 = vmatpush1.msra.mxu0 0.0
  %236 = vmatprep.subr.mxu0 0.0
  %237 = vmatpush1.msra.mxu0 0.0
  %238 = vmatprep.subr.mxu0 0.0
  %239 = vmatpush1.msra.mxu0 0.0
  %240 = vmatprep.subr.mxu0 0.0
  %241 = vmatpush1.msra.mxu0 0.0
  %242 = vmatprep.subr.mxu0 0.0
  %243 = vmatpush1.msra.mxu0 0.0
  %244 = vmatprep.subr.mxu0 0.0
  %245 = vmatpush1.msra.mxu0 %v221
  %246 = vmatprep.subr.mxu0 0.0
  %247 = vmatpush1.msra.mxu0 %v220
  %248 = vmatprep.subr.mxu0 0.0
  %249 = vmatpush1.msra.mxu0 %v219
  %250 = vmatprep.subr.mxu0 0.0
  %251 = vmatpush1.msra.mxu0 %v218
  %252 = vmatprep.subr.mxu0 0.0
  %253 = vmatpush1.msra.mxu0 %v217
  %254 = vmatprep.subr.mxu0 0.0
  %255 = vmatpush2.msra.mxu0 0.0
  %256 = vmatprep.subr.mxu0 0.0
  %257 = vmatpush2.msra.mxu0 0.0
  %258 = vmatprep.subr.mxu0 0.0
  %259 = vmatpush2.msra.mxu0 0.0
  %260 = vmatprep.subr.mxu0 0.0
  %261 = vmatpush2.msra.mxu0 0.0
  %262 = vmatprep.subr.mxu0 0.0
  %263 = vmatpush2.msra.mxu0 0.0
  %264 = vmatprep.subr.mxu0 0.0
  %265 = vmatpush2.msra.mxu0 0.0
  %266 = vmatprep.subr.mxu0 0.0
  %267 = vmatpush2.msra.mxu0 0.0
  %268 = vmatprep.subr.mxu0 0.0
  %269 = vmatpush2.msra.mxu0 0.0
  %270 = vmatprep.subr.mxu0 0.0
  %271 = vmatpush2.msra.mxu0 0.0
  %272 = vmatprep.subr.mxu0 0.0
  %273 = vmatpush2.msra.mxu0 0.0
  %274 = vmatprep.subr.mxu0 0.0
  %275 = vmatpush2.msra.mxu0 0.0
  %276 = vmatprep.subr.mxu0 0.0
  %277 = vmatpush2.msra.mxu0 0.0
  %278 = vmatprep.subr.mxu0 0.0
  %279 = vmatpush2.msra.mxu0 0.0
  %280 = vmatprep.subr.mxu0 0.0
  %281 = vmatpush2.msra.mxu0 0.0
  %282 = vmatprep.subr.mxu0 0.0
  %283 = vmatpush2.msra.mxu0 0.0
  %284 = vmatprep.subr.mxu0 0.0
  %285 = vmatpush2.msra.mxu0 0.0
  %286 = vmatprep.mubr.f32.mxu0 0.0
  %287 = vmatmul.mubr.f32.gmra.mxu0 %v69
  %v288 = vpop.f32.mrf.mxu0
  %v289 = vadd.f32 %v50, %v288
  %v290 = vpop.f32.mrf.mxu0
  %291 = vmatprep.mubr.f32.mxu0 0.0
  %292 = vmatmul.mubr.f32.gmra.mxu0 %v72
  %v293 = vpop.f32.mrf.mxu0
  %v294 = vadd.f32 %v55, %v293
  %v295 = vpop.f32.mrf.mxu0
  %296 = vmatprep.mubr.f32.mxu0 0.0
  %297 = vmatmul.mubr.f32.gmra.mxu0 %v75
  %v298 = vpop.f32.mrf.mxu0
  %v299 = vadd.f32 %v60, %v298
  %v300 = vpop.f32.mrf.mxu0
  %301 = vmatprep.mubr.f32.mxu0 0.0
  %302 = vmatmul.mubr.f32.gmra.mxu0 %v78
  %v303 = vpop.f32.mrf.mxu0
  %v304 = vadd.f32 %v65, %v303
  %v305 = vpop.f32.mrf.mxu0
  %306 = vdwg.mxu0
  %v307 = vxor.u32 %v289, 2147483648
  %v308 = vxor.u32 %v294, 2147483648
  %v309 = vxor.u32 %v299, 2147483648
  %v310 = vxor.u32 %v304, 2147483648
  %v311 = vmul.f32 %v307, 1.442695
  %v312 = vpow.pop %v311
  %v313 = vmul.f32 %v308, 1.442695
  %v314 = vpow.pop %v313
  %v315 = vmul.f32 %v309, 1.442695
  %v316 = vpow.pop %v315
  %v317 = vmul.f32 %v310, 1.442695
  %v318 = vpow.pop %v317
  %v319 = vadd.f32 %v312, 1.0
  %v320 = vadd.f32 %v314, 1.0
  %v321 = vadd.f32 %v316, 1.0
  %v322 = vadd.f32 %v318, 1.0
  %v323 = vrcp.pop %v319
  %v324 = vmul.f32 1.0, %v323
  %v325 = vrcp.pop %v320
  %v326 = vmul.f32 1.0, %v325
  %v327 = vrcp.pop %v321
  %v328 = vmul.f32 1.0, %v327
  %v329 = vrcp.pop %v322
  %v330 = vmul.f32 1.0, %v329
  %v331 = vld [vmem:[#allocation3] sm:$0xff]
  %v332 = vmul.f32 %v328, %v331
  %v333 = vmul.f32 %v324, %v326
  %v334 = vadd.f32 %v332, %v333
  %v335 = vtanh.pop %v334
  %v336 = vmul.f32 %v330, %v335
  %337 = vst [vmem:[#allocation3] sm:$0xff] %v334
  %s338 = scalar_lea.vmem %s4, 8
  %339 = vst [vmem:[%s338] sm:$0xff] %v336
  %340 = vrot.lane.b32.xlu0 %v336, 1
  %v341 = vpop.permute.xlu0 %340
  %v342 = vmul.f32 %v341, %v38
  %343 = vst [vmem:[#allocation2 + $0x10] sm:$0xff] %v342
  %344 = vst [vmem:[#allocation2 + $0x18] sm:$0xff] %v336
  %345 = vrot.lane.b32.xlu0 %v336, 127
  %v346 = vpop.permute.xlu0 %345
  %v347 = vmul.f32 %v346, %v207
  %348 = vst [vmem:[#allocation2 + $0x20] sm:$0xff] %v347
  %s349 = scalar_lea.vmem %s0, 16
  %v350 = vld [vmem:[%s349] sm:$0xff]
  %351 = vrot.lane.b32.xlu0 %v350, 1
  %v352 = vpop.permute.xlu0 %351
  %v353 = vmul.f32 %v352, %v38
  %354 = vst [vmem:[#allocation2] sm:$0xff] %v353
  %355 = vst [vmem:[#allocation2 + $0x8] sm:$0xff] %v350
  %v356 = vld [vmem:[#allocation2] sm:$0xff]
  %v357 = vld [vmem:[#allocation2 + $0x8] sm:$0xff]
  %v358 = vld [vmem:[#allocation2 + $0x10] sm:$0xff]
  %v359 = vld [vmem:[#allocation2 + $0x18] sm:$0xff]
  %v360 = vld [vmem:[#allocation2 + $0x20] sm:$0xff]
  %361 = vmatprep.subr.mxu0 0.0
  %362 = vmatpush1.msra.mxu0 0.0
  %363 = vmatprep.subr.mxu0 0.0
  %364 = vmatpush1.msra.mxu0 0.0
  %365 = vmatprep.subr.mxu0 0.0
  %366 = vmatpush1.msra.mxu0 0.0
  %367 = vmatprep.subr.mxu0 0.0
  %368 = vmatpush1.msra.mxu0 0.0
  %369 = vmatprep.subr.mxu0 0.0
  %370 = vmatpush1.msra.mxu0 0.0
  %371 = vmatprep.subr.mxu0 0.0
  %372 = vmatpush1.msra.mxu0 0.0
  %373 = vmatprep.subr.mxu0 0.0
  %374 = vmatpush1.msra.mxu0 0.0
  %375 = vmatprep.subr.mxu0 0.0
  %376 = vmatpush1.msra.mxu0 0.0
  %377 = vmatprep.subr.mxu0 0.0
  %378 = vmatpush1.msra.mxu0 0.0
  %379 = vmatprep.subr.mxu0 0.0
  %380 = vmatpush1.msra.mxu0 0.0
  %381 = vmatprep.subr.mxu0 0.0
  %382 = vmatpush1.msra.mxu0 0.0
  %383 = vmatprep.subr.mxu0 0.0
  %384 = vmatpush1.msra.mxu0 %v360
  %385 = vmatprep.subr.mxu0 0.0
  %386 = vmatpush1.msra.mxu0 %v359
  %387 = vmatprep.subr.mxu0 0.0
  %388 = vmatpush1.msra.mxu0 %v358
  %389 = vmatprep.subr.mxu0 0.0
  %390 = vmatpush1.msra.mxu0 %v357
  %391 = vmatprep.subr.mxu0 0.0
  %392 = vmatpush1.msra.mxu0 %v356
  %393 = vmatprep.subr.mxu0 0.0
  %394 = vmatpush2.msra.mxu0 0.0
  %395 = vmatprep.subr.mxu0 0.0
  %396 = vmatpush2.msra.mxu0 0.0
  %397 = vmatprep.subr.mxu0 0.0
  %398 = vmatpush2.msra.mxu0 0.0
  %399 = vmatprep.subr.mxu0 0.0
  %400 = vmatpush2.msra.mxu0 0.0
  %401 = vmatprep.subr.mxu0 0.0
  %402 = vmatpush2.msra.mxu0 0.0
  %403 = vmatprep.subr.mxu0 0.0
  %404 = vmatpush2.msra.mxu0 0.0
  %405 = vmatprep.subr.mxu0 0.0
  %406 = vmatpush2.msra.mxu0 0.0
  %407 = vmatprep.subr.mxu0 0.0
  %408 = vmatpush2.msra.mxu0 0.0
  %409 = vmatprep.subr.mxu0 0.0
  %410 = vmatpush2.msra.mxu0 0.0
  %411 = vmatprep.subr.mxu0 0.0
  %412 = vmatpush2.msra.mxu0 0.0
  %413 = vmatprep.subr.mxu0 0.0
  %414 = vmatpush2.msra.mxu0 0.0
  %415 = vmatprep.subr.mxu0 0.0
  %416 = vmatpush2.msra.mxu0 0.0
  %417 = vmatprep.subr.mxu0 0.0
  %418 = vmatpush2.msra.mxu0 0.0
  %419 = vmatprep.subr.mxu0 0.0
  %420 = vmatpush2.msra.mxu0 0.0
  %421 = vmatprep.subr.mxu0 0.0
  %422 = vmatpush2.msra.mxu0 0.0
  %423 = vmatprep.subr.mxu0 0.0
  %424 = vmatpush2.msra.mxu0 0.0
  %425 = vmatprep.mubr.f32.mxu0 0.0
  %426 = vmatmul.mubr.f32.gmra.mxu0 %v69
  %v427 = vpop.f32.mrf.mxu0
  %v428 = vadd.f32 %v50, %v427
  %v429 = vpop.f32.mrf.mxu0
  %430 = vmatprep.mubr.f32.mxu0 0.0
  %431 = vmatmul.mubr.f32.gmra.mxu0 %v72
  %v432 = vpop.f32.mrf.mxu0
  %v433 = vadd.f32 %v55, %v432
  %v434 = vpop.f32.mrf.mxu0
  %435 = vmatprep.mubr.f32.mxu0 0.0
  %436 = vmatmul.mubr.f32.gmra.mxu0 %v75
  %v437 = vpop.f32.mrf.mxu0
  %v438 = vadd.f32 %v60, %v437
  %v439 = vpop.f32.mrf.mxu0
  %440 = vmatprep.mubr.f32.mxu0 0.0
  %441 = vmatmul.mubr.f32.gmra.mxu0 %v78
  %v442 = vpop.f32.mrf.mxu0
  %v443 = vadd.f32 %v65, %v442
  %v444 = vpop.f32.mrf.mxu0
  %445 = vdwg.mxu0
  %v446 = vxor.u32 %v428, 2147483648
  %v447 = vxor.u32 %v433, 2147483648
  %v448 = vxor.u32 %v438, 2147483648
  %v449 = vxor.u32 %v443, 2147483648
  %v450 = vmul.f32 %v446, 1.442695
  %v451 = vpow.pop %v450
  %v452 = vmul.f32 %v447, 1.442695
  %v453 = vpow.pop %v452
  %v454 = vmul.f32 %v448, 1.442695
  %v455 = vpow.pop %v454
  %v456 = vmul.f32 %v449, 1.442695
  %v457 = vpow.pop %v456
  %v458 = vadd.f32 %v451, 1.0
  %v459 = vadd.f32 %v453, 1.0
  %v460 = vadd.f32 %v455, 1.0
  %v461 = vadd.f32 %v457, 1.0
  %v462 = vrcp.pop %v458
  %v463 = vmul.f32 1.0, %v462
  %v464 = vrcp.pop %v459
  %v465 = vmul.f32 1.0, %v464
  %v466 = vrcp.pop %v460
  %v467 = vmul.f32 1.0, %v466
  %v468 = vrcp.pop %v461
  %v469 = vmul.f32 1.0, %v468
  %v470 = vld [vmem:[#allocation3] sm:$0xff]
  %v471 = vmul.f32 %v467, %v470
  %v472 = vmul.f32 %v463, %v465
  %v473 = vadd.f32 %v471, %v472
  %v474 = vtanh.pop %v473
  %v475 = vmul.f32 %v469, %v474
  %476 = vst [vmem:[#allocation3] sm:$0xff] %v473
  %s477 = scalar_lea.vmem %s4, 16
  %478 = vst [vmem:[%s477] sm:$0xff] %v475
  %479 = vrot.lane.b32.xlu0 %v475, 1
  %v480 = vpop.permute.xlu0 %479
  %v481 = vmul.f32 %v480, %v38
  %482 = vst [vmem:[#allocation2 + $0x10] sm:$0xff] %v481
  %483 = vst [vmem:[#allocation2 + $0x18] sm:$0xff] %v475
  %484 = vrot.lane.b32.xlu0 %v475, 127
  %v485 = vpop.permute.xlu0 %484
  %v486 = vmul.f32 %v485, %v207
  %487 = vst [vmem:[#allocation2 + $0x20] sm:$0xff] %v486
  %s488 = scalar_lea.vmem %s0, 24
  %v489 = vld [vmem:[%s488] sm:$0xff]
  %490 = vrot.lane.b32.xlu0 %v489, 1
  %v491 = vpop.permute.xlu0 %490
  %v492 = vmul.f32 %v491, %v38
  %493 = vst [vmem:[#allocation2] sm:$0xff] %v492
  %494 = vst [vmem:[#allocation2 + $0x8] sm:$0xff] %v489
  %v495 = vld [vmem:[#allocation2] sm:$0xff]
  %v496 = vld [vmem:[#allocation2 + $0x8] sm:$0xff]
  %v497 = vld [vmem:[#allocation2 + $0x10] sm:$0xff]
  %v498 = vld [vmem:[#allocation2 + $0x18] sm:$0xff]
  %v499 = vld [vmem:[#allocation2 + $0x20] sm:$0xff]
  %500 = vmatprep.subr.mxu0 0.0
  %501 = vmatpush1.msra.mxu0 0.0
  %502 = vmatprep.subr.mxu0 0.0
  %503 = vmatpush1.msra.mxu0 0.0
  %504 = vmatprep.subr.mxu0 0.0
  %505 = vmatpush1.msra.mxu0 0.0
  %506 = vmatprep.subr.mxu0 0.0
  %507 = vmatpush1.msra.mxu0 0.0
  %508 = vmatprep.subr.mxu0 0.0
  %509 = vmatpush1.msra.mxu0 0.0
  %510 = vmatprep.subr.mxu0 0.0
  %511 = vmatpush1.msra.mxu0 0.0
  %512 = vmatprep.subr.mxu0 0.0
  %513 = vmatpush1.msra.mxu0 0.0
  %514 = vmatprep.subr.mxu0 0.0
  %515 = vmatpush1.msra.mxu0 0.0
  %516 = vmatprep.subr.mxu0 0.0
  %517 = vmatpush1.msra.mxu0 0.0
  %518 = vmatprep.subr.mxu0 0.0
  %519 = vmatpush1.msra.mxu0 0.0
  %520 = vmatprep.subr.mxu0 0.0
  %521 = vmatpush1.msra.mxu0 0.0
  %522 = vmatprep.subr.mxu0 0.0
  %523 = vmatpush1.msra.mxu0 %v499
  %524 = vmatprep.subr.mxu0 0.0
  %525 = vmatpush1.msra.mxu0 %v498
  %526 = vmatprep.subr.mxu0 0.0
  %527 = vmatpush1.msra.mxu0 %v497
  %528 = vmatprep.subr.mxu0 0.0
  %529 = vmatpush1.msra.mxu0 %v496
  %530 = vmatprep.subr.mxu0 0.0
  %531 = vmatpush1.msra.mxu0 %v495
  %532 = vmatprep.subr.mxu0 0.0
  %533 = vmatpush2.msra.mxu0 0.0
  %534 = vmatprep.subr.mxu0 0.0
  %535 = vmatpush2.msra.mxu0 0.0
  %536 = vmatprep.subr.mxu0 0.0
  %537 = vmatpush2.msra.mxu0 0.0
  %538 = vmatprep.subr.mxu0 0.0
  %539 = vmatpush2.msra.mxu0 0.0
  %540 = vmatprep.subr.mxu0 0.0
  %541 = vmatpush2.msra.mxu0 0.0
  %542 = vmatprep.subr.mxu0 0.0
  %543 = vmatpush2.msra.mxu0 0.0
  %544 = vmatprep.subr.mxu0 0.0
  %545 = vmatpush2.msra.mxu0 0.0
  %546 = vmatprep.subr.mxu0 0.0
  %547 = vmatpush2.msra.mxu0 0.0
  %548 = vmatprep.subr.mxu0 0.0
  %549 = vmatpush2.msra.mxu0 0.0
  %550 = vmatprep.subr.mxu0 0.0
  %551 = vmatpush2.msra.mxu0 0.0
  %552 = vmatprep.subr.mxu0 0.0
  %553 = vmatpush2.msra.mxu0 0.0
  %554 = vmatprep.subr.mxu0 0.0
  %555 = vmatpush2.msra.mxu0 0.0
  %556 = vmatprep.subr.mxu0 0.0
  %557 = vmatpush2.msra.mxu0 0.0
  %558 = vmatprep.subr.mxu0 0.0
  %559 = vmatpush2.msra.mxu0 0.0
  %560 = vmatprep.subr.mxu0 0.0
  %561 = vmatpush2.msra.mxu0 0.0
  %562 = vmatprep.subr.mxu0 0.0
  %563 = vmatpush2.msra.mxu0 0.0
  %564 = vmatprep.mubr.f32.mxu0 0.0
  %565 = vmatmul.mubr.f32.gmra.mxu0 %v69
  %v566 = vpop.f32.mrf.mxu0
  %v567 = vadd.f32 %v50, %v566
  %v568 = vpop.f32.mrf.mxu0
  %569 = vmatprep.mubr.f32.mxu0 0.0
  %570 = vmatmul.mubr.f32.gmra.mxu0 %v72
  %v571 = vpop.f32.mrf.mxu0
  %v572 = vadd.f32 %v55, %v571
  %v573 = vpop.f32.mrf.mxu0
  %574 = vmatprep.mubr.f32.mxu0 0.0
  %575 = vmatmul.mubr.f32.gmra.mxu0 %v75
  %v576 = vpop.f32.mrf.mxu0
  %v577 = vadd.f32 %v60, %v576
  %v578 = vpop.f32.mrf.mxu0
  %579 = vmatprep.mubr.f32.mxu0 0.0
  %580 = vmatmul.mubr.f32.gmra.mxu0 %v78
  %v581 = vpop.f32.mrf.mxu0
  %v582 = vadd.f32 %v65, %v581
  %v583 = vpop.f32.mrf.mxu0
  %584 = vdwg.mxu0
  %v585 = vxor.u32 %v567, 2147483648
  %v586 = vxor.u32 %v572, 2147483648
  %v587 = vxor.u32 %v577, 2147483648
  %v588 = vxor.u32 %v582, 2147483648
  %v589 = vmul.f32 %v585, 1.442695
  %v590 = vpow.pop %v589
  %v591 = vmul.f32 %v586, 1.442695
  %v592 = vpow.pop %v591
  %v593 = vmul.f32 %v587, 1.442695
  %v594 = vpow.pop %v593
  %v595 = vmul.f32 %v588, 1.442695
  %v596 = vpow.pop %v595
  %v597 = vadd.f32 %v590, 1.0
  %v598 = vadd.f32 %v592, 1.0
  %v599 = vadd.f32 %v594, 1.0
  %v600 = vadd.f32 %v596, 1.0
  %v601 = vrcp.pop %v597
  %v602 = vmul.f32 1.0, %v601
  %v603 = vrcp.pop %v598
  %v604 = vmul.f32 1.0, %v603
  %v605 = vrcp.pop %v599
  %v606 = vmul.f32 1.0, %v605
  %v607 = vrcp.pop %v600
  %v608 = vmul.f32 1.0, %v607
  %v609 = vld [vmem:[#allocation3] sm:$0xff]
  %v610 = vmul.f32 %v606, %v609
  %v611 = vmul.f32 %v602, %v604
  %v612 = vadd.f32 %v610, %v611
  %v613 = vtanh.pop %v612
  %v614 = vmul.f32 %v608, %v613
  %615 = vst [vmem:[#allocation3] sm:$0xff] %v612
  %s616 = scalar_lea.vmem %s4, 24
  %617 = vst [vmem:[%s616] sm:$0xff] %v614
  %618 = vrot.lane.b32.xlu0 %v614, 1
  %v619 = vpop.permute.xlu0 %618
  %v620 = vmul.f32 %v619, %v38
  %621 = vst [vmem:[#allocation2 + $0x10] sm:$0xff] %v620
  %622 = vst [vmem:[#allocation2 + $0x18] sm:$0xff] %v614
  %623 = vrot.lane.b32.xlu0 %v614, 127
  %v624 = vpop.permute.xlu0 %623
  %v625 = vmul.f32 %v624, %v207
  %626 = vst [vmem:[#allocation2 + $0x20] sm:$0xff] %v625
  %s627 = scalar_lea.vmem %s0, 32
  %v628 = vld [vmem:[%s627] sm:$0xff]
  %629 = vrot.lane.b32.xlu0 %v628, 1
  %v630 = vpop.permute.xlu0 %629
  %v631 = vmul.f32 %v630, %v38
  %632 = vst [vmem:[#allocation2] sm:$0xff] %v631
  %633 = vst [vmem:[#allocation2 + $0x8] sm:$0xff] %v628
  %v634 = vld [vmem:[#allocation2] sm:$0xff]
  %v635 = vld [vmem:[#allocation2 + $0x8] sm:$0xff]
  %v636 = vld [vmem:[#allocation2 + $0x10] sm:$0xff]
  %v637 = vld [vmem:[#allocation2 + $0x18] sm:$0xff]
  %v638 = vld [vmem:[#allocation2 + $0x20] sm:$0xff]
  %639 = vmatprep.subr.mxu0 0.0
  %640 = vmatpush1.msra.mxu0 0.0
  %641 = vmatprep.subr.mxu0 0.0
  %642 = vmatpush1.msra.mxu0 0.0
  %643 = vmatprep.subr.mxu0 0.0
  %644 = vmatpush1.msra.mxu0 0.0
  %645 = vmatprep.subr.mxu0 0.0
  %646 = vmatpush1.msra.mxu0 0.0
  %647 = vmatprep.subr.mxu0 0.0
  %648 = vmatpush1.msra.mxu0 0.0
  %649 = vmatprep.subr.mxu0 0.0
  %650 = vmatpush1.msra.mxu0 0.0
  %651 = vmatprep.subr.mxu0 0.0
  %652 = vmatpush1.msra.mxu0 0.0
  %653 = vmatprep.subr.mxu0 0.0
  %654 = vmatpush1.msra.mxu0 0.0
  %655 = vmatprep.subr.mxu0 0.0
  %656 = vmatpush1.msra.mxu0 0.0
  %657 = vmatprep.subr.mxu0 0.0
  %658 = vmatpush1.msra.mxu0 0.0
  %659 = vmatprep.subr.mxu0 0.0
  %660 = vmatpush1.msra.mxu0 0.0
  %661 = vmatprep.subr.mxu0 0.0
  %662 = vmatpush1.msra.mxu0 %v638
  %663 = vmatprep.subr.mxu0 0.0
  %664 = vmatpush1.msra.mxu0 %v637
  %665 = vmatprep.subr.mxu0 0.0
  %666 = vmatpush1.msra.mxu0 %v636
  %667 = vmatprep.subr.mxu0 0.0
  %668 = vmatpush1.msra.mxu0 %v635
  %669 = vmatprep.subr.mxu0 0.0
  %670 = vmatpush1.msra.mxu0 %v634
  %671 = vmatprep.subr.mxu0 0.0
  %672 = vmatpush2.msra.mxu0 0.0
  %673 = vmatprep.subr.mxu0 0.0
  %674 = vmatpush2.msra.mxu0 0.0
  %675 = vmatprep.subr.mxu0 0.0
  %676 = vmatpush2.msra.mxu0 0.0
  %677 = vmatprep.subr.mxu0 0.0
  %678 = vmatpush2.msra.mxu0 0.0
  %679 = vmatprep.subr.mxu0 0.0
  %680 = vmatpush2.msra.mxu0 0.0
  %681 = vmatprep.subr.mxu0 0.0
  %682 = vmatpush2.msra.mxu0 0.0
  %683 = vmatprep.subr.mxu0 0.0
  %684 = vmatpush2.msra.mxu0 0.0
  %685 = vmatprep.subr.mxu0 0.0
  %686 = vmatpush2.msra.mxu0 0.0
  %687 = vmatprep.subr.mxu0 0.0
  %688 = vmatpush2.msra.mxu0 0.0
  %689 = vmatprep.subr.mxu0 0.0
  %690 = vmatpush2.msra.mxu0 0.0
  %691 = vmatprep.subr.mxu0 0.0
  %692 = vmatpush2.msra.mxu0 0.0
  %693 = vmatprep.subr.mxu0 0.0
  %694 = vmatpush2.msra.mxu0 0.0
  %695 = vmatprep.subr.mxu0 0.0
  %696 = vmatpush2.msra.mxu0 0.0
  %697 = vmatprep.subr.mxu0 0.0
  %698 = vmatpush2.msra.mxu0 0.0
  %699 = vmatprep.subr.mxu0 0.0
  %700 = vmatpush2.msra.mxu0 0.0
  %701 = vmatprep.subr.mxu0 0.0
  %702 = vmatpush2.msra.mxu0 0.0
  %703 = vmatprep.mubr.f32.mxu0 0.0
  %704 = vmatmul.mubr.f32.gmra.mxu0 %v69
  %v705 = vpop.f32.mrf.mxu0
  %v706 = vadd.f32 %v50, %v705
  %v707 = vpop.f32.mrf.mxu0
  %708 = vmatprep.mubr.f32.mxu0 0.0
  %709 = vmatmul.mubr.f32.gmra.mxu0 %v72
  %v710 = vpop.f32.mrf.mxu0
  %v711 = vadd.f32 %v55, %v710
  %v712 = vpop.f32.mrf.mxu0
  %713 = vmatprep.mubr.f32.mxu0 0.0
  %714 = vmatmul.mubr.f32.gmra.mxu0 %v75
  %v715 = vpop.f32.mrf.mxu0
  %v716 = vadd.f32 %v60, %v715
  %v717 = vpop.f32.mrf.mxu0
  %718 = vmatprep.mubr.f32.mxu0 0.0
  %719 = vmatmul.mubr.f32.gmra.mxu0 %v78
  %v720 = vpop.f32.mrf.mxu0
  %v721 = vadd.f32 %v65, %v720
  %v722 = vpop.f32.mrf.mxu0
  %723 = vdwg.mxu0
  %v724 = vxor.u32 %v706, 2147483648
  %v725 = vxor.u32 %v711, 2147483648
  %v726 = vxor.u32 %v716, 2147483648
  %v727 = vxor.u32 %v721, 2147483648
  %v728 = vmul.f32 %v724, 1.442695
  %v729 = vpow.pop %v728
  %v730 = vmul.f32 %v725, 1.442695
  %v731 = vpow.pop %v730
  %v732 = vmul.f32 %v726, 1.442695
  %v733 = vpow.pop %v732
  %v734 = vmul.f32 %v727, 1.442695
  %v735 = vpow.pop %v734
  %v736 = vadd.f32 %v729, 1.0
  %v737 = vadd.f32 %v731, 1.0
  %v738 = vadd.f32 %v733, 1.0
  %v739 = vadd.f32 %v735, 1.0
  %v740 = vrcp.pop %v736
  %v741 = vmul.f32 1.0, %v740
  %v742 = vrcp.pop %v737
  %v743 = vmul.f32 1.0, %v742
  %v744 = vrcp.pop %v738
  %v745 = vmul.f32 1.0, %v744
  %v746 = vrcp.pop %v739
  %v747 = vmul.f32 1.0, %v746
  %v748 = vld [vmem:[#allocation3] sm:$0xff]
  %v749 = vmul.f32 %v745, %v748
  %v750 = vmul.f32 %v741, %v743
  %v751 = vadd.f32 %v749, %v750
  %v752 = vtanh.pop %v751
  %v753 = vmul.f32 %v747, %v752
  %754 = vst [vmem:[#allocation3] sm:$0xff] %v751
  %s755 = scalar_lea.vmem %s4, 32
  %756 = vst [vmem:[%s755] sm:$0xff] %v753
  %757 = vrot.lane.b32.xlu0 %v753, 1
  %v758 = vpop.permute.xlu0 %757
  %v759 = vmul.f32 %v758, %v38
  %760 = vst [vmem:[#allocation2 + $0x10] sm:$0xff] %v759
  %761 = vst [vmem:[#allocation2 + $0x18] sm:$0xff] %v753
  %762 = vrot.lane.b32.xlu0 %v753, 127
  %v763 = vpop.permute.xlu0 %762
  %v764 = vmul.f32 %v763, %v207
  %765 = vst [vmem:[#allocation2 + $0x20] sm:$0xff] %v764
  %s766 = scalar_lea.vmem %s0, 40
  %v767 = vld [vmem:[%s766] sm:$0xff]
  %768 = vrot.lane.b32.xlu0 %v767, 1
  %v769 = vpop.permute.xlu0 %768
  %v770 = vmul.f32 %v769, %v38
  %771 = vst [vmem:[#allocation2] sm:$0xff] %v770
  %772 = vst [vmem:[#allocation2 + $0x8] sm:$0xff] %v767
  %v773 = vld [vmem:[#allocation2] sm:$0xff]
  %v774 = vld [vmem:[#allocation2 + $0x8] sm:$0xff]
  %v775 = vld [vmem:[#allocation2 + $0x10] sm:$0xff]
  %v776 = vld [vmem:[#allocation2 + $0x18] sm:$0xff]
  %v777 = vld [vmem:[#allocation2 + $0x20] sm:$0xff]
  %778 = vmatprep.subr.mxu0 0.0
  %779 = vmatpush1.msra.mxu0 0.0
  %780 = vmatprep.subr.mxu0 0.0
  %781 = vmatpush1.msra.mxu0 0.0
  %782 = vmatprep.subr.mxu0 0.0
  %783 = vmatpush1.msra.mxu0 0.0
  %784 = vmatprep.subr.mxu0 0.0
  %785 = vmatpush1.msra.mxu0 0.0
  %786 = vmatprep.subr.mxu0 0.0
  %787 = vmatpush1.msra.mxu0 0.0
  %788 = vmatprep.subr.mxu0 0.0
  %789 = vmatpush1.msra.mxu0 0.0
  %790 = vmatprep.subr.mxu0 0.0
  %791 = vmatpush1.msra.mxu0 0.0
  %792 = vmatprep.subr.mxu0 0.0
  %793 = vmatpush1.msra.mxu0 0.0
  %794 = vmatprep.subr.mxu0 0.0
  %795 = vmatpush1.msra.mxu0 0.0
  %796 = vmatprep.subr.mxu0 0.0
  %797 = vmatpush1.msra.mxu0 0.0
  %798 = vmatprep.subr.mxu0 0.0
  %799 = vmatpush1.msra.mxu0 0.0
  %800 = vmatprep.subr.mxu0 0.0
  %801 = vmatpush1.msra.mxu0 %v777
  %802 = vmatprep.subr.mxu0 0.0
  %803 = vmatpush1.msra.mxu0 %v776
  %804 = vmatprep.subr.mxu0 0.0
  %805 = vmatpush1.msra.mxu0 %v775
  %806 = vmatprep.subr.mxu0 0.0
  %807 = vmatpush1.msra.mxu0 %v774
  %808 = vmatprep.subr.mxu0 0.0
  %809 = vmatpush1.msra.mxu0 %v773
  %810 = vmatprep.subr.mxu0 0.0
  %811 = vmatpush2.msra.mxu0 0.0
  %812 = vmatprep.subr.mxu0 0.0
  %813 = vmatpush2.msra.mxu0 0.0
  %814 = vmatprep.subr.mxu0 0.0
  %815 = vmatpush2.msra.mxu0 0.0
  %816 = vmatprep.subr.mxu0 0.0
  %817 = vmatpush2.msra.mxu0 0.0
  %818 = vmatprep.subr.mxu0 0.0
  %819 = vmatpush2.msra.mxu0 0.0
  %820 = vmatprep.subr.mxu0 0.0
  %821 = vmatpush2.msra.mxu0 0.0
  %822 = vmatprep.subr.mxu0 0.0
  %823 = vmatpush2.msra.mxu0 0.0
  %824 = vmatprep.subr.mxu0 0.0
  %825 = vmatpush2.msra.mxu0 0.0
  %826 = vmatprep.subr.mxu0 0.0
  %827 = vmatpush2.msra.mxu0 0.0
  %828 = vmatprep.subr.mxu0 0.0
  %829 = vmatpush2.msra.mxu0 0.0
  %830 = vmatprep.subr.mxu0 0.0
  %831 = vmatpush2.msra.mxu0 0.0
  %832 = vmatprep.subr.mxu0 0.0
  %833 = vmatpush2.msra.mxu0 0.0
  %834 = vmatprep.subr.mxu0 0.0
  %835 = vmatpush2.msra.mxu0 0.0
  %836 = vmatprep.subr.mxu0 0.0
  %837 = vmatpush2.msra.mxu0 0.0
  %838 = vmatprep.subr.mxu0 0.0
  %839 = vmatpush2.msra.mxu0 0.0
  %840 = vmatprep.subr.mxu0 0.0
  %841 = vmatpush2.msra.mxu0 0.0
  %842 = vmatprep.mubr.f32.mxu0 0.0
  %843 = vmatmul.mubr.f32.gmra.mxu0 %v69
  %v844 = vpop.f32.mrf.mxu0
  %v845 = vadd.f32 %v50, %v844
  %v846 = vpop.f32.mrf.mxu0
  %847 = vmatprep.mubr.f32.mxu0 0.0
  %848 = vmatmul.mubr.f32.gmra.mxu0 %v72
  %v849 = vpop.f32.mrf.mxu0
  %v850 = vadd.f32 %v55, %v849
  %v851 = vpop.f32.mrf.mxu0
  %852 = vmatprep.mubr.f32.mxu0 0.0
  %853 = vmatmul.mubr.f32.gmra.mxu0 %v75
  %v854 = vpop.f32.mrf.mxu0
  %v855 = vadd.f32 %v60, %v854
  %v856 = vpop.f32.mrf.mxu0
  %857 = vmatprep.mubr.f32.mxu0 0.0
  %858 = vmatmul.mubr.f32.gmra.mxu0 %v78
  %v859 = vpop.f32.mrf.mxu0
  %v860 = vadd.f32 %v65, %v859
  %v861 = vpop.f32.mrf.mxu0
  %862 = vdwg.mxu0
  %v863 = vxor.u32 %v845, 2147483648
  %v864 = vxor.u32 %v850, 2147483648
  %v865 = vxor.u32 %v855, 2147483648
  %v866 = vxor.u32 %v860, 2147483648
  %v867 = vmul.f32 %v863, 1.442695
  %v868 = vpow.pop %v867
  %v869 = vmul.f32 %v864, 1.442695
  %v870 = vpow.pop %v869
  %v871 = vmul.f32 %v865, 1.442695
  %v872 = vpow.pop %v871
  %v873 = vmul.f32 %v866, 1.442695
  %v874 = vpow.pop %v873
  %v875 = vadd.f32 %v868, 1.0
  %v876 = vadd.f32 %v870, 1.0
  %v877 = vadd.f32 %v872, 1.0
  %v878 = vadd.f32 %v874, 1.0
  %v879 = vrcp.pop %v875
  %v880 = vmul.f32 1.0, %v879
  %v881 = vrcp.pop %v876
  %v882 = vmul.f32 1.0, %v881
  %v883 = vrcp.pop %v877
  %v884 = vmul.f32 1.0, %v883
  %v885 = vrcp.pop %v878
  %v886 = vmul.f32 1.0, %v885
  %v887 = vld [vmem:[#allocation3] sm:$0xff]
  %v888 = vmul.f32 %v884, %v887
  %v889 = vmul.f32 %v880, %v882
  %v890 = vadd.f32 %v888, %v889
  %v891 = vtanh.pop %v890
  %v892 = vmul.f32 %v886, %v891
  %893 = vst [vmem:[#allocation3] sm:$0xff] %v890
  %s894 = scalar_lea.vmem %s4, 40
  %895 = vst [vmem:[%s894] sm:$0xff] %v892
  %896 = vrot.lane.b32.xlu0 %v892, 1
  %v897 = vpop.permute.xlu0 %896
  %v898 = vmul.f32 %v897, %v38
  %899 = vst [vmem:[#allocation2 + $0x10] sm:$0xff] %v898
  %900 = vst [vmem:[#allocation2 + $0x18] sm:$0xff] %v892
  %901 = vrot.lane.b32.xlu0 %v892, 127
  %v902 = vpop.permute.xlu0 %901
  %v903 = vmul.f32 %v902, %v207
  %904 = vst [vmem:[#allocation2 + $0x20] sm:$0xff] %v903
  %s905 = scalar_lea.vmem %s0, 48
  %v906 = vld [vmem:[%s905] sm:$0xff]
  %907 = vrot.lane.b32.xlu0 %v906, 1
  %v908 = vpop.permute.xlu0 %907
  %v909 = vmul.f32 %v908, %v38
  %910 = vst [vmem:[#allocation2] sm:$0xff] %v909
  %911 = vst [vmem:[#allocation2 + $0x8] sm:$0xff] %v906
  %v912 = vld [vmem:[#allocation2] sm:$0xff]
  %v913 = vld [vmem:[#allocation2 + $0x8] sm:$0xff]
  %v914 = vld [vmem:[#allocation2 + $0x10] sm:$0xff]
  %v915 = vld [vmem:[#allocation2 + $0x18] sm:$0xff]
  %v916 = vld [vmem:[#allocation2 + $0x20] sm:$0xff]
  %917 = vmatprep.subr.mxu0 0.0
  %918 = vmatpush1.msra.mxu0 0.0
  %919 = vmatprep.subr.mxu0 0.0
  %920 = vmatpush1.msra.mxu0 0.0
  %921 = vmatprep.subr.mxu0 0.0
  %922 = vmatpush1.msra.mxu0 0.0
  %923 = vmatprep.subr.mxu0 0.0
  %924 = vmatpush1.msra.mxu0 0.0
  %925 = vmatprep.subr.mxu0 0.0
  %926 = vmatpush1.msra.mxu0 0.0
  %927 = vmatprep.subr.mxu0 0.0
  %928 = vmatpush1.msra.mxu0 0.0
  %929 = vmatprep.subr.mxu0 0.0
  %930 = vmatpush1.msra.mxu0 0.0
  %931 = vmatprep.subr.mxu0 0.0
  %932 = vmatpush1.msra.mxu0 0.0
  %933 = vmatprep.subr.mxu0 0.0
  %934 = vmatpush1.msra.mxu0 0.0
  %935 = vmatprep.subr.mxu0 0.0
  %936 = vmatpush1.msra.mxu0 0.0
  %937 = vmatprep.subr.mxu0 0.0
  %938 = vmatpush1.msra.mxu0 0.0
  %939 = vmatprep.subr.mxu0 0.0
  %940 = vmatpush1.msra.mxu0 %v916
  %941 = vmatprep.subr.mxu0 0.0
  %942 = vmatpush1.msra.mxu0 %v915
  %943 = vmatprep.subr.mxu0 0.0
  %944 = vmatpush1.msra.mxu0 %v914
  %945 = vmatprep.subr.mxu0 0.0
  %946 = vmatpush1.msra.mxu0 %v913
  %947 = vmatprep.subr.mxu0 0.0
  %948 = vmatpush1.msra.mxu0 %v912
  %949 = vmatprep.subr.mxu0 0.0
  %950 = vmatpush2.msra.mxu0 0.0
  %951 = vmatprep.subr.mxu0 0.0
  %952 = vmatpush2.msra.mxu0 0.0
  %953 = vmatprep.subr.mxu0 0.0
  %954 = vmatpush2.msra.mxu0 0.0
  %955 = vmatprep.subr.mxu0 0.0
  %956 = vmatpush2.msra.mxu0 0.0
  %957 = vmatprep.subr.mxu0 0.0
  %958 = vmatpush2.msra.mxu0 0.0
  %959 = vmatprep.subr.mxu0 0.0
  %960 = vmatpush2.msra.mxu0 0.0
  %961 = vmatprep.subr.mxu0 0.0
  %962 = vmatpush2.msra.mxu0 0.0
  %963 = vmatprep.subr.mxu0 0.0
  %964 = vmatpush2.msra.mxu0 0.0
  %965 = vmatprep.subr.mxu0 0.0
  %966 = vmatpush2.msra.mxu0 0.0
  %967 = vmatprep.subr.mxu0 0.0
  %968 = vmatpush2.msra.mxu0 0.0
  %969 = vmatprep.subr.mxu0 0.0
  %970 = vmatpush2.msra.mxu0 0.0
  %971 = vmatprep.subr.mxu0 0.0
  %972 = vmatpush2.msra.mxu0 0.0
  %973 = vmatprep.subr.mxu0 0.0
  %974 = vmatpush2.msra.mxu0 0.0
  %975 = vmatprep.subr.mxu0 0.0
  %976 = vmatpush2.msra.mxu0 0.0
  %977 = vmatprep.subr.mxu0 0.0
  %978 = vmatpush2.msra.mxu0 0.0
  %979 = vmatprep.subr.mxu0 0.0
  %980 = vmatpush2.msra.mxu0 0.0
  %981 = vmatprep.mubr.f32.mxu0 0.0
  %982 = vmatmul.mubr.f32.gmra.mxu0 %v69
  %v983 = vpop.f32.mrf.mxu0
  %v984 = vadd.f32 %v50, %v983
  %v985 = vpop.f32.mrf.mxu0
  %986 = vmatprep.mubr.f32.mxu0 0.0
  %987 = vmatmul.mubr.f32.gmra.mxu0 %v72
  %v988 = vpop.f32.mrf.mxu0
  %v989 = vadd.f32 %v55, %v988
  %v990 = vpop.f32.mrf.mxu0
  %991 = vmatprep.mubr.f32.mxu0 0.0
  %992 = vmatmul.mubr.f32.gmra.mxu0 %v75
  %v993 = vpop.f32.mrf.mxu0
  %v994 = vadd.f32 %v60, %v993
  %v995 = vpop.f32.mrf.mxu0
  %996 = vmatprep.mubr.f32.mxu0 0.0
  %997 = vmatmul.mubr.f32.gmra.mxu0 %v78
  %v998 = vpop.f32.mrf.mxu0
  %v999 = vadd.f32 %v65, %v998
  %v1000 = vpop.f32.mrf.mxu0
  %1001 = vdwg.mxu0
  %v1002 = vxor.u32 %v984, 2147483648
  %v1003 = vxor.u32 %v989, 2147483648
  %v1004 = vxor.u32 %v994, 2147483648
  %v1005 = vxor.u32 %v999, 2147483648
  %v1006 = vmul.f32 %v1002, 1.442695
  %v1007 = vpow.pop %v1006
  %v1008 = vmul.f32 %v1003, 1.442695
  %v1009 = vpow.pop %v1008
  %v1010 = vmul.f32 %v1004, 1.442695
  %v1011 = vpow.pop %v1010
  %v1012 = vmul.f32 %v1005, 1.442695
  %v1013 = vpow.pop %v1012
  %v1014 = vadd.f32 %v1007, 1.0
  %v1015 = vadd.f32 %v1009, 1.0
  %v1016 = vadd.f32 %v1011, 1.0
  %v1017 = vadd.f32 %v1013, 1.0
  %v1018 = vrcp.pop %v1014
  %v1019 = vmul.f32 1.0, %v1018
  %v1020 = vrcp.pop %v1015
  %v1021 = vmul.f32 1.0, %v1020
  %v1022 = vrcp.pop %v1016
  %v1023 = vmul.f32 1.0, %v1022
  %v1024 = vrcp.pop %v1017
  %v1025 = vmul.f32 1.0, %v1024
  %v1026 = vld [vmem:[#allocation3] sm:$0xff]
  %v1027 = vmul.f32 %v1023, %v1026
  %v1028 = vmul.f32 %v1019, %v1021
  %v1029 = vadd.f32 %v1027, %v1028
  %v1030 = vtanh.pop %v1029
  %v1031 = vmul.f32 %v1025, %v1030
  %1032 = vst [vmem:[#allocation3] sm:$0xff] %v1029
  %s1033 = scalar_lea.vmem %s4, 48
  %1034 = vst [vmem:[%s1033] sm:$0xff] %v1031
  %1035 = vrot.lane.b32.xlu0 %v1031, 1
  %v1036 = vpop.permute.xlu0 %1035
  %v1037 = vmul.f32 %v1036, %v38
  %1038 = vst [vmem:[#allocation2 + $0x10] sm:$0xff] %v1037
  %1039 = vst [vmem:[#allocation2 + $0x18] sm:$0xff] %v1031
  %1040 = vrot.lane.b32.xlu0 %v1031, 127
  %v1041 = vpop.permute.xlu0 %1040
  %v1042 = vmul.f32 %v1041, %v207
  %1043 = vst [vmem:[#allocation2 + $0x20] sm:$0xff] %v1042
  %s1044 = scalar_lea.vmem %s0, 56
  %v1045 = vld [vmem:[%s1044] sm:$0xff]
  %1046 = vrot.lane.b32.xlu0 %v1045, 1
  %v1047 = vpop.permute.xlu0 %1046
  %v1048 = vmul.f32 %v1047, %v38
  %1049 = vst [vmem:[#allocation2] sm:$0xff] %v1048
  %1050 = vst [vmem:[#allocation2 + $0x8] sm:$0xff] %v1045
  %v1051 = vld [vmem:[#allocation2] sm:$0xff]
  %v1052 = vld [vmem:[#allocation2 + $0x8] sm:$0xff]
  %v1053 = vld [vmem:[#allocation2 + $0x10] sm:$0xff]
  %v1054 = vld [vmem:[#allocation2 + $0x18] sm:$0xff]
  %v1055 = vld [vmem:[#allocation2 + $0x20] sm:$0xff]
  %1056 = vmatprep.subr.mxu0 0.0
  %1057 = vmatpush1.msra.mxu0 0.0
  %1058 = vmatprep.subr.mxu0 0.0
  %1059 = vmatpush1.msra.mxu0 0.0
  %1060 = vmatprep.subr.mxu0 0.0
  %1061 = vmatpush1.msra.mxu0 0.0
  %1062 = vmatprep.subr.mxu0 0.0
  %1063 = vmatpush1.msra.mxu0 0.0
  %1064 = vmatprep.subr.mxu0 0.0
  %1065 = vmatpush1.msra.mxu0 0.0
  %1066 = vmatprep.subr.mxu0 0.0
  %1067 = vmatpush1.msra.mxu0 0.0
  %1068 = vmatprep.subr.mxu0 0.0
  %1069 = vmatpush1.msra.mxu0 0.0
  %1070 = vmatprep.subr.mxu0 0.0
  %1071 = vmatpush1.msra.mxu0 0.0
  %1072 = vmatprep.subr.mxu0 0.0
  %1073 = vmatpush1.msra.mxu0 0.0
  %1074 = vmatprep.subr.mxu0 0.0
  %1075 = vmatpush1.msra.mxu0 0.0
  %1076 = vmatprep.subr.mxu0 0.0
  %1077 = vmatpush1.msra.mxu0 0.0
  %1078 = vmatprep.subr.mxu0 0.0
  %1079 = vmatpush1.msra.mxu0 %v1055
  %1080 = vmatprep.subr.mxu0 0.0
  %1081 = vmatpush1.msra.mxu0 %v1054
  %1082 = vmatprep.subr.mxu0 0.0
  %1083 = vmatpush1.msra.mxu0 %v1053
  %1084 = vmatprep.subr.mxu0 0.0
  %1085 = vmatpush1.msra.mxu0 %v1052
  %1086 = vmatprep.subr.mxu0 0.0
  %1087 = vmatpush1.msra.mxu0 %v1051
  %1088 = vmatprep.subr.mxu0 0.0
  %1089 = vmatpush2.msra.mxu0 0.0
  %1090 = vmatprep.subr.mxu0 0.0
  %1091 = vmatpush2.msra.mxu0 0.0
  %1092 = vmatprep.subr.mxu0 0.0
  %1093 = vmatpush2.msra.mxu0 0.0
  %1094 = vmatprep.subr.mxu0 0.0
  %1095 = vmatpush2.msra.mxu0 0.0
  %1096 = vmatprep.subr.mxu0 0.0
  %1097 = vmatpush2.msra.mxu0 0.0
  %1098 = vmatprep.subr.mxu0 0.0
  %1099 = vmatpush2.msra.mxu0 0.0
  %1100 = vmatprep.subr.mxu0 0.0
  %1101 = vmatpush2.msra.mxu0 0.0
  %1102 = vmatprep.subr.mxu0 0.0
  %1103 = vmatpush2.msra.mxu0 0.0
  %1104 = vmatprep.subr.mxu0 0.0
  %1105 = vmatpush2.msra.mxu0 0.0
  %1106 = vmatprep.subr.mxu0 0.0
  %1107 = vmatpush2.msra.mxu0 0.0
  %1108 = vmatprep.subr.mxu0 0.0
  %1109 = vmatpush2.msra.mxu0 0.0
  %1110 = vmatprep.subr.mxu0 0.0
  %1111 = vmatpush2.msra.mxu0 0.0
  %1112 = vmatprep.subr.mxu0 0.0
  %1113 = vmatpush2.msra.mxu0 0.0
  %1114 = vmatprep.subr.mxu0 0.0
  %1115 = vmatpush2.msra.mxu0 0.0
  %1116 = vmatprep.subr.mxu0 0.0
  %1117 = vmatpush2.msra.mxu0 0.0
  %1118 = vmatprep.subr.mxu0 0.0
  %1119 = vmatpush2.msra.mxu0 0.0
  %1120 = vmatprep.mubr.f32.mxu0 0.0
  %1121 = vmatmul.mubr.f32.gmra.mxu0 %v69
  %v1122 = vpop.f32.mrf.mxu0
  %v1123 = vadd.f32 %v50, %v1122
  %v1124 = vpop.f32.mrf.mxu0
  %1125 = vmatprep.mubr.f32.mxu0 0.0
  %1126 = vmatmul.mubr.f32.gmra.mxu0 %v72
  %v1127 = vpop.f32.mrf.mxu0
  %v1128 = vadd.f32 %v55, %v1127
  %v1129 = vpop.f32.mrf.mxu0
  %1130 = vmatprep.mubr.f32.mxu0 0.0
  %1131 = vmatmul.mubr.f32.gmra.mxu0 %v75
  %v1132 = vpop.f32.mrf.mxu0
  %v1133 = vadd.f32 %v60, %v1132
  %v1134 = vpop.f32.mrf.mxu0
  %1135 = vmatprep.mubr.f32.mxu0 0.0
  %1136 = vmatmul.mubr.f32.gmra.mxu0 %v78
  %v1137 = vpop.f32.mrf.mxu0
  %v1138 = vadd.f32 %v65, %v1137
  %v1139 = vpop.f32.mrf.mxu0
  %1140 = vdwg.mxu0
  %v1141 = vxor.u32 %v1123, 2147483648
  %v1142 = vxor.u32 %v1128, 2147483648
  %v1143 = vxor.u32 %v1133, 2147483648
  %v1144 = vxor.u32 %v1138, 2147483648
  %v1145 = vmul.f32 %v1141, 1.442695
  %v1146 = vpow.pop %v1145
  %v1147 = vmul.f32 %v1142, 1.442695
  %v1148 = vpow.pop %v1147
  %v1149 = vmul.f32 %v1143, 1.442695
  %v1150 = vpow.pop %v1149
  %v1151 = vmul.f32 %v1144, 1.442695
  %v1152 = vpow.pop %v1151
  %v1153 = vadd.f32 %v1146, 1.0
  %v1154 = vadd.f32 %v1148, 1.0
  %v1155 = vadd.f32 %v1150, 1.0
  %v1156 = vadd.f32 %v1152, 1.0
  %v1157 = vrcp.pop %v1153
  %v1158 = vmul.f32 1.0, %v1157
  %v1159 = vrcp.pop %v1154
  %v1160 = vmul.f32 1.0, %v1159
  %v1161 = vrcp.pop %v1155
  %v1162 = vmul.f32 1.0, %v1161
  %v1163 = vrcp.pop %v1156
  %v1164 = vmul.f32 1.0, %v1163
  %v1165 = vld [vmem:[#allocation3] sm:$0xff]
  %v1166 = vmul.f32 %v1162, %v1165
  %v1167 = vmul.f32 %v1158, %v1160
  %v1168 = vadd.f32 %v1166, %v1167
  %v1169 = vtanh.pop %v1168
  %v1170 = vmul.f32 %v1164, %v1169
  %1171 = vst [vmem:[#allocation3] sm:$0xff] %v1168
  %s1172 = scalar_lea.vmem %s4, 56
  %1173 = vst [vmem:[%s1172] sm:$0xff] %v1170
  %1174 = vrot.lane.b32.xlu0 %v1170, 1
  %v1175 = vpop.permute.xlu0 %1174
  %v1176 = vmul.f32 %v1175, %v38
  %1177 = vst [vmem:[#allocation2 + $0x10] sm:$0xff] %v1176
  %1178 = vst [vmem:[#allocation2 + $0x18] sm:$0xff] %v1170
  %1179 = vrot.lane.b32.xlu0 %v1170, 127
  %v1180 = vpop.permute.xlu0 %1179
  %v1181 = vmul.f32 %v1180, %v207
  %1182 = vst [vmem:[#allocation2 + $0x20] sm:$0xff] %v1181
  %s1183 = scalar_lea.vmem %s0, 64
  %v1184 = vld [vmem:[%s1183] sm:$0xff]
  %1185 = vrot.lane.b32.xlu0 %v1184, 1
  %v1186 = vpop.permute.xlu0 %1185
  %v1187 = vmul.f32 %v1186, %v38
  %1188 = vst [vmem:[#allocation2] sm:$0xff] %v1187
  %1189 = vst [vmem:[#allocation2 + $0x8] sm:$0xff] %v1184
  %v1190 = vld [vmem:[#allocation2] sm:$0xff]
  %v1191 = vld [vmem:[#allocation2 + $0x8] sm:$0xff]
  %v1192 = vld [vmem:[#allocation2 + $0x10] sm:$0xff]
  %v1193 = vld [vmem:[#allocation2 + $0x18] sm:$0xff]
  %v1194 = vld [vmem:[#allocation2 + $0x20] sm:$0xff]
  %1195 = vmatprep.subr.mxu0 0.0
  %1196 = vmatpush1.msra.mxu0 0.0
  %1197 = vmatprep.subr.mxu0 0.0
  %1198 = vmatpush1.msra.mxu0 0.0
  %1199 = vmatprep.subr.mxu0 0.0
  %1200 = vmatpush1.msra.mxu0 0.0
  %1201 = vmatprep.subr.mxu0 0.0
  %1202 = vmatpush1.msra.mxu0 0.0
  %1203 = vmatprep.subr.mxu0 0.0
  %1204 = vmatpush1.msra.mxu0 0.0
  %1205 = vmatprep.subr.mxu0 0.0
  %1206 = vmatpush1.msra.mxu0 0.0
  %1207 = vmatprep.subr.mxu0 0.0
  %1208 = vmatpush1.msra.mxu0 0.0
  %1209 = vmatprep.subr.mxu0 0.0
  %1210 = vmatpush1.msra.mxu0 0.0
  %1211 = vmatprep.subr.mxu0 0.0
  %1212 = vmatpush1.msra.mxu0 0.0
  %1213 = vmatprep.subr.mxu0 0.0
  %1214 = vmatpush1.msra.mxu0 0.0
  %1215 = vmatprep.subr.mxu0 0.0
  %1216 = vmatpush1.msra.mxu0 0.0
  %1217 = vmatprep.subr.mxu0 0.0
  %1218 = vmatpush1.msra.mxu0 %v1194
  %1219 = vmatprep.subr.mxu0 0.0
  %1220 = vmatpush1.msra.mxu0 %v1193
  %1221 = vmatprep.subr.mxu0 0.0
  %1222 = vmatpush1.msra.mxu0 %v1192
  %1223 = vmatprep.subr.mxu0 0.0
  %1224 = vmatpush1.msra.mxu0 %v1191
  %1225 = vmatprep.subr.mxu0 0.0
  %1226 = vmatpush1.msra.mxu0 %v1190
  %1227 = vmatprep.subr.mxu0 0.0
  %1228 = vmatpush2.msra.mxu0 0.0
  %1229 = vmatprep.subr.mxu0 0.0
  %1230 = vmatpush2.msra.mxu0 0.0
  %1231 = vmatprep.subr.mxu0 0.0
  %1232 = vmatpush2.msra.mxu0 0.0
  %1233 = vmatprep.subr.mxu0 0.0
  %1234 = vmatpush2.msra.mxu0 0.0
  %1235 = vmatprep.subr.mxu0 0.0
  %1236 = vmatpush2.msra.mxu0 0.0
  %1237 = vmatprep.subr.mxu0 0.0
  %1238 = vmatpush2.msra.mxu0 0.0
  %1239 = vmatprep.subr.mxu0 0.0
  %1240 = vmatpush2.msra.mxu0 0.0
  %1241 = vmatprep.subr.mxu0 0.0
  %1242 = vmatpush2.msra.mxu0 0.0
  %1243 = vmatprep.subr.mxu0 0.0
  %1244 = vmatpush2.msra.mxu0 0.0
  %1245 = vmatprep.subr.mxu0 0.0
  %1246 = vmatpush2.msra.mxu0 0.0
  %1247 = vmatprep.subr.mxu0 0.0
  %1248 = vmatpush2.msra.mxu0 0.0
  %1249 = vmatprep.subr.mxu0 0.0
  %1250 = vmatpush2.msra.mxu0 0.0
  %1251 = vmatprep.subr.mxu0 0.0
  %1252 = vmatpush2.msra.mxu0 0.0
  %1253 = vmatprep.subr.mxu0 0.0
  %1254 = vmatpush2.msra.mxu0 0.0
  %1255 = vmatprep.subr.mxu0 0.0
  %1256 = vmatpush2.msra.mxu0 0.0
  %1257 = vmatprep.subr.mxu0 0.0
  %1258 = vmatpush2.msra.mxu0 0.0
  %1259 = vmatprep.mubr.f32.mxu0 0.0
  %1260 = vmatmul.mubr.f32.gmra.mxu0 %v69
  %v1261 = vpop.f32.mrf.mxu0
  %v1262 = vadd.f32 %v50, %v1261
  %v1263 = vpop.f32.mrf.mxu0
  %1264 = vmatprep.mubr.f32.mxu0 0.0
  %1265 = vmatmul.mubr.f32.gmra.mxu0 %v72
  %v1266 = vpop.f32.mrf.mxu0
  %v1267 = vadd.f32 %v55, %v1266
  %v1268 = vpop.f32.mrf.mxu0
  %1269 = vmatprep.mubr.f32.mxu0 0.0
  %1270 = vmatmul.mubr.f32.gmra.mxu0 %v75
  %v1271 = vpop.f32.mrf.mxu0
  %v1272 = vadd.f32 %v60, %v1271
  %v1273 = vpop.f32.mrf.mxu0
  %1274 = vmatprep.mubr.f32.mxu0 0.0
  %1275 = vmatmul.mubr.f32.gmra.mxu0 %v78
  %v1276 = vpop.f32.mrf.mxu0
  %v1277 = vadd.f32 %v65, %v1276
  %v1278 = vpop.f32.mrf.mxu0
  %1279 = vdwg.mxu0
  %v1280 = vxor.u32 %v1262, 2147483648
  %v1281 = vxor.u32 %v1267, 2147483648
  %v1282 = vxor.u32 %v1272, 2147483648
  %v1283 = vxor.u32 %v1277, 2147483648
  %v1284 = vmul.f32 %v1280, 1.442695
  %v1285 = vpow.pop %v1284
  %v1286 = vmul.f32 %v1281, 1.442695
  %v1287 = vpow.pop %v1286
  %v1288 = vmul.f32 %v1282, 1.442695
  %v1289 = vpow.pop %v1288
  %v1290 = vmul.f32 %v1283, 1.442695
  %v1291 = vpow.pop %v1290
  %v1292 = vadd.f32 %v1285, 1.0
  %v1293 = vadd.f32 %v1287, 1.0
  %v1294 = vadd.f32 %v1289, 1.0
  %v1295 = vadd.f32 %v1291, 1.0
  %v1296 = vrcp.pop %v1292
  %v1297 = vmul.f32 1.0, %v1296
  %v1298 = vrcp.pop %v1293
  %v1299 = vmul.f32 1.0, %v1298
  %v1300 = vrcp.pop %v1294
  %v1301 = vmul.f32 1.0, %v1300
  %v1302 = vrcp.pop %v1295
  %v1303 = vmul.f32 1.0, %v1302
  %v1304 = vld [vmem:[#allocation3] sm:$0xff]
  %v1305 = vmul.f32 %v1301, %v1304
  %v1306 = vmul.f32 %v1297, %v1299
  %v1307 = vadd.f32 %v1305, %v1306
  %v1308 = vtanh.pop %v1307
  %v1309 = vmul.f32 %v1303, %v1308
  %1310 = vst [vmem:[#allocation3] sm:$0xff] %v1307
  %s1311 = scalar_lea.vmem %s4, 64
  %1312 = vst [vmem:[%s1311] sm:$0xff] %v1309
  %1313 = vrot.lane.b32.xlu0 %v1309, 1
  %v1314 = vpop.permute.xlu0 %1313
  %v1315 = vmul.f32 %v1314, %v38
  %1316 = vst [vmem:[#allocation2 + $0x10] sm:$0xff] %v1315
  %1317 = vst [vmem:[#allocation2 + $0x18] sm:$0xff] %v1309
  %1318 = vrot.lane.b32.xlu0 %v1309, 127
  %v1319 = vpop.permute.xlu0 %1318
  %v1320 = vmul.f32 %v1319, %v207
  %1321 = vst [vmem:[#allocation2 + $0x20] sm:$0xff] %v1320
  %s1322 = scalar_lea.vmem %s0, 72
  %v1323 = vld [vmem:[%s1322] sm:$0xff]
  %1324 = vrot.lane.b32.xlu0 %v1323, 1
  %v1325 = vpop.permute.xlu0 %1324
  %v1326 = vmul.f32 %v1325, %v38
  %1327 = vst [vmem:[#allocation2] sm:$0xff] %v1326
  %1328 = vst [vmem:[#allocation2 + $0x8] sm:$0xff] %v1323
  %v1329 = vld [vmem:[#allocation2] sm:$0xff]
  %v1330 = vld [vmem:[#allocation2 + $0x8] sm:$0xff]
  %v1331 = vld [vmem:[#allocation2 + $0x10] sm:$0xff]
  %v1332 = vld [vmem:[#allocation2 + $0x18] sm:$0xff]
  %v1333 = vld [vmem:[#allocation2 + $0x20] sm:$0xff]
  %1334 = vmatprep.subr.mxu0 0.0
  %1335 = vmatpush1.msra.mxu0 0.0
  %1336 = vmatprep.subr.mxu0 0.0
  %1337 = vmatpush1.msra.mxu0 0.0
  %1338 = vmatprep.subr.mxu0 0.0
  %1339 = vmatpush1.msra.mxu0 0.0
  %1340 = vmatprep.subr.mxu0 0.0
  %1341 = vmatpush1.msra.mxu0 0.0
  %1342 = vmatprep.subr.mxu0 0.0
  %1343 = vmatpush1.msra.mxu0 0.0
  %1344 = vmatprep.subr.mxu0 0.0
  %1345 = vmatpush1.msra.mxu0 0.0
  %1346 = vmatprep.subr.mxu0 0.0
  %1347 = vmatpush1.msra.mxu0 0.0
  %1348 = vmatprep.subr.mxu0 0.0
  %1349 = vmatpush1.msra.mxu0 0.0
  %1350 = vmatprep.subr.mxu0 0.0
  %1351 = vmatpush1.msra.mxu0 0.0
  %1352 = vmatprep.subr.mxu0 0.0
  %1353 = vmatpush1.msra.mxu0 0.0
  %1354 = vmatprep.subr.mxu0 0.0
  %1355 = vmatpush1.msra.mxu0 0.0
  %1356 = vmatprep.subr.mxu0 0.0
  %1357 = vmatpush1.msra.mxu0 %v1333
  %1358 = vmatprep.subr.mxu0 0.0
  %1359 = vmatpush1.msra.mxu0 %v1332
  %1360 = vmatprep.subr.mxu0 0.0
  %1361 = vmatpush1.msra.mxu0 %v1331
  %1362 = vmatprep.subr.mxu0 0.0
  %1363 = vmatpush1.msra.mxu0 %v1330
  %1364 = vmatprep.subr.mxu0 0.0
  %1365 = vmatpush1.msra.mxu0 %v1329
  %1366 = vmatprep.subr.mxu0 0.0
  %1367 = vmatpush2.msra.mxu0 0.0
  %1368 = vmatprep.subr.mxu0 0.0
  %1369 = vmatpush2.msra.mxu0 0.0
  %1370 = vmatprep.subr.mxu0 0.0
  %1371 = vmatpush2.msra.mxu0 0.0
  %1372 = vmatprep.subr.mxu0 0.0
  %1373 = vmatpush2.msra.mxu0 0.0
  %1374 = vmatprep.subr.mxu0 0.0
  %1375 = vmatpush2.msra.mxu0 0.0
  %1376 = vmatprep.subr.mxu0 0.0
  %1377 = vmatpush2.msra.mxu0 0.0
  %1378 = vmatprep.subr.mxu0 0.0
  %1379 = vmatpush2.msra.mxu0 0.0
  %1380 = vmatprep.subr.mxu0 0.0
  %1381 = vmatpush2.msra.mxu0 0.0
  %1382 = vmatprep.subr.mxu0 0.0
  %1383 = vmatpush2.msra.mxu0 0.0
  %1384 = vmatprep.subr.mxu0 0.0
  %1385 = vmatpush2.msra.mxu0 0.0
  %1386 = vmatprep.subr.mxu0 0.0
  %1387 = vmatpush2.msra.mxu0 0.0
  %1388 = vmatprep.subr.mxu0 0.0
  %1389 = vmatpush2.msra.mxu0 0.0
  %1390 = vmatprep.subr.mxu0 0.0
  %1391 = vmatpush2.msra.mxu0 0.0
  %1392 = vmatprep.subr.mxu0 0.0
  %1393 = vmatpush2.msra.mxu0 0.0
  %1394 = vmatprep.subr.mxu0 0.0
  %1395 = vmatpush2.msra.mxu0 0.0
  %1396 = vmatprep.subr.mxu0 0.0
  %1397 = vmatpush2.msra.mxu0 0.0
  %1398 = vmatprep.mubr.f32.mxu0 0.0
  %1399 = vmatmul.mubr.f32.gmra.mxu0 %v69
  %v1400 = vpop.f32.mrf.mxu0
  %v1401 = vadd.f32 %v50, %v1400
  %v1402 = vpop.f32.mrf.mxu0
  %1403 = vmatprep.mubr.f32.mxu0 0.0
  %1404 = vmatmul.mubr.f32.gmra.mxu0 %v72
  %v1405 = vpop.f32.mrf.mxu0
  %v1406 = vadd.f32 %v55, %v1405
  %v1407 = vpop.f32.mrf.mxu0
  %1408 = vmatprep.mubr.f32.mxu0 0.0
  %1409 = vmatmul.mubr.f32.gmra.mxu0 %v75
  %v1410 = vpop.f32.mrf.mxu0
  %v1411 = vadd.f32 %v60, %v1410
  %v1412 = vpop.f32.mrf.mxu0
  %1413 = vmatprep.mubr.f32.mxu0 0.0
  %1414 = vmatmul.mubr.f32.gmra.mxu0 %v78
  %v1415 = vpop.f32.mrf.mxu0
  %v1416 = vadd.f32 %v65, %v1415
  %v1417 = vpop.f32.mrf.mxu0
  %1418 = vdwg.mxu0
  %v1419 = vxor.u32 %v1401, 2147483648
  %v1420 = vxor.u32 %v1406, 2147483648
  %v1421 = vxor.u32 %v1411, 2147483648
  %v1422 = vxor.u32 %v1416, 2147483648
  %v1423 = vmul.f32 %v1419, 1.442695
  %v1424 = vpow.pop %v1423
  %v1425 = vmul.f32 %v1420, 1.442695
  %v1426 = vpow.pop %v1425
  %v1427 = vmul.f32 %v1421, 1.442695
  %v1428 = vpow.pop %v1427
  %v1429 = vmul.f32 %v1422, 1.442695
  %v1430 = vpow.pop %v1429
  %v1431 = vadd.f32 %v1424, 1.0
  %v1432 = vadd.f32 %v1426, 1.0
  %v1433 = vadd.f32 %v1428, 1.0
  %v1434 = vadd.f32 %v1430, 1.0
  %v1435 = vrcp.pop %v1431
  %v1436 = vmul.f32 1.0, %v1435
  %v1437 = vrcp.pop %v1432
  %v1438 = vmul.f32 1.0, %v1437
  %v1439 = vrcp.pop %v1433
  %v1440 = vmul.f32 1.0, %v1439
  %v1441 = vrcp.pop %v1434
  %v1442 = vmul.f32 1.0, %v1441
  %v1443 = vld [vmem:[#allocation3] sm:$0xff]
  %v1444 = vmul.f32 %v1440, %v1443
  %v1445 = vmul.f32 %v1436, %v1438
  %v1446 = vadd.f32 %v1444, %v1445
  %v1447 = vtanh.pop %v1446
  %v1448 = vmul.f32 %v1442, %v1447
  %1449 = vst [vmem:[#allocation3] sm:$0xff] %v1446
  %s1450 = scalar_lea.vmem %s4, 72
  %1451 = vst [vmem:[%s1450] sm:$0xff] %v1448
  %1452 = vrot.lane.b32.xlu0 %v1448, 1
  %v1453 = vpop.permute.xlu0 %1452
  %v1454 = vmul.f32 %v1453, %v38
  %1455 = vst [vmem:[#allocation2 + $0x10] sm:$0xff] %v1454
  %1456 = vst [vmem:[#allocation2 + $0x18] sm:$0xff] %v1448
  %1457 = vrot.lane.b32.xlu0 %v1448, 127
  %v1458 = vpop.permute.xlu0 %1457
  %v1459 = vmul.f32 %v1458, %v207
  %1460 = vst [vmem:[#allocation2 + $0x20] sm:$0xff] %v1459
  %s1461 = scalar_lea.vmem %s0, 80
  %v1462 = vld [vmem:[%s1461] sm:$0xff]
  %1463 = vrot.lane.b32.xlu0 %v1462, 1
  %v1464 = vpop.permute.xlu0 %1463
  %v1465 = vmul.f32 %v1464, %v38
  %1466 = vst [vmem:[#allocation2] sm:$0xff] %v1465
  %1467 = vst [vmem:[#allocation2 + $0x8] sm:$0xff] %v1462
  %v1468 = vld [vmem:[#allocation2] sm:$0xff]
  %v1469 = vld [vmem:[#allocation2 + $0x8] sm:$0xff]
  %v1470 = vld [vmem:[#allocation2 + $0x10] sm:$0xff]
  %v1471 = vld [vmem:[#allocation2 + $0x18] sm:$0xff]
  %v1472 = vld [vmem:[#allocation2 + $0x20] sm:$0xff]
  %1473 = vmatprep.subr.mxu0 0.0
  %1474 = vmatpush1.msra.mxu0 0.0
  %1475 = vmatprep.subr.mxu0 0.0
  %1476 = vmatpush1.msra.mxu0 0.0
  %1477 = vmatprep.subr.mxu0 0.0
  %1478 = vmatpush1.msra.mxu0 0.0
  %1479 = vmatprep.subr.mxu0 0.0
  %1480 = vmatpush1.msra.mxu0 0.0
  %1481 = vmatprep.subr.mxu0 0.0
  %1482 = vmatpush1.msra.mxu0 0.0
  %1483 = vmatprep.subr.mxu0 0.0
  %1484 = vmatpush1.msra.mxu0 0.0
  %1485 = vmatprep.subr.mxu0 0.0
  %1486 = vmatpush1.msra.mxu0 0.0
  %1487 = vmatprep.subr.mxu0 0.0
  %1488 = vmatpush1.msra.mxu0 0.0
  %1489 = vmatprep.subr.mxu0 0.0
  %1490 = vmatpush1.msra.mxu0 0.0
  %1491 = vmatprep.subr.mxu0 0.0
  %1492 = vmatpush1.msra.mxu0 0.0
  %1493 = vmatprep.subr.mxu0 0.0
  %1494 = vmatpush1.msra.mxu0 0.0
  %1495 = vmatprep.subr.mxu0 0.0
  %1496 = vmatpush1.msra.mxu0 %v1472
  %1497 = vmatprep.subr.mxu0 0.0
  %1498 = vmatpush1.msra.mxu0 %v1471
  %1499 = vmatprep.subr.mxu0 0.0
  %1500 = vmatpush1.msra.mxu0 %v1470
  %1501 = vmatprep.subr.mxu0 0.0
  %1502 = vmatpush1.msra.mxu0 %v1469
  %1503 = vmatprep.subr.mxu0 0.0
  %1504 = vmatpush1.msra.mxu0 %v1468
  %1505 = vmatprep.subr.mxu0 0.0
  %1506 = vmatpush2.msra.mxu0 0.0
  %1507 = vmatprep.subr.mxu0 0.0
  %1508 = vmatpush2.msra.mxu0 0.0
  %1509 = vmatprep.subr.mxu0 0.0
  %1510 = vmatpush2.msra.mxu0 0.0
  %1511 = vmatprep.subr.mxu0 0.0
  %1512 = vmatpush2.msra.mxu0 0.0
  %1513 = vmatprep.subr.mxu0 0.0
  %1514 = vmatpush2.msra.mxu0 0.0
  %1515 = vmatprep.subr.mxu0 0.0
  %1516 = vmatpush2.msra.mxu0 0.0
  %1517 = vmatprep.subr.mxu0 0.0
  %1518 = vmatpush2.msra.mxu0 0.0
  %1519 = vmatprep.subr.mxu0 0.0
  %1520 = vmatpush2.msra.mxu0 0.0
  %1521 = vmatprep.subr.mxu0 0.0
  %1522 = vmatpush2.msra.mxu0 0.0
  %1523 = vmatprep.subr.mxu0 0.0
  %1524 = vmatpush2.msra.mxu0 0.0
  %1525 = vmatprep.subr.mxu0 0.0
  %1526 = vmatpush2.msra.mxu0 0.0
  %1527 = vmatprep.subr.mxu0 0.0
  %1528 = vmatpush2.msra.mxu0 0.0
  %1529 = vmatprep.subr.mxu0 0.0
  %1530 = vmatpush2.msra.mxu0 0.0
  %1531 = vmatprep.subr.mxu0 0.0
  %1532 = vmatpush2.msra.mxu0 0.0
  %1533 = vmatprep.subr.mxu0 0.0
  %1534 = vmatpush2.msra.mxu0 0.0
  %1535 = vmatprep.subr.mxu0 0.0
  %1536 = vmatpush2.msra.mxu0 0.0
  %1537 = vmatprep.mubr.f32.mxu0 0.0
  %1538 = vmatmul.mubr.f32.gmra.mxu0 %v69
  %v1539 = vpop.f32.mrf.mxu0
  %v1540 = vadd.f32 %v50, %v1539
  %v1541 = vpop.f32.mrf.mxu0
  %1542 = vmatprep.mubr.f32.mxu0 0.0
  %1543 = vmatmul.mubr.f32.gmra.mxu0 %v72
  %v1544 = vpop.f32.mrf.mxu0
  %v1545 = vadd.f32 %v55, %v1544
  %v1546 = vpop.f32.mrf.mxu0
  %1547 = vmatprep.mubr.f32.mxu0 0.0
  %1548 = vmatmul.mubr.f32.gmra.mxu0 %v75
  %v1549 = vpop.f32.mrf.mxu0
  %v1550 = vadd.f32 %v60, %v1549
  %v1551 = vpop.f32.mrf.mxu0
  %1552 = vmatprep.mubr.f32.mxu0 0.0
  %1553 = vmatmul.mubr.f32.gmra.mxu0 %v78
  %v1554 = vpop.f32.mrf.mxu0
  %v1555 = vadd.f32 %v65, %v1554
  %v1556 = vpop.f32.mrf.mxu0
  %1557 = vdwg.mxu0
  %v1558 = vxor.u32 %v1540, 2147483648
  %v1559 = vxor.u32 %v1545, 2147483648
  %v1560 = vxor.u32 %v1550, 2147483648
  %v1561 = vxor.u32 %v1555, 2147483648
  %v1562 = vmul.f32 %v1558, 1.442695
  %v1563 = vpow.pop %v1562
  %v1564 = vmul.f32 %v1559, 1.442695
  %v1565 = vpow.pop %v1564
  %v1566 = vmul.f32 %v1560, 1.442695
  %v1567 = vpow.pop %v1566
  %v1568 = vmul.f32 %v1561, 1.442695
  %v1569 = vpow.pop %v1568
  %v1570 = vadd.f32 %v1563, 1.0
  %v1571 = vadd.f32 %v1565, 1.0
  %v1572 = vadd.f32 %v1567, 1.0
  %v1573 = vadd.f32 %v1569, 1.0
  %v1574 = vrcp.pop %v1570
  %v1575 = vmul.f32 1.0, %v1574
  %v1576 = vrcp.pop %v1571
  %v1577 = vmul.f32 1.0, %v1576
  %v1578 = vrcp.pop %v1572
  %v1579 = vmul.f32 1.0, %v1578
  %v1580 = vrcp.pop %v1573
  %v1581 = vmul.f32 1.0, %v1580
  %v1582 = vld [vmem:[#allocation3] sm:$0xff]
  %v1583 = vmul.f32 %v1579, %v1582
  %v1584 = vmul.f32 %v1575, %v1577
  %v1585 = vadd.f32 %v1583, %v1584
  %v1586 = vtanh.pop %v1585
  %v1587 = vmul.f32 %v1581, %v1586
  %1588 = vst [vmem:[#allocation3] sm:$0xff] %v1585
  %s1589 = scalar_lea.vmem %s4, 80
  %1590 = vst [vmem:[%s1589] sm:$0xff] %v1587
  %1591 = vrot.lane.b32.xlu0 %v1587, 1
  %v1592 = vpop.permute.xlu0 %1591
  %v1593 = vmul.f32 %v1592, %v38
  %1594 = vst [vmem:[#allocation2 + $0x10] sm:$0xff] %v1593
  %1595 = vst [vmem:[#allocation2 + $0x18] sm:$0xff] %v1587
  %1596 = vrot.lane.b32.xlu0 %v1587, 127
  %v1597 = vpop.permute.xlu0 %1596
  %v1598 = vmul.f32 %v1597, %v207
  %1599 = vst [vmem:[#allocation2 + $0x20] sm:$0xff] %v1598
  %s1600 = scalar_lea.vmem %s0, 88
  %v1601 = vld [vmem:[%s1600] sm:$0xff]
  %1602 = vrot.lane.b32.xlu0 %v1601, 1
  %v1603 = vpop.permute.xlu0 %1602
  %v1604 = vmul.f32 %v1603, %v38
  %1605 = vst [vmem:[#allocation2] sm:$0xff] %v1604
  %1606 = vst [vmem:[#allocation2 + $0x8] sm:$0xff] %v1601
  %v1607 = vld [vmem:[#allocation2] sm:$0xff]
  %v1608 = vld [vmem:[#allocation2 + $0x8] sm:$0xff]
  %v1609 = vld [vmem:[#allocation2 + $0x10] sm:$0xff]
  %v1610 = vld [vmem:[#allocation2 + $0x18] sm:$0xff]
  %v1611 = vld [vmem:[#allocation2 + $0x20] sm:$0xff]
  %1612 = vmatprep.subr.mxu0 0.0
  %1613 = vmatpush1.msra.mxu0 0.0
  %1614 = vmatprep.subr.mxu0 0.0
  %1615 = vmatpush1.msra.mxu0 0.0
  %1616 = vmatprep.subr.mxu0 0.0
  %1617 = vmatpush1.msra.mxu0 0.0
  %1618 = vmatprep.subr.mxu0 0.0
  %1619 = vmatpush1.msra.mxu0 0.0
  %1620 = vmatprep.subr.mxu0 0.0
  %1621 = vmatpush1.msra.mxu0 0.0
  %1622 = vmatprep.subr.mxu0 0.0
  %1623 = vmatpush1.msra.mxu0 0.0
  %1624 = vmatprep.subr.mxu0 0.0
  %1625 = vmatpush1.msra.mxu0 0.0
  %1626 = vmatprep.subr.mxu0 0.0
  %1627 = vmatpush1.msra.mxu0 0.0
  %1628 = vmatprep.subr.mxu0 0.0
  %1629 = vmatpush1.msra.mxu0 0.0
  %1630 = vmatprep.subr.mxu0 0.0
  %1631 = vmatpush1.msra.mxu0 0.0
  %1632 = vmatprep.subr.mxu0 0.0
  %1633 = vmatpush1.msra.mxu0 0.0
  %1634 = vmatprep.subr.mxu0 0.0
  %1635 = vmatpush1.msra.mxu0 %v1611
  %1636 = vmatprep.subr.mxu0 0.0
  %1637 = vmatpush1.msra.mxu0 %v1610
  %1638 = vmatprep.subr.mxu0 0.0
  %1639 = vmatpush1.msra.mxu0 %v1609
  %1640 = vmatprep.subr.mxu0 0.0
  %1641 = vmatpush1.msra.mxu0 %v1608
  %1642 = vmatprep.subr.mxu0 0.0
  %1643 = vmatpush1.msra.mxu0 %v1607
  %1644 = vmatprep.subr.mxu0 0.0
  %1645 = vmatpush2.msra.mxu0 0.0
  %1646 = vmatprep.subr.mxu0 0.0
  %1647 = vmatpush2.msra.mxu0 0.0
  %1648 = vmatprep.subr.mxu0 0.0
  %1649 = vmatpush2.msra.mxu0 0.0
  %1650 = vmatprep.subr.mxu0 0.0
  %1651 = vmatpush2.msra.mxu0 0.0
  %1652 = vmatprep.subr.mxu0 0.0
  %1653 = vmatpush2.msra.mxu0 0.0
  %1654 = vmatprep.subr.mxu0 0.0
  %1655 = vmatpush2.msra.mxu0 0.0
  %1656 = vmatprep.subr.mxu0 0.0
  %1657 = vmatpush2.msra.mxu0 0.0
  %1658 = vmatprep.subr.mxu0 0.0
  %1659 = vmatpush2.msra.mxu0 0.0
  %1660 = vmatprep.subr.mxu0 0.0
  %1661 = vmatpush2.msra.mxu0 0.0
  %1662 = vmatprep.subr.mxu0 0.0
  %1663 = vmatpush2.msra.mxu0 0.0
  %1664 = vmatprep.subr.mxu0 0.0
  %1665 = vmatpush2.msra.mxu0 0.0
  %1666 = vmatprep.subr.mxu0 0.0
  %1667 = vmatpush2.msra.mxu0 0.0
  %1668 = vmatprep.subr.mxu0 0.0
  %1669 = vmatpush2.msra.mxu0 0.0
  %1670 = vmatprep.subr.mxu0 0.0
  %1671 = vmatpush2.msra.mxu0 0.0
  %1672 = vmatprep.subr.mxu0 0.0
  %1673 = vmatpush2.msra.mxu0 0.0
  %1674 = vmatprep.subr.mxu0 0.0
  %1675 = vmatpush2.msra.mxu0 0.0
  %1676 = vmatprep.mubr.f32.mxu0 0.0
  %1677 = vmatmul.mubr.f32.gmra.mxu0 %v69
  %v1678 = vpop.f32.mrf.mxu0
  %v1679 = vadd.f32 %v50, %v1678
  %v1680 = vpop.f32.mrf.mxu0
  %1681 = vmatprep.mubr.f32.mxu0 0.0
  %1682 = vmatmul.mubr.f32.gmra.mxu0 %v72
  %v1683 = vpop.f32.mrf.mxu0
  %v1684 = vadd.f32 %v55, %v1683
  %v1685 = vpop.f32.mrf.mxu0
  %1686 = vmatprep.mubr.f32.mxu0 0.0
  %1687 = vmatmul.mubr.f32.gmra.mxu0 %v75
  %v1688 = vpop.f32.mrf.mxu0
  %v1689 = vadd.f32 %v60, %v1688
  %v1690 = vpop.f32.mrf.mxu0
  %1691 = vmatprep.mubr.f32.mxu0 0.0
  %1692 = vmatmul.mubr.f32.gmra.mxu0 %v78
  %v1693 = vpop.f32.mrf.mxu0
  %v1694 = vadd.f32 %v65, %v1693
  %v1695 = vpop.f32.mrf.mxu0
  %1696 = vdwg.mxu0
  %v1697 = vxor.u32 %v1679, 2147483648
  %v1698 = vxor.u32 %v1684, 2147483648
  %v1699 = vxor.u32 %v1689, 2147483648
  %v1700 = vxor.u32 %v1694, 2147483648
  %v1701 = vmul.f32 %v1697, 1.442695
  %v1702 = vpow.pop %v1701
  %v1703 = vmul.f32 %v1698, 1.442695
  %v1704 = vpow.pop %v1703
  %v1705 = vmul.f32 %v1699, 1.442695
  %v1706 = vpow.pop %v1705
  %v1707 = vmul.f32 %v1700, 1.442695
  %v1708 = vpow.pop %v1707
  %v1709 = vadd.f32 %v1702, 1.0
  %v1710 = vadd.f32 %v1704, 1.0
  %v1711 = vadd.f32 %v1706, 1.0
  %v1712 = vadd.f32 %v1708, 1.0
  %v1713 = vrcp.pop %v1709
  %v1714 = vmul.f32 1.0, %v1713
  %v1715 = vrcp.pop %v1710
  %v1716 = vmul.f32 1.0, %v1715
  %v1717 = vrcp.pop %v1711
  %v1718 = vmul.f32 1.0, %v1717
  %v1719 = vrcp.pop %v1712
  %v1720 = vmul.f32 1.0, %v1719
  %v1721 = vld [vmem:[#allocation3] sm:$0xff]
  %v1722 = vmul.f32 %v1718, %v1721
  %v1723 = vmul.f32 %v1714, %v1716
  %v1724 = vadd.f32 %v1722, %v1723
  %v1725 = vtanh.pop %v1724
  %v1726 = vmul.f32 %v1720, %v1725
  %1727 = vst [vmem:[#allocation3] sm:$0xff] %v1724
  %s1728 = scalar_lea.vmem %s4, 88
  %1729 = vst [vmem:[%s1728] sm:$0xff] %v1726
  %1730 = vrot.lane.b32.xlu0 %v1726, 1
  %v1731 = vpop.permute.xlu0 %1730
  %v1732 = vmul.f32 %v1731, %v38
  %1733 = vst [vmem:[#allocation2 + $0x10] sm:$0xff] %v1732
  %1734 = vst [vmem:[#allocation2 + $0x18] sm:$0xff] %v1726
  %1735 = vrot.lane.b32.xlu0 %v1726, 127
  %v1736 = vpop.permute.xlu0 %1735
  %v1737 = vmul.f32 %v1736, %v207
  %1738 = vst [vmem:[#allocation2 + $0x20] sm:$0xff] %v1737
  %s1739 = scalar_lea.vmem %s0, 96
  %v1740 = vld [vmem:[%s1739] sm:$0xff]
  %1741 = vrot.lane.b32.xlu0 %v1740, 1
  %v1742 = vpop.permute.xlu0 %1741
  %v1743 = vmul.f32 %v1742, %v38
  %1744 = vst [vmem:[#allocation2] sm:$0xff] %v1743
  %1745 = vst [vmem:[#allocation2 + $0x8] sm:$0xff] %v1740
  %v1746 = vld [vmem:[#allocation2] sm:$0xff]
  %v1747 = vld [vmem:[#allocation2 + $0x8] sm:$0xff]
  %v1748 = vld [vmem:[#allocation2 + $0x10] sm:$0xff]
  %v1749 = vld [vmem:[#allocation2 + $0x18] sm:$0xff]
  %v1750 = vld [vmem:[#allocation2 + $0x20] sm:$0xff]
  %1751 = vmatprep.subr.mxu0 0.0
  %1752 = vmatpush1.msra.mxu0 0.0
  %1753 = vmatprep.subr.mxu0 0.0
  %1754 = vmatpush1.msra.mxu0 0.0
  %1755 = vmatprep.subr.mxu0 0.0
  %1756 = vmatpush1.msra.mxu0 0.0
  %1757 = vmatprep.subr.mxu0 0.0
  %1758 = vmatpush1.msra.mxu0 0.0
  %1759 = vmatprep.subr.mxu0 0.0
  %1760 = vmatpush1.msra.mxu0 0.0
  %1761 = vmatprep.subr.mxu0 0.0
  %1762 = vmatpush1.msra.mxu0 0.0
  %1763 = vmatprep.subr.mxu0 0.0
  %1764 = vmatpush1.msra.mxu0 0.0
  %1765 = vmatprep.subr.mxu0 0.0
  %1766 = vmatpush1.msra.mxu0 0.0
  %1767 = vmatprep.subr.mxu0 0.0
  %1768 = vmatpush1.msra.mxu0 0.0
  %1769 = vmatprep.subr.mxu0 0.0
  %1770 = vmatpush1.msra.mxu0 0.0
  %1771 = vmatprep.subr.mxu0 0.0
  %1772 = vmatpush1.msra.mxu0 0.0
  %1773 = vmatprep.subr.mxu0 0.0
  %1774 = vmatpush1.msra.mxu0 %v1750
  %1775 = vmatprep.subr.mxu0 0.0
  %1776 = vmatpush1.msra.mxu0 %v1749
  %1777 = vmatprep.subr.mxu0 0.0
  %1778 = vmatpush1.msra.mxu0 %v1748
  %1779 = vmatprep.subr.mxu0 0.0
  %1780 = vmatpush1.msra.mxu0 %v1747
  %1781 = vmatprep.subr.mxu0 0.0
  %1782 = vmatpush1.msra.mxu0 %v1746
  %1783 = vmatprep.subr.mxu0 0.0
  %1784 = vmatpush2.msra.mxu0 0.0
  %1785 = vmatprep.subr.mxu0 0.0
  %1786 = vmatpush2.msra.mxu0 0.0
  %1787 = vmatprep.subr.mxu0 0.0
  %1788 = vmatpush2.msra.mxu0 0.0
  %1789 = vmatprep.subr.mxu0 0.0
  %1790 = vmatpush2.msra.mxu0 0.0
  %1791 = vmatprep.subr.mxu0 0.0
  %1792 = vmatpush2.msra.mxu0 0.0
  %1793 = vmatprep.subr.mxu0 0.0
  %1794 = vmatpush2.msra.mxu0 0.0
  %1795 = vmatprep.subr.mxu0 0.0
  %1796 = vmatpush2.msra.mxu0 0.0
  %1797 = vmatprep.subr.mxu0 0.0
  %1798 = vmatpush2.msra.mxu0 0.0
  %1799 = vmatprep.subr.mxu0 0.0
  %1800 = vmatpush2.msra.mxu0 0.0
  %1801 = vmatprep.subr.mxu0 0.0
  %1802 = vmatpush2.msra.mxu0 0.0
  %1803 = vmatprep.subr.mxu0 0.0
  %1804 = vmatpush2.msra.mxu0 0.0
  %1805 = vmatprep.subr.mxu0 0.0
  %1806 = vmatpush2.msra.mxu0 0.0
  %1807 = vmatprep.subr.mxu0 0.0
  %1808 = vmatpush2.msra.mxu0 0.0
  %1809 = vmatprep.subr.mxu0 0.0
  %1810 = vmatpush2.msra.mxu0 0.0
  %1811 = vmatprep.subr.mxu0 0.0
  %1812 = vmatpush2.msra.mxu0 0.0
  %1813 = vmatprep.subr.mxu0 0.0
  %1814 = vmatpush2.msra.mxu0 0.0
  %1815 = vmatprep.mubr.f32.mxu0 0.0
  %1816 = vmatmul.mubr.f32.gmra.mxu0 %v69
  %v1817 = vpop.f32.mrf.mxu0
  %v1818 = vadd.f32 %v50, %v1817
  %v1819 = vpop.f32.mrf.mxu0
  %1820 = vmatprep.mubr.f32.mxu0 0.0
  %1821 = vmatmul.mubr.f32.gmra.mxu0 %v72
  %v1822 = vpop.f32.mrf.mxu0
  %v1823 = vadd.f32 %v55, %v1822
  %v1824 = vpop.f32.mrf.mxu0
  %1825 = vmatprep.mubr.f32.mxu0 0.0
  %1826 = vmatmul.mubr.f32.gmra.mxu0 %v75
  %v1827 = vpop.f32.mrf.mxu0
  %v1828 = vadd.f32 %v60, %v1827
  %v1829 = vpop.f32.mrf.mxu0
  %1830 = vmatprep.mubr.f32.mxu0 0.0
  %1831 = vmatmul.mubr.f32.gmra.mxu0 %v78
  %v1832 = vpop.f32.mrf.mxu0
  %v1833 = vadd.f32 %v65, %v1832
  %v1834 = vpop.f32.mrf.mxu0
  %1835 = vdwg.mxu0
  %v1836 = vxor.u32 %v1818, 2147483648
  %v1837 = vxor.u32 %v1823, 2147483648
  %v1838 = vxor.u32 %v1828, 2147483648
  %v1839 = vxor.u32 %v1833, 2147483648
  %v1840 = vmul.f32 %v1836, 1.442695
  %v1841 = vpow.pop %v1840
  %v1842 = vmul.f32 %v1837, 1.442695
  %v1843 = vpow.pop %v1842
  %v1844 = vmul.f32 %v1838, 1.442695
  %v1845 = vpow.pop %v1844
  %v1846 = vmul.f32 %v1839, 1.442695
  %v1847 = vpow.pop %v1846
  %v1848 = vadd.f32 %v1841, 1.0
  %v1849 = vadd.f32 %v1843, 1.0
  %v1850 = vadd.f32 %v1845, 1.0
  %v1851 = vadd.f32 %v1847, 1.0
  %v1852 = vrcp.pop %v1848
  %v1853 = vmul.f32 1.0, %v1852
  %v1854 = vrcp.pop %v1849
  %v1855 = vmul.f32 1.0, %v1854
  %v1856 = vrcp.pop %v1850
  %v1857 = vmul.f32 1.0, %v1856
  %v1858 = vrcp.pop %v1851
  %v1859 = vmul.f32 1.0, %v1858
  %v1860 = vld [vmem:[#allocation3] sm:$0xff]
  %v1861 = vmul.f32 %v1857, %v1860
  %v1862 = vmul.f32 %v1853, %v1855
  %v1863 = vadd.f32 %v1861, %v1862
  %v1864 = vtanh.pop %v1863
  %v1865 = vmul.f32 %v1859, %v1864
  %1866 = vst [vmem:[#allocation3] sm:$0xff] %v1863
  %s1867 = scalar_lea.vmem %s4, 96
  %1868 = vst [vmem:[%s1867] sm:$0xff] %v1865
  %1869 = vrot.lane.b32.xlu0 %v1865, 1
  %v1870 = vpop.permute.xlu0 %1869
  %v1871 = vmul.f32 %v1870, %v38
  %1872 = vst [vmem:[#allocation2 + $0x10] sm:$0xff] %v1871
  %1873 = vst [vmem:[#allocation2 + $0x18] sm:$0xff] %v1865
  %1874 = vrot.lane.b32.xlu0 %v1865, 127
  %v1875 = vpop.permute.xlu0 %1874
  %v1876 = vmul.f32 %v1875, %v207
  %1877 = vst [vmem:[#allocation2 + $0x20] sm:$0xff] %v1876
  %s1878 = scalar_lea.vmem %s0, 104
  %v1879 = vld [vmem:[%s1878] sm:$0xff]
  %1880 = vrot.lane.b32.xlu0 %v1879, 1
  %v1881 = vpop.permute.xlu0 %1880
  %v1882 = vmul.f32 %v1881, %v38
  %1883 = vst [vmem:[#allocation2] sm:$0xff] %v1882
  %1884 = vst [vmem:[#allocation2 + $0x8] sm:$0xff] %v1879
  %v1885 = vld [vmem:[#allocation2] sm:$0xff]
  %v1886 = vld [vmem:[#allocation2 + $0x8] sm:$0xff]
  %v1887 = vld [vmem:[#allocation2 + $0x10] sm:$0xff]
  %v1888 = vld [vmem:[#allocation2 + $0x18] sm:$0xff]
  %v1889 = vld [vmem:[#allocation2 + $0x20] sm:$0xff]
  %1890 = vmatprep.subr.mxu0 0.0
  %1891 = vmatpush1.msra.mxu0 0.0
  %1892 = vmatprep.subr.mxu0 0.0
  %1893 = vmatpush1.msra.mxu0 0.0
  %1894 = vmatprep.subr.mxu0 0.0
  %1895 = vmatpush1.msra.mxu0 0.0
  %1896 = vmatprep.subr.mxu0 0.0
  %1897 = vmatpush1.msra.mxu0 0.0
  %1898 = vmatprep.subr.mxu0 0.0
  %1899 = vmatpush1.msra.mxu0 0.0
  %1900 = vmatprep.subr.mxu0 0.0
  %1901 = vmatpush1.msra.mxu0 0.0
  %1902 = vmatprep.subr.mxu0 0.0
  %1903 = vmatpush1.msra.mxu0 0.0
  %1904 = vmatprep.subr.mxu0 0.0
  %1905 = vmatpush1.msra.mxu0 0.0
  %1906 = vmatprep.subr.mxu0 0.0
  %1907 = vmatpush1.msra.mxu0 0.0
  %1908 = vmatprep.subr.mxu0 0.0
  %1909 = vmatpush1.msra.mxu0 0.0
  %1910 = vmatprep.subr.mxu0 0.0
  %1911 = vmatpush1.msra.mxu0 0.0
  %1912 = vmatprep.subr.mxu0 0.0
  %1913 = vmatpush1.msra.mxu0 %v1889
  %1914 = vmatprep.subr.mxu0 0.0
  %1915 = vmatpush1.msra.mxu0 %v1888
  %1916 = vmatprep.subr.mxu0 0.0
  %1917 = vmatpush1.msra.mxu0 %v1887
  %1918 = vmatprep.subr.mxu0 0.0
  %1919 = vmatpush1.msra.mxu0 %v1886
  %1920 = vmatprep.subr.mxu0 0.0
  %1921 = vmatpush1.msra.mxu0 %v1885
  %1922 = vmatprep.subr.mxu0 0.0
  %1923 = vmatpush2.msra.mxu0 0.0
  %1924 = vmatprep.subr.mxu0 0.0
  %1925 = vmatpush2.msra.mxu0 0.0
  %1926 = vmatprep.subr.mxu0 0.0
  %1927 = vmatpush2.msra.mxu0 0.0
  %1928 = vmatprep.subr.mxu0 0.0
  %1929 = vmatpush2.msra.mxu0 0.0
  %1930 = vmatprep.subr.mxu0 0.0
  %1931 = vmatpush2.msra.mxu0 0.0
  %1932 = vmatprep.subr.mxu0 0.0
  %1933 = vmatpush2.msra.mxu0 0.0
  %1934 = vmatprep.subr.mxu0 0.0
  %1935 = vmatpush2.msra.mxu0 0.0
  %1936 = vmatprep.subr.mxu0 0.0
  %1937 = vmatpush2.msra.mxu0 0.0
  %1938 = vmatprep.subr.mxu0 0.0
  %1939 = vmatpush2.msra.mxu0 0.0
  %1940 = vmatprep.subr.mxu0 0.0
  %1941 = vmatpush2.msra.mxu0 0.0
  %1942 = vmatprep.subr.mxu0 0.0
  %1943 = vmatpush2.msra.mxu0 0.0
  %1944 = vmatprep.subr.mxu0 0.0
  %1945 = vmatpush2.msra.mxu0 0.0
  %1946 = vmatprep.subr.mxu0 0.0
  %1947 = vmatpush2.msra.mxu0 0.0
  %1948 = vmatprep.subr.mxu0 0.0
  %1949 = vmatpush2.msra.mxu0 0.0
  %1950 = vmatprep.subr.mxu0 0.0
  %1951 = vmatpush2.msra.mxu0 0.0
  %1952 = vmatprep.subr.mxu0 0.0
  %1953 = vmatpush2.msra.mxu0 0.0
  %1954 = vmatprep.mubr.f32.mxu0 0.0
  %1955 = vmatmul.mubr.f32.gmra.mxu0 %v69
  %v1956 = vpop.f32.mrf.mxu0
  %v1957 = vadd.f32 %v50, %v1956
  %v1958 = vpop.f32.mrf.mxu0
  %1959 = vmatprep.mubr.f32.mxu0 0.0
  %1960 = vmatmul.mubr.f32.gmra.mxu0 %v72
  %v1961 = vpop.f32.mrf.mxu0
  %v1962 = vadd.f32 %v55, %v1961
  %v1963 = vpop.f32.mrf.mxu0
  %1964 = vmatprep.mubr.f32.mxu0 0.0
  %1965 = vmatmul.mubr.f32.gmra.mxu0 %v75
  %v1966 = vpop.f32.mrf.mxu0
  %v1967 = vadd.f32 %v60, %v1966
  %v1968 = vpop.f32.mrf.mxu0
  %1969 = vmatprep.mubr.f32.mxu0 0.0
  %1970 = vmatmul.mubr.f32.gmra.mxu0 %v78
  %v1971 = vpop.f32.mrf.mxu0
  %v1972 = vadd.f32 %v65, %v1971
  %v1973 = vpop.f32.mrf.mxu0
  %1974 = vdwg.mxu0
  %v1975 = vxor.u32 %v1957, 2147483648
  %v1976 = vxor.u32 %v1962, 2147483648
  %v1977 = vxor.u32 %v1967, 2147483648
  %v1978 = vxor.u32 %v1972, 2147483648
  %v1979 = vmul.f32 %v1975, 1.442695
  %v1980 = vpow.pop %v1979
  %v1981 = vmul.f32 %v1976, 1.442695
  %v1982 = vpow.pop %v1981
  %v1983 = vmul.f32 %v1977, 1.442695
  %v1984 = vpow.pop %v1983
  %v1985 = vmul.f32 %v1978, 1.442695
  %v1986 = vpow.pop %v1985
  %v1987 = vadd.f32 %v1980, 1.0
  %v1988 = vadd.f32 %v1982, 1.0
  %v1989 = vadd.f32 %v1984, 1.0
  %v1990 = vadd.f32 %v1986, 1.0
  %v1991 = vrcp.pop %v1987
  %v1992 = vmul.f32 1.0, %v1991
  %v1993 = vrcp.pop %v1988
  %v1994 = vmul.f32 1.0, %v1993
  %v1995 = vrcp.pop %v1989
  %v1996 = vmul.f32 1.0, %v1995
  %v1997 = vrcp.pop %v1990
  %v1998 = vmul.f32 1.0, %v1997
  %v1999 = vld [vmem:[#allocation3] sm:$0xff]
  %v2000 = vmul.f32 %v1996, %v1999
  %v2001 = vmul.f32 %v1992, %v1994
  %v2002 = vadd.f32 %v2000, %v2001
  %v2003 = vtanh.pop %v2002
  %v2004 = vmul.f32 %v1998, %v2003
  %2005 = vst [vmem:[#allocation3] sm:$0xff] %v2002
  %s2006 = scalar_lea.vmem %s4, 104
  %2007 = vst [vmem:[%s2006] sm:$0xff] %v2004
  %2008 = vrot.lane.b32.xlu0 %v2004, 1
  %v2009 = vpop.permute.xlu0 %2008
  %v2010 = vmul.f32 %v2009, %v38
  %2011 = vst [vmem:[#allocation2 + $0x10] sm:$0xff] %v2010
  %2012 = vst [vmem:[#allocation2 + $0x18] sm:$0xff] %v2004
  %2013 = vrot.lane.b32.xlu0 %v2004, 127
  %v2014 = vpop.permute.xlu0 %2013
  %v2015 = vmul.f32 %v2014, %v207
  %2016 = vst [vmem:[#allocation2 + $0x20] sm:$0xff] %v2015
  %s2017 = scalar_lea.vmem %s0, 112
  %v2018 = vld [vmem:[%s2017] sm:$0xff]
  %2019 = vrot.lane.b32.xlu0 %v2018, 1
  %v2020 = vpop.permute.xlu0 %2019
  %v2021 = vmul.f32 %v2020, %v38
  %2022 = vst [vmem:[#allocation2] sm:$0xff] %v2021
  %2023 = vst [vmem:[#allocation2 + $0x8] sm:$0xff] %v2018
  %v2024 = vld [vmem:[#allocation2] sm:$0xff]
  %v2025 = vld [vmem:[#allocation2 + $0x8] sm:$0xff]
  %v2026 = vld [vmem:[#allocation2 + $0x10] sm:$0xff]
  %v2027 = vld [vmem:[#allocation2 + $0x18] sm:$0xff]
  %v2028 = vld [vmem:[#allocation2 + $0x20] sm:$0xff]
  %2029 = vmatprep.subr.mxu0 0.0
  %2030 = vmatpush1.msra.mxu0 0.0
  %2031 = vmatprep.subr.mxu0 0.0
  %2032 = vmatpush1.msra.mxu0 0.0
  %2033 = vmatprep.subr.mxu0 0.0
  %2034 = vmatpush1.msra.mxu0 0.0
  %2035 = vmatprep.subr.mxu0 0.0
  %2036 = vmatpush1.msra.mxu0 0.0
  %2037 = vmatprep.subr.mxu0 0.0
  %2038 = vmatpush1.msra.mxu0 0.0
  %2039 = vmatprep.subr.mxu0 0.0
  %2040 = vmatpush1.msra.mxu0 0.0
  %2041 = vmatprep.subr.mxu0 0.0
  %2042 = vmatpush1.msra.mxu0 0.0
  %2043 = vmatprep.subr.mxu0 0.0
  %2044 = vmatpush1.msra.mxu0 0.0
  %2045 = vmatprep.subr.mxu0 0.0
  %2046 = vmatpush1.msra.mxu0 0.0
  %2047 = vmatprep.subr.mxu0 0.0
  %2048 = vmatpush1.msra.mxu0 0.0
  %2049 = vmatprep.subr.mxu0 0.0
  %2050 = vmatpush1.msra.mxu0 0.0
  %2051 = vmatprep.subr.mxu0 0.0
  %2052 = vmatpush1.msra.mxu0 %v2028
  %2053 = vmatprep.subr.mxu0 0.0
  %2054 = vmatpush1.msra.mxu0 %v2027
  %2055 = vmatprep.subr.mxu0 0.0
  %2056 = vmatpush1.msra.mxu0 %v2026
  %2057 = vmatprep.subr.mxu0 0.0
  %2058 = vmatpush1.msra.mxu0 %v2025
  %2059 = vmatprep.subr.mxu0 0.0
  %2060 = vmatpush1.msra.mxu0 %v2024
  %2061 = vmatprep.subr.mxu0 0.0
  %2062 = vmatpush2.msra.mxu0 0.0
  %2063 = vmatprep.subr.mxu0 0.0
  %2064 = vmatpush2.msra.mxu0 0.0
  %2065 = vmatprep.subr.mxu0 0.0
  %2066 = vmatpush2.msra.mxu0 0.0
  %2067 = vmatprep.subr.mxu0 0.0
  %2068 = vmatpush2.msra.mxu0 0.0
  %2069 = vmatprep.subr.mxu0 0.0
  %2070 = vmatpush2.msra.mxu0 0.0
  %2071 = vmatprep.subr.mxu0 0.0
  %2072 = vmatpush2.msra.mxu0 0.0
  %2073 = vmatprep.subr.mxu0 0.0
  %2074 = vmatpush2.msra.mxu0 0.0
  %2075 = vmatprep.subr.mxu0 0.0
  %2076 = vmatpush2.msra.mxu0 0.0
  %2077 = vmatprep.subr.mxu0 0.0
  %2078 = vmatpush2.msra.mxu0 0.0
  %2079 = vmatprep.subr.mxu0 0.0
  %2080 = vmatpush2.msra.mxu0 0.0
  %2081 = vmatprep.subr.mxu0 0.0
  %2082 = vmatpush2.msra.mxu0 0.0
  %2083 = vmatprep.subr.mxu0 0.0
  %2084 = vmatpush2.msra.mxu0 0.0
  %2085 = vmatprep.subr.mxu0 0.0
  %2086 = vmatpush2.msra.mxu0 0.0
  %2087 = vmatprep.subr.mxu0 0.0
  %2088 = vmatpush2.msra.mxu0 0.0
  %2089 = vmatprep.subr.mxu0 0.0
  %2090 = vmatpush2.msra.mxu0 0.0
  %2091 = vmatprep.subr.mxu0 0.0
  %2092 = vmatpush2.msra.mxu0 0.0
  %2093 = vmatprep.mubr.f32.mxu0 0.0
  %2094 = vmatmul.mubr.f32.gmra.mxu0 %v69
  %v2095 = vpop.f32.mrf.mxu0
  %v2096 = vadd.f32 %v50, %v2095
  %v2097 = vpop.f32.mrf.mxu0
  %2098 = vmatprep.mubr.f32.mxu0 0.0
  %2099 = vmatmul.mubr.f32.gmra.mxu0 %v72
  %v2100 = vpop.f32.mrf.mxu0
  %v2101 = vadd.f32 %v55, %v2100
  %v2102 = vpop.f32.mrf.mxu0
  %2103 = vmatprep.mubr.f32.mxu0 0.0
  %2104 = vmatmul.mubr.f32.gmra.mxu0 %v75
  %v2105 = vpop.f32.mrf.mxu0
  %v2106 = vadd.f32 %v60, %v2105
  %v2107 = vpop.f32.mrf.mxu0
  %2108 = vmatprep.mubr.f32.mxu0 0.0
  %2109 = vmatmul.mubr.f32.gmra.mxu0 %v78
  %v2110 = vpop.f32.mrf.mxu0
  %v2111 = vadd.f32 %v65, %v2110
  %v2112 = vpop.f32.mrf.mxu0
  %2113 = vdwg.mxu0
  %v2114 = vxor.u32 %v2096, 2147483648
  %v2115 = vxor.u32 %v2101, 2147483648
  %v2116 = vxor.u32 %v2106, 2147483648
  %v2117 = vxor.u32 %v2111, 2147483648
  %v2118 = vmul.f32 %v2114, 1.442695
  %v2119 = vpow.pop %v2118
  %v2120 = vmul.f32 %v2115, 1.442695
  %v2121 = vpow.pop %v2120
  %v2122 = vmul.f32 %v2116, 1.442695
  %v2123 = vpow.pop %v2122
  %v2124 = vmul.f32 %v2117, 1.442695
  %v2125 = vpow.pop %v2124
  %v2126 = vadd.f32 %v2119, 1.0
  %v2127 = vadd.f32 %v2121, 1.0
  %v2128 = vadd.f32 %v2123, 1.0
  %v2129 = vadd.f32 %v2125, 1.0
  %v2130 = vrcp.pop %v2126
  %v2131 = vmul.f32 1.0, %v2130
  %v2132 = vrcp.pop %v2127
  %v2133 = vmul.f32 1.0, %v2132
  %v2134 = vrcp.pop %v2128
  %v2135 = vmul.f32 1.0, %v2134
  %v2136 = vrcp.pop %v2129
  %v2137 = vmul.f32 1.0, %v2136
  %v2138 = vld [vmem:[#allocation3] sm:$0xff]
  %v2139 = vmul.f32 %v2135, %v2138
  %v2140 = vmul.f32 %v2131, %v2133
  %v2141 = vadd.f32 %v2139, %v2140
  %v2142 = vtanh.pop %v2141
  %v2143 = vmul.f32 %v2137, %v2142
  %2144 = vst [vmem:[#allocation3] sm:$0xff] %v2141
  %s2145 = scalar_lea.vmem %s4, 112
  %2146 = vst [vmem:[%s2145] sm:$0xff] %v2143
  %2147 = vrot.lane.b32.xlu0 %v2143, 1
  %v2148 = vpop.permute.xlu0 %2147
  %v2149 = vmul.f32 %v2148, %v38
  %2150 = vst [vmem:[#allocation2 + $0x10] sm:$0xff] %v2149
  %2151 = vst [vmem:[#allocation2 + $0x18] sm:$0xff] %v2143
  %2152 = vrot.lane.b32.xlu0 %v2143, 127
  %v2153 = vpop.permute.xlu0 %2152
  %v2154 = vmul.f32 %v2153, %v207
  %2155 = vst [vmem:[#allocation2 + $0x20] sm:$0xff] %v2154
  %s2156 = scalar_lea.vmem %s0, 120
  %v2157 = vld [vmem:[%s2156] sm:$0xff]
  %2158 = vrot.lane.b32.xlu0 %v2157, 1
  %v2159 = vpop.permute.xlu0 %2158
  %v2160 = vmul.f32 %v2159, %v38
  %2161 = vst [vmem:[#allocation2] sm:$0xff] %v2160
  %2162 = vst [vmem:[#allocation2 + $0x8] sm:$0xff] %v2157
  %v2163 = vld [vmem:[#allocation2] sm:$0xff]
  %v2164 = vld [vmem:[#allocation2 + $0x8] sm:$0xff]
  %v2165 = vld [vmem:[#allocation2 + $0x10] sm:$0xff]
  %v2166 = vld [vmem:[#allocation2 + $0x18] sm:$0xff]
  %v2167 = vld [vmem:[#allocation2 + $0x20] sm:$0xff]
  %2168 = vmatprep.subr.mxu0 0.0
  %2169 = vmatpush1.msra.mxu0 0.0
  %2170 = vmatprep.subr.mxu0 0.0
  %2171 = vmatpush1.msra.mxu0 0.0
  %2172 = vmatprep.subr.mxu0 0.0
  %2173 = vmatpush1.msra.mxu0 0.0
  %2174 = vmatprep.subr.mxu0 0.0
  %2175 = vmatpush1.msra.mxu0 0.0
  %2176 = vmatprep.subr.mxu0 0.0
  %2177 = vmatpush1.msra.mxu0 0.0
  %2178 = vmatprep.subr.mxu0 0.0
  %2179 = vmatpush1.msra.mxu0 0.0
  %2180 = vmatprep.subr.mxu0 0.0
  %2181 = vmatpush1.msra.mxu0 0.0
  %2182 = vmatprep.subr.mxu0 0.0
  %2183 = vmatpush1.msra.mxu0 0.0
  %2184 = vmatprep.subr.mxu0 0.0
  %2185 = vmatpush1.msra.mxu0 0.0
  %2186 = vmatprep.subr.mxu0 0.0
  %2187 = vmatpush1.msra.mxu0 0.0
  %2188 = vmatprep.subr.mxu0 0.0
  %2189 = vmatpush1.msra.mxu0 0.0
  %2190 = vmatprep.subr.mxu0 0.0
  %2191 = vmatpush1.msra.mxu0 %v2167
  %2192 = vmatprep.subr.mxu0 0.0
  %2193 = vmatpush1.msra.mxu0 %v2166
  %2194 = vmatprep.subr.mxu0 0.0
  %2195 = vmatpush1.msra.mxu0 %v2165
  %2196 = vmatprep.subr.mxu0 0.0
  %2197 = vmatpush1.msra.mxu0 %v2164
  %2198 = vmatprep.subr.mxu0 0.0
  %2199 = vmatpush1.msra.mxu0 %v2163
  %2200 = vmatprep.subr.mxu0 0.0
  %2201 = vmatpush2.msra.mxu0 0.0
  %2202 = vmatprep.subr.mxu0 0.0
  %2203 = vmatpush2.msra.mxu0 0.0
  %2204 = vmatprep.subr.mxu0 0.0
  %2205 = vmatpush2.msra.mxu0 0.0
  %2206 = vmatprep.subr.mxu0 0.0
  %2207 = vmatpush2.msra.mxu0 0.0
  %2208 = vmatprep.subr.mxu0 0.0
  %2209 = vmatpush2.msra.mxu0 0.0
  %2210 = vmatprep.subr.mxu0 0.0
  %2211 = vmatpush2.msra.mxu0 0.0
  %2212 = vmatprep.subr.mxu0 0.0
  %2213 = vmatpush2.msra.mxu0 0.0
  %2214 = vmatprep.subr.mxu0 0.0
  %2215 = vmatpush2.msra.mxu0 0.0
  %2216 = vmatprep.subr.mxu0 0.0
  %2217 = vmatpush2.msra.mxu0 0.0
  %2218 = vmatprep.subr.mxu0 0.0
  %2219 = vmatpush2.msra.mxu0 0.0
  %2220 = vmatprep.subr.mxu0 0.0
  %2221 = vmatpush2.msra.mxu0 0.0
  %2222 = vmatprep.subr.mxu0 0.0
  %2223 = vmatpush2.msra.mxu0 0.0
  %2224 = vmatprep.subr.mxu0 0.0
  %2225 = vmatpush2.msra.mxu0 0.0
  %2226 = vmatprep.subr.mxu0 0.0
  %2227 = vmatpush2.msra.mxu0 0.0
  %2228 = vmatprep.subr.mxu0 0.0
  %2229 = vmatpush2.msra.mxu0 0.0
  %2230 = vmatprep.subr.mxu0 0.0
  %2231 = vmatpush2.msra.mxu0 0.0
  %2232 = vmatprep.mubr.f32.mxu0 0.0
  %2233 = vmatmul.mubr.f32.gmra.mxu0 %v69
  %v2234 = vpop.f32.mrf.mxu0
  %v2235 = vadd.f32 %v50, %v2234
  %v2236 = vpop.f32.mrf.mxu0
  %2237 = vmatprep.mubr.f32.mxu0 0.0
  %2238 = vmatmul.mubr.f32.gmra.mxu0 %v72
  %v2239 = vpop.f32.mrf.mxu0
  %v2240 = vadd.f32 %v55, %v2239
  %v2241 = vpop.f32.mrf.mxu0
  %2242 = vmatprep.mubr.f32.mxu0 0.0
  %2243 = vmatmul.mubr.f32.gmra.mxu0 %v75
  %v2244 = vpop.f32.mrf.mxu0
  %v2245 = vadd.f32 %v60, %v2244
  %v2246 = vpop.f32.mrf.mxu0
  %2247 = vmatprep.mubr.f32.mxu0 0.0
  %2248 = vmatmul.mubr.f32.gmra.mxu0 %v78
  %v2249 = vpop.f32.mrf.mxu0
  %v2250 = vadd.f32 %v65, %v2249
  %v2251 = vpop.f32.mrf.mxu0
  %2252 = vdwg.mxu0
  %v2253 = vxor.u32 %v2235, 2147483648
  %v2254 = vxor.u32 %v2240, 2147483648
  %v2255 = vxor.u32 %v2245, 2147483648
  %v2256 = vxor.u32 %v2250, 2147483648
  %v2257 = vmul.f32 %v2253, 1.442695
  %v2258 = vpow.pop %v2257
  %v2259 = vmul.f32 %v2254, 1.442695
  %v2260 = vpow.pop %v2259
  %v2261 = vmul.f32 %v2255, 1.442695
  %v2262 = vpow.pop %v2261
  %v2263 = vmul.f32 %v2256, 1.442695
  %v2264 = vpow.pop %v2263
  %v2265 = vadd.f32 %v2258, 1.0
  %v2266 = vadd.f32 %v2260, 1.0
  %v2267 = vadd.f32 %v2262, 1.0
  %v2268 = vadd.f32 %v2264, 1.0
  %v2269 = vrcp.pop %v2265
  %v2270 = vmul.f32 1.0, %v2269
  %v2271 = vrcp.pop %v2266
  %v2272 = vmul.f32 1.0, %v2271
  %v2273 = vrcp.pop %v2267
  %v2274 = vmul.f32 1.0, %v2273
  %v2275 = vrcp.pop %v2268
  %v2276 = vmul.f32 1.0, %v2275
  %v2277 = vld [vmem:[#allocation3] sm:$0xff]
  %v2278 = vmul.f32 %v2274, %v2277
  %v2279 = vmul.f32 %v2270, %v2272
  %v2280 = vadd.f32 %v2278, %v2279
  %v2281 = vtanh.pop %v2280
  %v2282 = vmul.f32 %v2276, %v2281
  %2283 = vst [vmem:[#allocation3] sm:$0xff] %v2280
  %s2284 = scalar_lea.vmem %s4, 120
  %2285 = vst [vmem:[%s2284] sm:$0xff] %v2282
  %2286 = vrot.lane.b32.xlu0 %v2282, 1
  %v2287 = vpop.permute.xlu0 %2286
  %v2288 = vmul.f32 %v2287, %v38
  %2289 = vst [vmem:[#allocation2 + $0x10] sm:$0xff] %v2288
  %2290 = vst [vmem:[#allocation2 + $0x18] sm:$0xff] %v2282
  %2291 = vrot.lane.b32.xlu0 %v2282, 127
  %v2292 = vpop.permute.xlu0 %2291
  %v2293 = vmul.f32 %v2292, %v207
  %2294 = vst [vmem:[#allocation2 + $0x20] sm:$0xff] %v2293
  // Predicated region
  $region18: #{pixelrnn_forward.5} parent=0 // pred_check
    _
  $region19: #{pixelrnn_forward.5} parent=0 // pred_check_branch
    %2296 = sbr.rel (0) target = $region21
  $region20: #{pixelrnn_forward.5} parent=0 // pred_region
    _
  $region21: #{pixelrnn_forward.5} parent=0 // pred_fallthru
    _
  // Predicated region
  $region22: #{pixelrnn_forward.5} parent=0 // pred_check
    _
  $region23: #{pixelrnn_forward.5} parent=0 // pred_check_branch
    %2298 = sbr.rel (0) target = $region25
  $region24: #{pixelrnn_forward.5} parent=0 // pred_region
    _
  $region25: #{pixelrnn_forward.5} parent=0 // pred_fallthru
    _

</llo_original>
